<compile_context>
chip_gen: v7x
topology: tpu7x:2x2x1
jax: 0.10.0
libtpu: 0.0.40
codegen_flags: <defaults>
</compile_context>

<pallas_src>
import math
import functools

import numpy as np
import jax
import jax.numpy as jnp
from jax.experimental import pallas as pl
from jax.experimental.pallas import tpu as pltpu


# ---------------------------------------------------------------------------
# DCT filter bank (faithful numpy port of dct_filters, use_bn=False branch:
# k=3, groups=1, expand_dim=0, level=None, DC=True, l1_norm=True)
# ---------------------------------------------------------------------------
def dct_filters_np(k=3, groups=1, expand_dim=0, level=None, DC=True, l1_norm=True):
    if level is None:
        nf = k ** 2 - int(not DC)
    elif level <= k:
        nf = level * (level + 1) // 2 - int(not DC)
    else:
        r = 2 * k - 1 - level
        nf = k ** 2 - r * (r + 1) // 2 - int(not DC)
    filter_bank = np.zeros((nf, k, k), dtype=np.float32)
    m = 0
    for i in range(k):
        for j in range(k):
            if (not DC and i == 0 and j == 0) or (level is not None and i + j >= level):
                continue
            for x in range(k):
                for y in range(k):
                    filter_bank[m, x, y] = (
                        math.cos(math.pi * (x + 0.5) * i / k)
                        * math.cos(math.pi * (y + 0.5) * j / k)
                    )
            if l1_norm:
                filter_bank[m, :, :] /= np.sum(np.abs(filter_bank[m, :, :]))
            else:
                ai = 1.0 if i > 0 else 1.0 / math.sqrt(2.0)
                aj = 1.0 if j > 0 else 1.0 / math.sqrt(2.0)
                filter_bank[m, :, :] *= 2.0 / k * ai * aj
            m += 1
    filter_bank = np.tile(np.expand_dims(filter_bank, axis=expand_dim), (groups, 1, 1, 1))
    return filter_bank  # (groups=1, nf, k, k)


# ---------------------------------------------------------------------------
# Pallas kernel: whole BasicBlock forward for ONE sample (grid over batch).
# ---------------------------------------------------------------------------
def _basic_block_kernel(xp_ref, xid_ref, f1_ref, f2_ref,
                        g1_ref, b1_ref, g2_ref, b2_ref,
                        out_ref, pad_ref, lhs_ref,
                        *, H, W, C, G, eps):
    HW = H * W
    cs = C // G
    inv_count = 1.0 / float(cs * H * W)

    def fill_im2col(xp):
        # xp: (H+2, W+2, C) f32 -> lhs_ref (H*W, 9*C): one K=9*C matmul operand.
        t = 0
        for ky in range(3):
            for kx in range(3):
                lhs_ref[:, t * C:(t + 1) * C] = (
                    xp[ky:ky + H, kx:kx + W, :].reshape(HW, C))
                t += 1

    def conv3x3(xp, filt_bf16):
        fill_im2col(xp)
        # bf16 operands (MXU-native on v6e/v7x), f32 accumulation.
        return jnp.dot(lhs_ref[...].astype(jnp.bfloat16), filt_bf16,
                       preferred_element_type=jnp.float32)        # (H*W, C) f32

    def group_norm(y, gamma, beta):
        # y: (H*W, C) f32; stats per (sample, group) over (H, W, cs).
        ch_sum = jnp.sum(y, axis=0, keepdims=True)                # (1, C)
        sq_sum = jnp.sum(y * y, axis=0, keepdims=True)            # (1, C)
        if cs == 1:                                               # groups == channels
            mean = ch_sum * inv_count
            ex2 = sq_sum * inv_count
        else:                                                     # general case
            mean_g = jnp.sum(ch_sum.reshape(G, cs), axis=-1, keepdims=True) * inv_count
            ex2_g = jnp.sum(sq_sum.reshape(G, cs), axis=-1, keepdims=True) * inv_count
            mean = jnp.broadcast_to(mean_g, (G, cs)).reshape(1, C)
            ex2 = jnp.broadcast_to(ex2_g, (G, cs)).reshape(1, C)
        var = jnp.maximum(ex2 - mean * mean, 0.0)                 # guard tiny negatives
        inv = jax.lax.rsqrt(var + eps)
        scale = gamma * inv                                       # fold affine ->
        shift = beta - mean * scale                               # one FMA per element
        return y * scale + shift

    # ---- conv1 (single im2col matmul) -> GN1 -> ReLU ----
    xp = xp_ref[...]                                              # (H+2, W+2, C), pre-padded
    y = conv3x3(xp, f1_ref[...])
    y = group_norm(y, g1_ref[...], b1_ref[...])
    y = jnp.maximum(y, 0.0)

    # ---- re-pad intermediate: zero only the 1-pixel border, write interior ----
    zr = jnp.zeros((1, W + 2, C), jnp.float32)
    zc = jnp.zeros((H + 2, 1, C), jnp.float32)
    pad_ref[0:1, :, :] = zr
    pad_ref[H + 1:H + 2, :, :] = zr
    pad_ref[:, 0:1, :] = zc
    pad_ref[:, W + 1:W + 2, :] = zc
    pad_ref[1:H + 1, 1:W + 1, :] = y.reshape(H, W, C)

    # ---- conv2 (single im2col matmul) -> GN2 ----
    y = conv3x3(pad_ref[...], f2_ref[...])
    y = group_norm(y, g2_ref[...], b2_ref[...])

    # ---- residual add + ReLU in lane-dense (C, H*W) layout; output is NCHW ----
    yt = y.T                                                      # (C, H*W), 256 lanes
    out_ref[...] = jnp.maximum(yt + xid_ref[...], 0.0)


def basic_block_forward(x_nchw, filt1, filt2, g1, b1, g2, b2, eps=1e-5):
    N, C, H, W = x_nchw.shape
    G = 32                                                        # nn.GroupNorm(32, planes)
    assert C % G == 0, "GroupNorm(32, C) requires C % 32 == 0"

    # Layout plumbing (wrapper side): NHWC + zero pad for the 3x3 / padding=1 convs.
    x_nhwc = jnp.transpose(x_nchw, (0, 2, 3, 1))
    x_pad = jnp.pad(x_nhwc, ((0, 0), (1, 1), (1, 1), (0, 0)))     # (N, H+2, W+2, C)
    # Residual identity straight from NCHW (no transpose), lane-dense (C, H*W).
    x_id = x_nchw.reshape(N, C, H * W)

    kernel = functools.partial(_basic_block_kernel, H=H, W=W, C=C, G=G, eps=eps)

    def full_spec(shape):
        return pl.BlockSpec(shape, lambda n: (0,) * len(shape))

    out_flat = pl.pallas_call(
        kernel,
        out_shape=jax.ShapeDtypeStruct((N, C, H * W), jnp.float32),
        grid=(N,),
        in_specs=[
            pl.BlockSpec((None, H + 2, W + 2, C), lambda n: (n, 0, 0, 0)),  # padded x
            pl.BlockSpec((None, C, H * W), lambda n: (n, 0, 0)),            # identity
            full_spec((9 * C, C)),                                          # filt1 (bf16)
            full_spec((9 * C, C)),                                          # filt2 (bf16)
            full_spec((1, C)), full_spec((1, C)),                           # gamma1/beta1
            full_spec((1, C)), full_spec((1, C)),                           # gamma2/beta2
        ],
        out_specs=pl.BlockSpec((None, C, H * W), lambda n: (n, 0, 0)),
        scratch_shapes=[
            pltpu.VMEM((H + 2, W + 2, C), jnp.float32),                     # padded interm.
            pltpu.VMEM((H * W, 9 * C), jnp.float32),                        # im2col LHS
        ],
        compiler_params=pltpu.CompilerParams(
            dimension_semantics=("parallel",)),        # uses both TCs on v7x
    )(x_pad, x_id, filt1, filt2, g1, b1, g2, b2)

    # TODO(synk): for production shapes (C>=64, H=W>=56) add H-tiling with a
    # 1-row halo in the index_map and set vmem_limit_bytes explicitly.
    return out_flat.reshape(N, C, H, W)                           # already NCHW


# ---------------------------------------------------------------------------
# Deterministic parameter construction (mirrors Harm2d / GroupNorm __init__)
# ---------------------------------------------------------------------------
def make_params(inplanes, planes, key):
    dct = dct_filters_np(k=3, groups=1, expand_dim=0, level=None, DC=True, l1_norm=True)
    dct_nf = jnp.asarray(dct[0])                                  # (nf=9, 3, 3)
    nf = dct_nf.shape[0]

    # kaiming_normal_(mode='fan_out', nonlinearity='relu') on (no, ni, nf, 1, 1):
    # fan_out = no * nf, std = sqrt(2 / fan_out)
    k1, k2 = jax.random.split(key)
    std1 = math.sqrt(2.0 / (planes * nf))
    std2 = math.sqrt(2.0 / (planes * nf))
    w1 = std1 * jax.random.normal(k1, (planes, inplanes, nf), jnp.float32)
    w2 = std2 * jax.random.normal(k2, (planes, planes, nf), jnp.float32)

    # filt[ky, kx, ci, co] = sum_f w[co, ci, f] * dct[f, ky, kx]
    filt1 = jnp.einsum('oif,fyx->yxio', w1, dct_nf)               # (3, 3, Cin, Cout)
    filt2 = jnp.einsum('oif,fyx->yxio', w2, dct_nf)
    # im2col RHS: rows in (ky, kx, ci) order to match the in-kernel LHS layout;
    # bf16 operands for the MXU (accumulation stays f32 inside the kernel).
    filt1 = filt1.reshape(9 * inplanes, planes).astype(jnp.bfloat16)
    filt2 = filt2.reshape(9 * planes, planes).astype(jnp.bfloat16)

    # GroupNorm(32, planes): affine, init gamma=1, beta=0 (kept f32)
    g1 = jnp.ones((1, planes), jnp.float32)
    b1 = jnp.zeros((1, planes), jnp.float32)
    g2 = jnp.ones((1, planes), jnp.float32)
    b2 = jnp.zeros((1, planes), jnp.float32)
    return filt1, filt2, g1, b1, g2, b2


if __name__ == "__main__":
    # GroupNorm(32, planes) requires planes % 32 == 0 -> smallest sensible: 32
    N, C, H, W = 2, 32, 16, 16
    key = jax.random.PRNGKey(0)
    kx_, kp_ = jax.random.split(key)

    x = jax.random.normal(kx_, (N, C, H, W), jnp.float32)
    params = make_params(C, C, kp_)

    out = basic_block_forward(x, *params)
    out = jax.block_until_ready(out)

    assert out.shape == (N, C, H, W)
    assert bool(jnp.all(jnp.isfinite(out)))
    assert bool(jnp.all(out >= 0.0))      # final ReLU
    print("KERNEL_OK")
</pallas_src>

<mosaic_0001>
module attributes {stable_mosaic.version = 11 : i64} {
  func.func @_basic_block_kernel(%arg0: i32, %arg1: memref<1x18x18x32xf32, #tpu.memory_space<vmem>>, %arg2: memref<1x32x256xf32, #tpu.memory_space<vmem>>, %arg3: memref<288x32xbf16, #tpu.memory_space<vmem>>, %arg4: memref<288x32xbf16, #tpu.memory_space<vmem>>, %arg5: memref<1x32xf32, #tpu.memory_space<vmem>>, %arg6: memref<1x32xf32, #tpu.memory_space<vmem>>, %arg7: memref<1x32xf32, #tpu.memory_space<vmem>>, %arg8: memref<1x32xf32, #tpu.memory_space<vmem>>, %arg9: memref<1x32x256xf32, #tpu.memory_space<vmem>>, %arg10: memref<18x18x32xf32, #tpu.memory_space<vmem>>, %arg11: memref<256x288xf32, #tpu.memory_space<vmem>>) attributes {dimension_semantics = [#tpu.dimension_semantics<parallel>], iteration_bounds = array<i64: 2>, scalar_prefetch = 0 : i64, scratch_operands = 2 : i64, tpu.core_type = #tpu.core_type<tc>, window_params = [{transform_indices = @transform_0, window_bounds = array<i64: 1, 18, 18, 32>}, {transform_indices = @transform_1, window_bounds = array<i64: 1, 32, 256>}, {pipeline_mode = #tpu.pipeline_mode<synchronous>, transform_indices = @transform_2, window_bounds = array<i64: 288, 32>}, {pipeline_mode = #tpu.pipeline_mode<synchronous>, transform_indices = @transform_3, window_bounds = array<i64: 288, 32>}, {pipeline_mode = #tpu.pipeline_mode<synchronous>, transform_indices = @transform_4, window_bounds = array<i64: 1, 32>}, {pipeline_mode = #tpu.pipeline_mode<synchronous>, transform_indices = @transform_5, window_bounds = array<i64: 1, 32>}, {pipeline_mode = #tpu.pipeline_mode<synchronous>, transform_indices = @transform_6, window_bounds = array<i64: 1, 32>}, {pipeline_mode = #tpu.pipeline_mode<synchronous>, transform_indices = @transform_7, window_bounds = array<i64: 1, 32>}, {transform_indices = @transform_8, window_bounds = array<i64: 1, 32, 256>}]} {
    %c0 = arith.constant 0 : index
    %c0_0 = arith.constant 0 : index
    %c0_1 = arith.constant 0 : index
    %c0_2 = arith.constant 0 : index
    %0 = vector.load %arg1[%c0, %c0_0, %c0_1, %c0_2] : memref<1x18x18x32xf32, #tpu.memory_space<vmem>>, vector<1x18x18x32xf32>
    %1 = vector.shape_cast %0 : vector<1x18x18x32xf32> to vector<18x18x32xf32>
    %c0_3 = arith.constant 0 : index
    %c0_4 = arith.constant 0 : index
    %2 = vector.load %arg3[%c0_3, %c0_4] : memref<288x32xbf16, #tpu.memory_space<vmem>>, vector<288x32xbf16>
    %3 = vector.extract_strided_slice %1 {offsets = [0, 0, 0], sizes = [16, 16, 32], strides = [1, 1, 1]} : vector<18x18x32xf32> to vector<16x16x32xf32>
    %4 = vector.shape_cast %3 : vector<16x16x32xf32> to vector<256x32xf32>
    %c0_5 = arith.constant 0 : index
    %c0_6 = arith.constant 0 : index
    %5 = vector.load %arg11[%c0_5, %c0_6] : memref<256x288xf32, #tpu.memory_space<vmem>>, vector<256x32xf32>
    tpu.vector_store %arg11[%c0_5, %c0_6], %4 {strides = array<i32>} : memref<256x288xf32, #tpu.memory_space<vmem>>, vector<256x32xf32>,
    %6 = vector.extract_strided_slice %1 {offsets = [0, 1, 0], sizes = [16, 16, 32], strides = [1, 1, 1]} : vector<18x18x32xf32> to vector<16x16x32xf32>
    %7 = vector.shape_cast %6 : vector<16x16x32xf32> to vector<256x32xf32>
    %c0_7 = arith.constant 0 : index
    %c32 = arith.constant 32 : index
    %8 = vector.load %arg11[%c0_7, %c32] : memref<256x288xf32, #tpu.memory_space<vmem>>, vector<256x32xf32>
    tpu.vector_store %arg11[%c0_7, %c32], %7 {strides = array<i32>} : memref<256x288xf32, #tpu.memory_space<vmem>>, vector<256x32xf32>,
    %9 = vector.extract_strided_slice %1 {offsets = [0, 2, 0], sizes = [16, 16, 32], strides = [1, 1, 1]} : vector<18x18x32xf32> to vector<16x16x32xf32>
    %10 = vector.shape_cast %9 : vector<16x16x32xf32> to vector<256x32xf32>
    %c0_8 = arith.constant 0 : index
    %c64 = arith.constant 64 : index
    %11 = vector.load %arg11[%c0_8, %c64] : memref<256x288xf32, #tpu.memory_space<vmem>>, vector<256x32xf32>
    tpu.vector_store %arg11[%c0_8, %c64], %10 {strides = array<i32>} : memref<256x288xf32, #tpu.memory_space<vmem>>, vector<256x32xf32>,
    %12 = vector.extract_strided_slice %1 {offsets = [1, 0, 0], sizes = [16, 16, 32], strides = [1, 1, 1]} : vector<18x18x32xf32> to vector<16x16x32xf32>
    %13 = vector.shape_cast %12 : vector<16x16x32xf32> to vector<256x32xf32>
    %c0_9 = arith.constant 0 : index
    %c96 = arith.constant 96 : index
    %14 = vector.load %arg11[%c0_9, %c96] : memref<256x288xf32, #tpu.memory_space<vmem>>, vector<256x32xf32>
    tpu.vector_store %arg11[%c0_9, %c96], %13 {strides = array<i32>} : memref<256x288xf32, #tpu.memory_space<vmem>>, vector<256x32xf32>,
    %15 = vector.extract_strided_slice %1 {offsets = [1, 1, 0], sizes = [16, 16, 32], strides = [1, 1, 1]} : vector<18x18x32xf32> to vector<16x16x32xf32>
    %16 = vector.shape_cast %15 : vector<16x16x32xf32> to vector<256x32xf32>
    %c0_10 = arith.constant 0 : index
    %c128 = arith.constant 128 : index
    %17 = vector.load %arg11[%c0_10, %c128] : memref<256x288xf32, #tpu.memory_space<vmem>>, vector<256x32xf32>
    tpu.vector_store %arg11[%c0_10, %c128], %16 {strides = array<i32>} : memref<256x288xf32, #tpu.memory_space<vmem>>, vector<256x32xf32>,
    %18 = vector.extract_strided_slice %1 {offsets = [1, 2, 0], sizes = [16, 16, 32], strides = [1, 1, 1]} : vector<18x18x32xf32> to vector<16x16x32xf32>
    %19 = vector.shape_cast %18 : vector<16x16x32xf32> to vector<256x32xf32>
    %c0_11 = arith.constant 0 : index
    %c160 = arith.constant 160 : index
    %20 = vector.load %arg11[%c0_11, %c160] : memref<256x288xf32, #tpu.memory_space<vmem>>, vector<256x32xf32>
    tpu.vector_store %arg11[%c0_11, %c160], %19 {strides = array<i32>} : memref<256x288xf32, #tpu.memory_space<vmem>>, vector<256x32xf32>,
    %21 = vector.extract_strided_slice %1 {offsets = [2, 0, 0], sizes = [16, 16, 32], strides = [1, 1, 1]} : vector<18x18x32xf32> to vector<16x16x32xf32>
    %22 = vector.shape_cast %21 : vector<16x16x32xf32> to vector<256x32xf32>
    %c0_12 = arith.constant 0 : index
    %c192 = arith.constant 192 : index
    %23 = vector.load %arg11[%c0_12, %c192] : memref<256x288xf32, #tpu.memory_space<vmem>>, vector<256x32xf32>
    tpu.vector_store %arg11[%c0_12, %c192], %22 {strides = array<i32>} : memref<256x288xf32, #tpu.memory_space<vmem>>, vector<256x32xf32>,
    %24 = vector.extract_strided_slice %1 {offsets = [2, 1, 0], sizes = [16, 16, 32], strides = [1, 1, 1]} : vector<18x18x32xf32> to vector<16x16x32xf32>
    %25 = vector.shape_cast %24 : vector<16x16x32xf32> to vector<256x32xf32>
    %c0_13 = arith.constant 0 : index
    %c224 = arith.constant 224 : index
    %26 = vector.load %arg11[%c0_13, %c224] : memref<256x288xf32, #tpu.memory_space<vmem>>, vector<256x32xf32>
    tpu.vector_store %arg11[%c0_13, %c224], %25 {strides = array<i32>} : memref<256x288xf32, #tpu.memory_space<vmem>>, vector<256x32xf32>,
    %27 = vector.extract_strided_slice %1 {offsets = [2, 2, 0], sizes = [16, 16, 32], strides = [1, 1, 1]} : vector<18x18x32xf32> to vector<16x16x32xf32>
    %28 = vector.shape_cast %27 : vector<16x16x32xf32> to vector<256x32xf32>
    %c0_14 = arith.constant 0 : index
    %c256 = arith.constant 256 : index
    %29 = vector.load %arg11[%c0_14, %c256] : memref<256x288xf32, #tpu.memory_space<vmem>>, vector<256x32xf32>
    tpu.vector_store %arg11[%c0_14, %c256], %28 {strides = array<i32>} : memref<256x288xf32, #tpu.memory_space<vmem>>, vector<256x32xf32>,
    %c0_15 = arith.constant 0 : index
    %c0_16 = arith.constant 0 : index
    %30 = vector.load %arg11[%c0_15, %c0_16] : memref<256x288xf32, #tpu.memory_space<vmem>>, vector<256x288xf32>
    %31 = arith.truncf %30 : vector<256x288xf32> to vector<256x288xbf16>
    %cst = arith.constant dense<0.000000e+00> : vector<256x32xf32>
    %32 = tpu.matmul %31, %2, %cst {dimension_numbers = #tpu.dot_dimension_numbers<[1], [0], [0], [1], [0, 0, 1, 1], [], []>} : vector<256x288xbf16>, vector<288x32xbf16>, vector<256x32xf32> -> vector<256x32xf32>
    %c0_17 = arith.constant 0 : index
    %c0_18 = arith.constant 0 : index
    %33 = vector.load %arg5[%c0_17, %c0_18] : memref<1x32xf32, #tpu.memory_space<vmem>>, vector<1x32xf32>
    %c0_19 = arith.constant 0 : index
    %c0_20 = arith.constant 0 : index
    %34 = vector.load %arg6[%c0_19, %c0_20] : memref<1x32xf32, #tpu.memory_space<vmem>>, vector<1x32xf32>
    %cst_21 = arith.constant dense<0.000000e+00> : vector<32xf32>
    %35 = vector.multi_reduction <add>, %32, %cst_21 [0] : vector<256x32xf32> to vector<32xf32>
    %36 = vector.shape_cast %35 : vector<32xf32> to vector<1x32xf32>
    %37 = arith.mulf %32, %32 : vector<256x32xf32>
    %cst_22 = arith.constant dense<0.000000e+00> : vector<32xf32>
    %38 = vector.multi_reduction <add>, %37, %cst_22 [0] : vector<256x32xf32> to vector<32xf32>
    %39 = vector.shape_cast %38 : vector<32xf32> to vector<1x32xf32>
    %cst_23 = arith.constant 3.906250e-03 : f32
    %40 = vector.broadcast %cst_23 : f32 to vector<1x32xf32>
    %41 = arith.mulf %36, %40 : vector<1x32xf32>
    %cst_24 = arith.constant 3.906250e-03 : f32
    %42 = vector.broadcast %cst_24 : f32 to vector<1x32xf32>
    %43 = arith.mulf %39, %42 : vector<1x32xf32>
    %44 = arith.mulf %41, %41 : vector<1x32xf32>
    %45 = arith.subf %43, %44 : vector<1x32xf32>
    %cst_25 = arith.constant 0.000000e+00 : f32
    %46 = vector.broadcast %cst_25 : f32 to vector<1x32xf32>
    %47 = arith.maximumf %45, %46 : vector<1x32xf32>
    %cst_26 = arith.constant 9.99999974E-6 : f32
    %48 = vector.broadcast %cst_26 : f32 to vector<1x32xf32>
    %49 = arith.addf %47, %48 : vector<1x32xf32>
    %50 = math.rsqrt %49 : vector<1x32xf32>
    %51 = arith.mulf %33, %50 : vector<1x32xf32>
    %52 = arith.mulf %41, %51 : vector<1x32xf32>
    %53 = arith.subf %34, %52 : vector<1x32xf32>
    %54 = vector.broadcast %51 : vector<1x32xf32> to vector<256x32xf32>
    %55 = arith.mulf %32, %54 : vector<256x32xf32>
    %56 = vector.broadcast %53 : vector<1x32xf32> to vector<256x32xf32>
    %57 = arith.addf %55, %56 : vector<256x32xf32>
    %cst_27 = arith.constant 0.000000e+00 : f32
    %58 = vector.broadcast %cst_27 : f32 to vector<256x32xf32>
    %59 = arith.maximumf %57, %58 : vector<256x32xf32>
    %cst_28 = arith.constant 0.000000e+00 : f32
    %60 = vector.broadcast %cst_28 : f32 to vector<1x18x32xf32>
    %cst_29 = arith.constant 0.000000e+00 : f32
    %61 = vector.broadcast %cst_29 : f32 to vector<18x1x32xf32>
    %c0_30 = arith.constant 0 : index
    %c0_31 = arith.constant 0 : index
    %c0_32 = arith.constant 0 : index
    %62 = vector.load %arg10[%c0_30, %c0_31, %c0_32] : memref<18x18x32xf32, #tpu.memory_space<vmem>>, vector<1x18x32xf32>
    tpu.vector_store %arg10[%c0_30, %c0_31, %c0_32], %60 {strides = array<i32>} : memref<18x18x32xf32, #tpu.memory_space<vmem>>, vector<1x18x32xf32>,
    %c17 = arith.constant 17 : index
    %c0_33 = arith.constant 0 : index
    %c0_34 = arith.constant 0 : index
    %63 = vector.load %arg10[%c17, %c0_33, %c0_34] : memref<18x18x32xf32, #tpu.memory_space<vmem>>, vector<1x18x32xf32>
    tpu.vector_store %arg10[%c17, %c0_33, %c0_34], %60 {strides = array<i32>} : memref<18x18x32xf32, #tpu.memory_space<vmem>>, vector<1x18x32xf32>,
    %c0_35 = arith.constant 0 : index
    %c0_36 = arith.constant 0 : index
    %c0_37 = arith.constant 0 : index
    %64 = vector.load %arg10[%c0_35, %c0_36, %c0_37] : memref<18x18x32xf32, #tpu.memory_space<vmem>>, vector<18x1x32xf32>
    tpu.vector_store %arg10[%c0_35, %c0_36, %c0_37], %61 {strides = array<i32>} : memref<18x18x32xf32, #tpu.memory_space<vmem>>, vector<18x1x32xf32>,
    %c0_38 = arith.constant 0 : index
    %c17_39 = arith.constant 17 : index
    %c0_40 = arith.constant 0 : index
    %65 = vector.load %arg10[%c0_38, %c17_39, %c0_40] : memref<18x18x32xf32, #tpu.memory_space<vmem>>, vector<18x1x32xf32>
    tpu.vector_store %arg10[%c0_38, %c17_39, %c0_40], %61 {strides = array<i32>} : memref<18x18x32xf32, #tpu.memory_space<vmem>>, vector<18x1x32xf32>,
    %66 = vector.shape_cast %59 : vector<256x32xf32> to vector<16x16x32xf32>
    %c1 = arith.constant 1 : index
    %c1_41 = arith.constant 1 : index
    %c0_42 = arith.constant 0 : index
    %67 = vector.load %arg10[%c1, %c1_41, %c0_42] : memref<18x18x32xf32, #tpu.memory_space<vmem>>, vector<16x16x32xf32>
    tpu.vector_store %arg10[%c1, %c1_41, %c0_42], %66 {strides = array<i32>} : memref<18x18x32xf32, #tpu.memory_space<vmem>>, vector<16x16x32xf32>,
    %c0_43 = arith.constant 0 : index
    %c0_44 = arith.constant 0 : index
    %c0_45 = arith.constant 0 : index
    %68 = vector.load %arg10[%c0_43, %c0_44, %c0_45] : memref<18x18x32xf32, #tpu.memory_space<vmem>>, vector<18x18x32xf32>
    %c0_46 = arith.constant 0 : index
    %c0_47 = arith.constant 0 : index
    %69 = vector.load %arg4[%c0_46, %c0_47] : memref<288x32xbf16, #tpu.memory_space<vmem>>, vector<288x32xbf16>
    %70 = vector.extract_strided_slice %68 {offsets = [0, 0, 0], sizes = [16, 16, 32], strides = [1, 1, 1]} : vector<18x18x32xf32> to vector<16x16x32xf32>
    %71 = vector.shape_cast %70 : vector<16x16x32xf32> to vector<256x32xf32>
    %c0_48 = arith.constant 0 : index
    %c0_49 = arith.constant 0 : index
    %72 = vector.load %arg11[%c0_48, %c0_49] : memref<256x288xf32, #tpu.memory_space<vmem>>, vector<256x32xf32>
    tpu.vector_store %arg11[%c0_48, %c0_49], %71 {strides = array<i32>} : memref<256x288xf32, #tpu.memory_space<vmem>>, vector<256x32xf32>,
    %73 = vector.extract_strided_slice %68 {offsets = [0, 1, 0], sizes = [16, 16, 32], strides = [1, 1, 1]} : vector<18x18x32xf32> to vector<16x16x32xf32>
    %74 = vector.shape_cast %73 : vector<16x16x32xf32> to vector<256x32xf32>
    %c0_50 = arith.constant 0 : index
    %c32_51 = arith.constant 32 : index
    %75 = vector.load %arg11[%c0_50, %c32_51] : memref<256x288xf32, #tpu.memory_space<vmem>>, vector<256x32xf32>
    tpu.vector_store %arg11[%c0_50, %c32_51], %74 {strides = array<i32>} : memref<256x288xf32, #tpu.memory_space<vmem>>, vector<256x32xf32>,
    %76 = vector.extract_strided_slice %68 {offsets = [0, 2, 0], sizes = [16, 16, 32], strides = [1, 1, 1]} : vector<18x18x32xf32> to vector<16x16x32xf32>
    %77 = vector.shape_cast %76 : vector<16x16x32xf32> to vector<256x32xf32>
    %c0_52 = arith.constant 0 : index
    %c64_53 = arith.constant 64 : index
    %78 = vector.load %arg11[%c0_52, %c64_53] : memref<256x288xf32, #tpu.memory_space<vmem>>, vector<256x32xf32>
    tpu.vector_store %arg11[%c0_52, %c64_53], %77 {strides = array<i32>} : memref<256x288xf32, #tpu.memory_space<vmem>>, vector<256x32xf32>,
    %79 = vector.extract_strided_slice %68 {offsets = [1, 0, 0], sizes = [16, 16, 32], strides = [1, 1, 1]} : vector<18x18x32xf32> to vector<16x16x32xf32>
    %80 = vector.shape_cast %79 : vector<16x16x32xf32> to vector<256x32xf32>
    %c0_54 = arith.constant 0 : index
    %c96_55 = arith.constant 96 : index
    %81 = vector.load %arg11[%c0_54, %c96_55] : memref<256x288xf32, #tpu.memory_space<vmem>>, vector<256x32xf32>
    tpu.vector_store %arg11[%c0_54, %c96_55], %80 {strides = array<i32>} : memref<256x288xf32, #tpu.memory_space<vmem>>, vector<256x32xf32>,
    %82 = vector.extract_strided_slice %68 {offsets = [1, 1, 0], sizes = [16, 16, 32], strides = [1, 1, 1]} : vector<18x18x32xf32> to vector<16x16x32xf32>
    %83 = vector.shape_cast %82 : vector<16x16x32xf32> to vector<256x32xf32>
    %c0_56 = arith.constant 0 : index
    %c128_57 = arith.constant 128 : index
    %84 = vector.load %arg11[%c0_56, %c128_57] : memref<256x288xf32, #tpu.memory_space<vmem>>, vector<256x32xf32>
    tpu.vector_store %arg11[%c0_56, %c128_57], %83 {strides = array<i32>} : memref<256x288xf32, #tpu.memory_space<vmem>>, vector<256x32xf32>,
    %85 = vector.extract_strided_slice %68 {offsets = [1, 2, 0], sizes = [16, 16, 32], strides = [1, 1, 1]} : vector<18x18x32xf32> to vector<16x16x32xf32>
    %86 = vector.shape_cast %85 : vector<16x16x32xf32> to vector<256x32xf32>
    %c0_58 = arith.constant 0 : index
    %c160_59 = arith.constant 160 : index
    %87 = vector.load %arg11[%c0_58, %c160_59] : memref<256x288xf32, #tpu.memory_space<vmem>>, vector<256x32xf32>
    tpu.vector_store %arg11[%c0_58, %c160_59], %86 {strides = array<i32>} : memref<256x288xf32, #tpu.memory_space<vmem>>, vector<256x32xf32>,
    %88 = vector.extract_strided_slice %68 {offsets = [2, 0, 0], sizes = [16, 16, 32], strides = [1, 1, 1]} : vector<18x18x32xf32> to vector<16x16x32xf32>
    %89 = vector.shape_cast %88 : vector<16x16x32xf32> to vector<256x32xf32>
    %c0_60 = arith.constant 0 : index
    %c192_61 = arith.constant 192 : index
    %90 = vector.load %arg11[%c0_60, %c192_61] : memref<256x288xf32, #tpu.memory_space<vmem>>, vector<256x32xf32>
    tpu.vector_store %arg11[%c0_60, %c192_61], %89 {strides = array<i32>} : memref<256x288xf32, #tpu.memory_space<vmem>>, vector<256x32xf32>,
    %91 = vector.extract_strided_slice %68 {offsets = [2, 1, 0], sizes = [16, 16, 32], strides = [1, 1, 1]} : vector<18x18x32xf32> to vector<16x16x32xf32>
    %92 = vector.shape_cast %91 : vector<16x16x32xf32> to vector<256x32xf32>
    %c0_62 = arith.constant 0 : index
    %c224_63 = arith.constant 224 : index
    %93 = vector.load %arg11[%c0_62, %c224_63] : memref<256x288xf32, #tpu.memory_space<vmem>>, vector<256x32xf32>
    tpu.vector_store %arg11[%c0_62, %c224_63], %92 {strides = array<i32>} : memref<256x288xf32, #tpu.memory_space<vmem>>, vector<256x32xf32>,
    %94 = vector.extract_strided_slice %68 {offsets = [2, 2, 0], sizes = [16, 16, 32], strides = [1, 1, 1]} : vector<18x18x32xf32> to vector<16x16x32xf32>
    %95 = vector.shape_cast %94 : vector<16x16x32xf32> to vector<256x32xf32>
    %c0_64 = arith.constant 0 : index
    %c256_65 = arith.constant 256 : index
    %96 = vector.load %arg11[%c0_64, %c256_65] : memref<256x288xf32, #tpu.memory_space<vmem>>, vector<256x32xf32>
    tpu.vector_store %arg11[%c0_64, %c256_65], %95 {strides = array<i32>} : memref<256x288xf32, #tpu.memory_space<vmem>>, vector<256x32xf32>,
    %c0_66 = arith.constant 0 : index
    %c0_67 = arith.constant 0 : index
    %97 = vector.load %arg11[%c0_66, %c0_67] : memref<256x288xf32, #tpu.memory_space<vmem>>, vector<256x288xf32>
    %98 = arith.truncf %97 : vector<256x288xf32> to vector<256x288xbf16>
    %cst_68 = arith.constant dense<0.000000e+00> : vector<256x32xf32>
    %99 = tpu.matmul %98, %69, %cst_68 {dimension_numbers = #tpu.dot_dimension_numbers<[1], [0], [0], [1], [0, 0, 1, 1], [], []>} : vector<256x288xbf16>, vector<288x32xbf16>, vector<256x32xf32> -> vector<256x32xf32>
    %c0_69 = arith.constant 0 : index
    %c0_70 = arith.constant 0 : index
    %100 = vector.load %arg7[%c0_69, %c0_70] : memref<1x32xf32, #tpu.memory_space<vmem>>, vector<1x32xf32>
    %c0_71 = arith.constant 0 : index
    %c0_72 = arith.constant 0 : index
    %101 = vector.load %arg8[%c0_71, %c0_72] : memref<1x32xf32, #tpu.memory_space<vmem>>, vector<1x32xf32>
    %cst_73 = arith.constant dense<0.000000e+00> : vector<32xf32>
    %102 = vector.multi_reduction <add>, %99, %cst_73 [0] : vector<256x32xf32> to vector<32xf32>
    %103 = vector.shape_cast %102 : vector<32xf32> to vector<1x32xf32>
    %104 = arith.mulf %99, %99 : vector<256x32xf32>
    %cst_74 = arith.constant dense<0.000000e+00> : vector<32xf32>
    %105 = vector.multi_reduction <add>, %104, %cst_74 [0] : vector<256x32xf32> to vector<32xf32>
    %106 = vector.shape_cast %105 : vector<32xf32> to vector<1x32xf32>
    %cst_75 = arith.constant 3.906250e-03 : f32
    %107 = vector.broadcast %cst_75 : f32 to vector<1x32xf32>
    %108 = arith.mulf %103, %107 : vector<1x32xf32>
    %cst_76 = arith.constant 3.906250e-03 : f32
    %109 = vector.broadcast %cst_76 : f32 to vector<1x32xf32>
    %110 = arith.mulf %106, %109 : vector<1x32xf32>
    %111 = arith.mulf %108, %108 : vector<1x32xf32>
    %112 = arith.subf %110, %111 : vector<1x32xf32>
    %cst_77 = arith.constant 0.000000e+00 : f32
    %113 = vector.broadcast %cst_77 : f32 to vector<1x32xf32>
    %114 = arith.maximumf %112, %113 : vector<1x32xf32>
    %cst_78 = arith.constant 9.99999974E-6 : f32
    %115 = vector.broadcast %cst_78 : f32 to vector<1x32xf32>
    %116 = arith.addf %114, %115 : vector<1x32xf32>
    %117 = math.rsqrt %116 : vector<1x32xf32>
    %118 = arith.mulf %100, %117 : vector<1x32xf32>
    %119 = arith.mulf %108, %118 : vector<1x32xf32>
    %120 = arith.subf %101, %119 : vector<1x32xf32>
    %121 = vector.broadcast %118 : vector<1x32xf32> to vector<256x32xf32>
    %122 = arith.mulf %99, %121 : vector<256x32xf32>
    %123 = vector.broadcast %120 : vector<1x32xf32> to vector<256x32xf32>
    %124 = arith.addf %122, %123 : vector<256x32xf32>
    %125 = tpu.transpose %124, [1, 0] : vector<256x32xf32> -> vector<32x256xf32>
    %c0_79 = arith.constant 0 : index
    %c0_80 = arith.constant 0 : index
    %c0_81 = arith.constant 0 : index
    %126 = vector.load %arg2[%c0_79, %c0_80, %c0_81] : memref<1x32x256xf32, #tpu.memory_space<vmem>>, vector<1x32x256xf32>
    %127 = vector.shape_cast %126 : vector<1x32x256xf32> to vector<32x256xf32>
    %128 = arith.addf %125, %127 : vector<32x256xf32>
    %cst_82 = arith.constant 0.000000e+00 : f32
    %129 = vector.broadcast %cst_82 : f32 to vector<32x256xf32>
    %130 = arith.maximumf %128, %129 : vector<32x256xf32>
    %c0_83 = arith.constant 0 : index
    %c0_84 = arith.constant 0 : index
    %c0_85 = arith.constant 0 : index
    %131 = vector.load %arg9[%c0_83, %c0_84, %c0_85] : memref<1x32x256xf32, #tpu.memory_space<vmem>>, vector<1x32x256xf32>
    %132 = vector.shape_cast %131 : vector<1x32x256xf32> to vector<32x256xf32>
    %133 = vector.shape_cast %130 : vector<32x256xf32> to vector<1x32x256xf32>
    tpu.vector_store %arg9[%c0_83, %c0_84, %c0_85], %133 {strides = array<i32>} : memref<1x32x256xf32, #tpu.memory_space<vmem>>, vector<1x32x256xf32>,
    return
  }
  func.func @transform_0(%arg0: i32) -> (i32, i32, i32, i32) {
    %c0_i32 = arith.constant 0 : i32
    %c0_i32_0 = arith.constant 0 : i32
    %c0_i32_1 = arith.constant 0 : i32
    %c0_i32_2 = arith.constant 0 : i32
    return %arg0, %c0_i32, %c0_i32_0, %c0_i32_1 : i32, i32, i32, i32
  }
  func.func @transform_1(%arg0: i32) -> (i32, i32, i32) {
    %c0_i32 = arith.constant 0 : i32
    %c0_i32_0 = arith.constant 0 : i32
    %c0_i32_1 = arith.constant 0 : i32
    return %arg0, %c0_i32, %c0_i32_0 : i32, i32, i32
  }
  func.func @transform_2(%arg0: i32) -> (i32, i32) {
    %c0_i32 = arith.constant 0 : i32
    %c0_i32_0 = arith.constant 0 : i32
    %c0_i32_1 = arith.constant 0 : i32
    return %c0_i32, %c0_i32_0 : i32, i32
  }
  func.func @transform_3(%arg0: i32) -> (i32, i32) {
    %c0_i32 = arith.constant 0 : i32
    %c0_i32_0 = arith.constant 0 : i32
    %c0_i32_1 = arith.constant 0 : i32
    return %c0_i32, %c0_i32_0 : i32, i32
  }
  func.func @transform_4(%arg0: i32) -> (i32, i32) {
    %c0_i32 = arith.constant 0 : i32
    %c0_i32_0 = arith.constant 0 : i32
    %c0_i32_1 = arith.constant 0 : i32
    return %c0_i32, %c0_i32_0 : i32, i32
  }
  func.func @transform_5(%arg0: i32) -> (i32, i32) {
    %c0_i32 = arith.constant 0 : i32
    %c0_i32_0 = arith.constant 0 : i32
    %c0_i32_1 = arith.constant 0 : i32
    return %c0_i32, %c0_i32_0 : i32, i32
  }
  func.func @transform_6(%arg0: i32) -> (i32, i32) {
    %c0_i32 = arith.constant 0 : i32
    %c0_i32_0 = arith.constant 0 : i32
    %c0_i32_1 = arith.constant 0 : i32
    return %c0_i32, %c0_i32_0 : i32, i32
  }
  func.func @transform_7(%arg0: i32) -> (i32, i32) {
    %c0_i32 = arith.constant 0 : i32
    %c0_i32_0 = arith.constant 0 : i32
    %c0_i32_1 = arith.constant 0 : i32
    return %c0_i32, %c0_i32_0 : i32, i32
  }
  func.func @transform_8(%arg0: i32) -> (i32, i32, i32) {
    %c0_i32 = arith.constant 0 : i32
    %c0_i32_0 = arith.constant 0 : i32
    %c0_i32_1 = arith.constant 0 : i32
    return %arg0, %c0_i32, %c0_i32_0 : i32, i32, i32
  }
}

</mosaic_0001>

<llo_original>
// kernel: tpu_custom_call.1
$region0: #{tpu_custom_call.1}
  #allocation0 [shape = 'u32[]', space=smem, size = 0x4, offset = 0x4, fixed_abs, tag = 'smem constant byte address 0x4 - core index']
  #allocation1 [shape = 'u32[144,128]{1,0:T(1,128)}', space=vmem, size = 0x12000, scoped, tag = 'internal scratch']
  #allocation2 [shape = 'f32[18,18,32]{2,1,0:T(8,128)}', space=vmem, size = 0x36000, scoped, tag = 'scratch operand']
  #allocation3 [shape = 'f32[256,288]{1,0:T(8,128)}', space=vmem, size = 0x60000, scoped, tag = 'scratch operand']
  %s0 = inlined_call_operand.vmem [shape: f32[2,18,18,32], index: 0, kind: input, shape index: {}]
  %s1 = inlined_call_operand.vmem [shape: f32[2,32,256], index: 1, kind: input, shape index: {}]
  %s2 = inlined_call_operand.vmem [shape: bf16[288,32], index: 2, kind: input, shape index: {}]
  %s3 = inlined_call_operand.vmem [shape: bf16[288,32], index: 3, kind: input, shape index: {}]
  %s4 = inlined_call_operand.vmem [shape: f32[1,32], index: 4, kind: input, shape index: {}]
  %s5 = inlined_call_operand.vmem [shape: f32[1,32], index: 5, kind: input, shape index: {}]
  %s6 = inlined_call_operand.vmem [shape: f32[1,32], index: 6, kind: input, shape index: {}]
  %s7 = inlined_call_operand.vmem [shape: f32[1,32], index: 7, kind: input, shape index: {}]
  %s8 = inlined_call_operand.hbm [shape: f32[2,32,256], index: 8, kind: output, shape index: {}]
  %s9 = sld [smem:[#allocation0]]
  $region65: #{tpu_custom_call.1} parent=0
    _
  %s11 = ssub.s32 1, %s9
  %s12 = scalar_select 0, %s11, %s9
  $region1: #{tpu_custom_call.1} parent=0
    #allocation4 [shape = 'u8[65536]{0}', space=vmem, size = 0x10000, scoped, tag = 'output window, operand 0']
    #allocation5 [shape = 's32[2]{0}', space=sflag, size = 0x8, scoped, tag = 'scoped memory for tpu_custom_call.1']
    %13 = vsyncpa [#allocation5], 0
    %s14 = scalar_lea.sflag [#allocation5], 1
    %15 = vsyncpa %s14, 0
    loop: start=0, step=1, limit=4
    $region2: #{tpu_custom_call.1} parent=1 // loop_pre_header
      _
    $region3: #{tpu_custom_call.1} parent=1 // loop_header
      %s17 = sphi 0, %s21
      %p18 = scmp.ge.s32.totalorder %s17, 4
      %s27 = sphi 0, %s29
      %s30 = sphi 0, %s27
      %s31 = sphi 0, %s30
      %s47 = sphi 0, %s31
      %s53 = sphi 0, %s55
      %s56 = sphi 0, %s53
      %s57 = sphi 0, %s56
      %s73 = sphi 0, %s57
      %s77 = sphi 0, %s77
      %s79 = sphi 0, %s77
      %s80 = sphi 0, %s79
      %s94 = sphi 0, %s80
      %s98 = sphi 0, %s98
      %s100 = sphi 0, %s98
      %s101 = sphi 0, %s100
      %s115 = sphi 0, %s101
      %s119 = sphi 0, %s119
      %s121 = sphi 0, %s119
      %s122 = sphi 0, %s121
      %s136 = sphi 0, %s122
      %s140 = sphi 0, %s140
      %s142 = sphi 0, %s140
      %s143 = sphi 0, %s142
      %s157 = sphi 0, %s143
      %s161 = sphi 0, %s161
      %s163 = sphi 0, %s161
      %s164 = sphi 0, %s163
      %s178 = sphi 0, %s164
      %s182 = sphi 0, %s182
      %s184 = sphi 0, %s182
      %s185 = sphi 0, %s184
      %s199 = sphi 0, %s185
      %s205 = sphi 0, %s207
      %s208 = sphi 0, %s205
      %s209 = sphi 0, %s208
      %s225 = sphi 0, %s209
    $region4: #{tpu_custom_call.1} parent=1 // loop_header_branch
      %20 = sbr.rel (%p18) target = $region8
    $region5: #{tpu_custom_call.1} parent=1 // loop_body
      %s22 = ssub.s32 %s17, 1
      %s23 = ssub.s32 %s17, 2
      %s24 = sadd.s32 %s17, 1
      %s25 = ssub.s32 %s17, %s24
      %p26 = scmp.eq.s32.totalorder %s25, 0
      %s28 = sadd.s32 %s27, 1
      %s29 = scalar_select %p26, %s27, %s28
      %p32 = pneg %p26
      %p33 = scmp.eq.s32.totalorder %s17, 1
      %p34 = por %p32, %p33
      %p35 = scmp.ne.s32.totalorder %s27, %s30
      %p36 = scmp.eq.s32.totalorder %s17, 0
      %p37 = por %p35, %p36
      %p38 = scmp.ne.s32.totalorder %s27, %s30
      %p39 = scmp.eq.s32.totalorder %s22, 1
      %p40 = por %p38, %p39
      %p41 = scmp.ne.s32.totalorder %s30, %s31
      %p42 = scmp.eq.s32.totalorder %s22, 0
      %p43 = por %p41, %p42
      %p44 = scmp.ne.s32.totalorder %s30, %s31
      %p45 = scmp.eq.s32.totalorder %s23, 1
      %p46 = por %p44, %p45
      %p48 = scmp.ne.s32.totalorder %s31, %s47
      %p49 = scmp.eq.s32.totalorder %s23, 0
      %p50 = por %p48, %p49
      %s51 = ssub.s32 %s17, %s24
      %p52 = scmp.eq.s32.totalorder %s51, 0
      %s54 = sadd.s32 %s53, 1
      %s55 = scalar_select %p52, %s53, %s54
      %p58 = pneg %p52
      %p59 = scmp.eq.s32.totalorder %s17, 1
      %p60 = por %p58, %p59
      %p61 = scmp.ne.s32.totalorder %s53, %s56
      %p62 = scmp.eq.s32.totalorder %s17, 0
      %p63 = por %p61, %p62
      %p64 = scmp.ne.s32.totalorder %s53, %s56
      %p65 = scmp.eq.s32.totalorder %s22, 1
      %p66 = por %p64, %p65
      %p67 = scmp.ne.s32.totalorder %s56, %s57
      %p68 = scmp.eq.s32.totalorder %s22, 0
      %p69 = por %p67, %p68
      %p70 = scmp.ne.s32.totalorder %s56, %s57
      %p71 = scmp.eq.s32.totalorder %s23, 1
      %p72 = por %p70, %p71
      %p74 = scmp.ne.s32.totalorder %s57, %s73
      %p75 = scmp.eq.s32.totalorder %s23, 0
      %p76 = por %p74, %p75
      %s78 = sadd.s32 %s77, 1
      %p81 = scmp.eq.s32.totalorder %s17, 1
      %p82 = scmp.ne.s32.totalorder %s77, %s79
      %p83 = scmp.eq.s32.totalorder %s17, 0
      %p84 = por %p82, %p83
      %p85 = scmp.ne.s32.totalorder %s77, %s79
      %p86 = scmp.eq.s32.totalorder %s22, 1
      %p87 = por %p85, %p86
      %p88 = scmp.ne.s32.totalorder %s79, %s80
      %p89 = scmp.eq.s32.totalorder %s22, 0
      %p90 = por %p88, %p89
      %p91 = scmp.ne.s32.totalorder %s79, %s80
      %p92 = scmp.eq.s32.totalorder %s23, 1
      %p93 = por %p91, %p92
      %p95 = scmp.ne.s32.totalorder %s80, %s94
      %p96 = scmp.eq.s32.totalorder %s23, 0
      %p97 = por %p95, %p96
      %s99 = sadd.s32 %s98, 1
      %p102 = scmp.eq.s32.totalorder %s17, 1
      %p103 = scmp.ne.s32.totalorder %s98, %s100
      %p104 = scmp.eq.s32.totalorder %s17, 0
      %p105 = por %p103, %p104
      %p106 = scmp.ne.s32.totalorder %s98, %s100
      %p107 = scmp.eq.s32.totalorder %s22, 1
      %p108 = por %p106, %p107
      %p109 = scmp.ne.s32.totalorder %s100, %s101
      %p110 = scmp.eq.s32.totalorder %s22, 0
      %p111 = por %p109, %p110
      %p112 = scmp.ne.s32.totalorder %s100, %s101
      %p113 = scmp.eq.s32.totalorder %s23, 1
      %p114 = por %p112, %p113
      %p116 = scmp.ne.s32.totalorder %s101, %s115
      %p117 = scmp.eq.s32.totalorder %s23, 0
      %p118 = por %p116, %p117
      %s120 = sadd.s32 %s119, 1
      %p123 = scmp.eq.s32.totalorder %s17, 1
      %p124 = scmp.ne.s32.totalorder %s119, %s121
      %p125 = scmp.eq.s32.totalorder %s17, 0
      %p126 = por %p124, %p125
      %p127 = scmp.ne.s32.totalorder %s119, %s121
      %p128 = scmp.eq.s32.totalorder %s22, 1
      %p129 = por %p127, %p128
      %p130 = scmp.ne.s32.totalorder %s121, %s122
      %p131 = scmp.eq.s32.totalorder %s22, 0
      %p132 = por %p130, %p131
      %p133 = scmp.ne.s32.totalorder %s121, %s122
      %p134 = scmp.eq.s32.totalorder %s23, 1
      %p135 = por %p133, %p134
      %p137 = scmp.ne.s32.totalorder %s122, %s136
      %p138 = scmp.eq.s32.totalorder %s23, 0
      %p139 = por %p137, %p138
      %s141 = sadd.s32 %s140, 1
      %p144 = scmp.eq.s32.totalorder %s17, 1
      %p145 = scmp.ne.s32.totalorder %s140, %s142
      %p146 = scmp.eq.s32.totalorder %s17, 0
      %p147 = por %p145, %p146
      %p148 = scmp.ne.s32.totalorder %s140, %s142
      %p149 = scmp.eq.s32.totalorder %s22, 1
      %p150 = por %p148, %p149
      %p151 = scmp.ne.s32.totalorder %s142, %s143
      %p152 = scmp.eq.s32.totalorder %s22, 0
      %p153 = por %p151, %p152
      %p154 = scmp.ne.s32.totalorder %s142, %s143
      %p155 = scmp.eq.s32.totalorder %s23, 1
      %p156 = por %p154, %p155
      %p158 = scmp.ne.s32.totalorder %s143, %s157
      %p159 = scmp.eq.s32.totalorder %s23, 0
      %p160 = por %p158, %p159
      %s162 = sadd.s32 %s161, 1
      %p165 = scmp.eq.s32.totalorder %s17, 1
      %p166 = scmp.ne.s32.totalorder %s161, %s163
      %p167 = scmp.eq.s32.totalorder %s17, 0
      %p168 = por %p166, %p167
      %p169 = scmp.ne.s32.totalorder %s161, %s163
      %p170 = scmp.eq.s32.totalorder %s22, 1
      %p171 = por %p169, %p170
      %p172 = scmp.ne.s32.totalorder %s163, %s164
      %p173 = scmp.eq.s32.totalorder %s22, 0
      %p174 = por %p172, %p173
      %p175 = scmp.ne.s32.totalorder %s163, %s164
      %p176 = scmp.eq.s32.totalorder %s23, 1
      %p177 = por %p175, %p176
      %p179 = scmp.ne.s32.totalorder %s164, %s178
      %p180 = scmp.eq.s32.totalorder %s23, 0
      %p181 = por %p179, %p180
      %s183 = sadd.s32 %s182, 1
      %p186 = scmp.eq.s32.totalorder %s17, 1
      %p187 = scmp.ne.s32.totalorder %s182, %s184
      %p188 = scmp.eq.s32.totalorder %s17, 0
      %p189 = por %p187, %p188
      %p190 = scmp.ne.s32.totalorder %s182, %s184
      %p191 = scmp.eq.s32.totalorder %s22, 1
      %p192 = por %p190, %p191
      %p193 = scmp.ne.s32.totalorder %s184, %s185
      %p194 = scmp.eq.s32.totalorder %s22, 0
      %p195 = por %p193, %p194
      %p196 = scmp.ne.s32.totalorder %s184, %s185
      %p197 = scmp.eq.s32.totalorder %s23, 1
      %p198 = por %p196, %p197
      %p200 = scmp.ne.s32.totalorder %s185, %s199
      %p201 = scmp.eq.s32.totalorder %s23, 0
      %p202 = por %p200, %p201
      %s203 = ssub.s32 %s17, %s24
      %p204 = scmp.eq.s32.totalorder %s203, 0
      %s206 = sadd.s32 %s205, 1
      %s207 = scalar_select %p204, %s205, %s206
      %p210 = pneg %p204
      %p211 = scmp.eq.s32.totalorder %s17, 1
      %p212 = por %p210, %p211
      %p213 = scmp.ne.s32.totalorder %s205, %s208
      %p214 = scmp.eq.s32.totalorder %s17, 0
      %p215 = por %p213, %p214
      %p216 = scmp.ne.s32.totalorder %s205, %s208
      %p217 = scmp.eq.s32.totalorder %s22, 1
      %p218 = por %p216, %p217
      %p219 = scmp.ne.s32.totalorder %s208, %s209
      %p220 = scmp.eq.s32.totalorder %s22, 0
      %p221 = por %p219, %p220
      %p222 = scmp.ne.s32.totalorder %s208, %s209
      %p223 = scmp.eq.s32.totalorder %s23, 1
      %p224 = por %p222, %p223
      %p226 = scmp.ne.s32.totalorder %s209, %s225
      %p227 = scmp.eq.s32.totalorder %s23, 0
      %p228 = por %p226, %p227
      %p229 = scmp.le.s32.totalorder 1, %s17
      %p230 = scmp.lt.s32.totalorder %s17, 3
      %p231 = pnand %p229, %p230
      %p232 = pneg %p231
      // Predicated region
      $region9: #{tpu_custom_call.1} parent=5 // pred_check
        _
      $region10: #{tpu_custom_call.1} parent=5 // pred_check_branch
        %234 = sbr.rel (%p231) target = $region12
      $region11: #{tpu_custom_call.1} parent=5 // pred_region
        %s235 = ssub.s32 %s17, 1
        // Predicated region
        $region13: #{tpu_custom_call.1} parent=11 // pred_check
          %p236 = pneg %p90
        $region14: #{tpu_custom_call.1} parent=11 // pred_check_branch
          %238 = sbr.rel (%p236) target = $region16
        $region15: #{tpu_custom_call.1} parent=11 // pred_region
          _
        $region16: #{tpu_custom_call.1} parent=11 // pred_fallthru
          _
        // Predicated region
        $region17: #{tpu_custom_call.1} parent=11 // pred_check
          %p239 = pneg %p111
        $region18: #{tpu_custom_call.1} parent=11 // pred_check_branch
          %241 = sbr.rel (%p239) target = $region20
        $region19: #{tpu_custom_call.1} parent=11 // pred_region
          _
        $region20: #{tpu_custom_call.1} parent=11 // pred_fallthru
          _
        // Predicated region
        $region21: #{tpu_custom_call.1} parent=11 // pred_check
          %p242 = pneg %p132
        $region22: #{tpu_custom_call.1} parent=11 // pred_check_branch
          %244 = sbr.rel (%p242) target = $region24
        $region23: #{tpu_custom_call.1} parent=11 // pred_region
          _
        $region24: #{tpu_custom_call.1} parent=11 // pred_fallthru
          _
        // Predicated region
        $region25: #{tpu_custom_call.1} parent=11 // pred_check
          %p245 = pneg %p153
        $region26: #{tpu_custom_call.1} parent=11 // pred_check_branch
          %247 = sbr.rel (%p245) target = $region28
        $region27: #{tpu_custom_call.1} parent=11 // pred_region
          _
        $region28: #{tpu_custom_call.1} parent=11 // pred_fallthru
          _
        // Predicated region
        $region29: #{tpu_custom_call.1} parent=11 // pred_check
          %p248 = pneg %p174
        $region30: #{tpu_custom_call.1} parent=11 // pred_check_branch
          %250 = sbr.rel (%p248) target = $region32
        $region31: #{tpu_custom_call.1} parent=11 // pred_region
          _
        $region32: #{tpu_custom_call.1} parent=11 // pred_fallthru
          _
        // Predicated region
        $region33: #{tpu_custom_call.1} parent=11 // pred_check
          %p251 = pneg %p195
        $region34: #{tpu_custom_call.1} parent=11 // pred_check_branch
          %253 = sbr.rel (%p251) target = $region36
        $region35: #{tpu_custom_call.1} parent=11 // pred_region
          _
        $region36: #{tpu_custom_call.1} parent=11 // pred_fallthru
          _
      $region12: #{tpu_custom_call.1} parent=5 // pred_fallthru
        _
      %p254 = scmp.lt.s32.totalorder %s17, 2
      // Predicated region
      $region37: #{tpu_custom_call.1} parent=5 // pred_check
        %p255 = pneg %p254
      $region38: #{tpu_custom_call.1} parent=5 // pred_check_branch
        %257 = sbr.rel (%p255) target = $region40
      $region39: #{tpu_custom_call.1} parent=5 // pred_region
        // Predicated region
        $region41: #{tpu_custom_call.1} parent=39 // pred_check
          %p258 = pneg %p37
        $region42: #{tpu_custom_call.1} parent=39 // pred_check_branch
          %260 = sbr.rel (%p258) target = $region44
        $region43: #{tpu_custom_call.1} parent=39 // pred_region
          %p261 = scmp.lt.s32.totalorder %s17, 1
          %s262 = scalar_select %p261, %s17, 1
          %s263 = smul.addr %s262, 54
          %s264 = smul.addr %s263, 8
          %s265 = scalar_lea.vmem %s0, %s264
        $region44: #{tpu_custom_call.1} parent=39 // pred_fallthru
          _
        // Predicated region
        $region45: #{tpu_custom_call.1} parent=39 // pred_check
          %p266 = pneg %p63
        $region46: #{tpu_custom_call.1} parent=39 // pred_check_branch
          %268 = sbr.rel (%p266) target = $region48
        $region47: #{tpu_custom_call.1} parent=39 // pred_region
          %p269 = scmp.lt.s32.totalorder %s17, 1
          %s270 = scalar_select %p269, %s17, 1
          %s271 = smul.addr %s270, 8
          %s272 = smul.addr %s271, 8
          %s273 = scalar_lea.vmem %s1, %s272
        $region48: #{tpu_custom_call.1} parent=39 // pred_fallthru
          _
      $region40: #{tpu_custom_call.1} parent=5 // pred_fallthru
        _
      %p274 = scmp.le.s32.totalorder 1, %s17
      %p275 = scmp.lt.s32.totalorder %s17, 3
      %p276 = pnand %p274, %p275
      %p277 = pneg %p276
      // Predicated region
      $region49: #{tpu_custom_call.1} parent=5 // pred_check
        _
      $region50: #{tpu_custom_call.1} parent=5 // pred_check_branch
        %279 = sbr.rel (%p276) target = $region52
      $region51: #{tpu_custom_call.1} parent=5 // pred_region
        %s280 = ssub.s32 %s17, 1
        %p281 = scmp.lt.s32.totalorder %s22, 1
        %s282 = scalar_select %p281, %s22, 1
        %s283 = smul.addr %s282, 54
        %s284 = smul.addr %s283, 8
        %s285 = scalar_lea.vmem %s0, %s284
        %p286 = pneg %p43
        %p287 = pneg %p40
        %p288 = scmp.lt.s32.totalorder %s22, 1
        %s289 = scalar_select %p288, %s22, 1
        %s290 = smul.addr %s289, 8
        %s291 = smul.addr %s290, 8
        %s292 = scalar_lea.vmem %s1, %s291
        %p293 = pneg %p69
        %p294 = pneg %p66
        %p295 = pneg %p90
        %p296 = pneg %p87
        %p297 = pneg %p111
        %p298 = pneg %p108
        %p299 = pneg %p132
        %p300 = pneg %p129
        %p301 = pneg %p153
        %p302 = pneg %p150
        %p303 = pneg %p174
        %p304 = pneg %p171
        %p305 = pneg %p195
        %p306 = pneg %p192
        %p307 = pneg %p221
        %p308 = pneg %p218
        %s309 = sand.u32 %s208, 1
        %s310 = scalar_lea.sflag [#allocation5], %s309
        %s311 = sand.u32 %s208, 1
        %s312 = smul.addr %s311, 64
        %s313 = scalar_lea.vmem [#allocation4], %s312
        %p314 = scmp.lt.s32.totalorder %s22, 1
        %s315 = scalar_select %p314, %s22, 1
        %s316 = smul.addr %s315, 54
        %s317 = smul.addr %s316, 8
        %s318 = scalar_lea.vmem %s0, %s317
        %p319 = scmp.lt.s32.totalorder %s22, 1
        %s320 = scalar_select %p319, %s22, 1
        %s321 = smul.addr %s320, 8
        %s322 = smul.addr %s321, 8
        %s323 = scalar_lea.vmem %s1, %s322
        %v325 = vld [vmem:[%s318] sm:$0xff]
        %v326 = vld [vmem:[%s318 + $0x8] sm:$0xff]
        %v327 = vld [vmem:[%s318 + $0x10] sm:$0x3]
        %v328 = vld [vmem:[%s318 + $0x18] sm:$0xff]
        %v329 = vld [vmem:[%s318 + $0x20] sm:$0xff]
        %v330 = vld [vmem:[%s318 + $0x28] sm:$0x3]
        %v331 = vld [vmem:[%s318 + $0x30] sm:$0xff]
        %v332 = vld [vmem:[%s318 + $0x38] sm:$0xff]
        %v333 = vld [vmem:[%s318 + $0x40] sm:$0x3]
        %v334 = vld [vmem:[%s318 + $0x48] sm:$0xff]
        %v335 = vld [vmem:[%s318 + $0x50] sm:$0xff]
        %v336 = vld [vmem:[%s318 + $0x58] sm:$0x3]
        %v337 = vld [vmem:[%s318 + $0x60] sm:$0xff]
        %v338 = vld [vmem:[%s318 + $0x68] sm:$0xff]
        %v339 = vld [vmem:[%s318 + $0x70] sm:$0x3]
        %v340 = vld [vmem:[%s318 + $0x78] sm:$0xff]
        %v341 = vld [vmem:[%s318 + $0x80] sm:$0xff]
        %v342 = vld [vmem:[%s318 + $0x88] sm:$0x3]
        %v343 = vld [vmem:[%s318 + $0x90] sm:$0xff]
        %v344 = vld [vmem:[%s318 + $0x98] sm:$0xff]
        %v345 = vld [vmem:[%s318 + $0xa0] sm:$0x3]
        %v346 = vld [vmem:[%s318 + $0xa8] sm:$0xff]
        %v347 = vld [vmem:[%s318 + $0xb0] sm:$0xff]
        %v348 = vld [vmem:[%s318 + $0xb8] sm:$0x3]
        %v349 = vld [vmem:[%s318 + $0xc0] sm:$0xff]
        %v350 = vld [vmem:[%s318 + $0xc8] sm:$0xff]
        %v351 = vld [vmem:[%s318 + $0xd0] sm:$0x3]
        %v352 = vld [vmem:[%s318 + $0xd8] sm:$0xff]
        %v353 = vld [vmem:[%s318 + $0xe0] sm:$0xff]
        %v354 = vld [vmem:[%s318 + $0xe8] sm:$0x3]
        %v355 = vld [vmem:[%s318 + $0xf0] sm:$0xff]
        %v356 = vld [vmem:[%s318 + $0xf8] sm:$0xff]
        %v357 = vld [vmem:[%s318 + $0x100] sm:$0x3]
        %v358 = vld [vmem:[%s318 + $0x108] sm:$0xff]
        %v359 = vld [vmem:[%s318 + $0x110] sm:$0xff]
        %v360 = vld [vmem:[%s318 + $0x118] sm:$0x3]
        %v361 = vld [vmem:[%s318 + $0x120] sm:$0xff]
        %v362 = vld [vmem:[%s318 + $0x128] sm:$0xff]
        %v363 = vld [vmem:[%s318 + $0x130] sm:$0x3]
        %v364 = vld [vmem:[%s318 + $0x138] sm:$0xff]
        %v365 = vld [vmem:[%s318 + $0x140] sm:$0xff]
        %v366 = vld [vmem:[%s318 + $0x148] sm:$0x3]
        %v367 = vld [vmem:[%s318 + $0x150] sm:$0xff]
        %v368 = vld [vmem:[%s318 + $0x158] sm:$0xff]
        %v369 = vld [vmem:[%s318 + $0x160] sm:$0x3]
        %v370 = vld [vmem:[%s318 + $0x168] sm:$0xff]
        %v371 = vld [vmem:[%s318 + $0x170] sm:$0xff]
        %v372 = vld [vmem:[%s318 + $0x178] sm:$0x3]
        %v373 = vld [vmem:[%s318 + $0x180] sm:$0xff]
        %v374 = vld [vmem:[%s318 + $0x188] sm:$0xff]
        %v375 = vld [vmem:[%s318 + $0x190] sm:$0x3]
        %v376 = vld [vmem:[%s318 + $0x198] sm:$0xff]
        %v377 = vld [vmem:[%s318 + $0x1a0] sm:$0xff]
        %v378 = vld [vmem:[%s318 + $0x1a8] sm:$0x3]
        %v379 = vld [vmem:[%s2] sm:$0xf]
        %v380 = vld [vmem:[%s2 + $0x4] sm:$0xf]
        %v381 = vld [vmem:[%s2 + $0x8] sm:$0xf]
        %v382 = vld [vmem:[%s2 + $0xc] sm:$0xf]
        %v383 = vld [vmem:[%s2 + $0x10] sm:$0xf]
        %v384 = vld [vmem:[%s2 + $0x14] sm:$0xf]
        %v385 = vld [vmem:[%s2 + $0x18] sm:$0xf]
        %v386 = vld [vmem:[%s2 + $0x1c] sm:$0xf]
        %v387 = vld [vmem:[%s2 + $0x20] sm:$0xf]
        %v388 = vld [vmem:[%s2 + $0x24] sm:$0xf]
        %v389 = vld [vmem:[%s2 + $0x28] sm:$0xf]
        %v390 = vld [vmem:[%s2 + $0x2c] sm:$0xf]
        %v391 = vld [vmem:[%s2 + $0x30] sm:$0xf]
        %v392 = vld [vmem:[%s2 + $0x34] sm:$0xf]
        %v393 = vld [vmem:[%s2 + $0x38] sm:$0xf]
        %v394 = vld [vmem:[%s2 + $0x3c] sm:$0xf]
        %v395 = vld [vmem:[%s2 + $0x40] sm:$0xf]
        %v396 = vld [vmem:[%s2 + $0x44] sm:$0xf]
        %v397 = vld [vmem:[%s2 + $0x48] sm:$0xf]
        %v398 = vld [vmem:[%s2 + $0x4c] sm:$0xf]
        %v399 = vld [vmem:[%s2 + $0x50] sm:$0xf]
        %v400 = vld [vmem:[%s2 + $0x54] sm:$0xf]
        %v401 = vld [vmem:[%s2 + $0x58] sm:$0xf]
        %v402 = vld [vmem:[%s2 + $0x5c] sm:$0xf]
        %v403 = vld [vmem:[%s2 + $0x60] sm:$0xf]
        %v404 = vld [vmem:[%s2 + $0x64] sm:$0xf]
        %v405 = vld [vmem:[%s2 + $0x68] sm:$0xf]
        %v406 = vld [vmem:[%s2 + $0x6c] sm:$0xf]
        %v407 = vld [vmem:[%s2 + $0x70] sm:$0xf]
        %v408 = vld [vmem:[%s2 + $0x74] sm:$0xf]
        %v409 = vld [vmem:[%s2 + $0x78] sm:$0xf]
        %v410 = vld [vmem:[%s2 + $0x7c] sm:$0xf]
        %v411 = vld [vmem:[%s2 + $0x80] sm:$0xf]
        %v412 = vld [vmem:[%s2 + $0x84] sm:$0xf]
        %v413 = vld [vmem:[%s2 + $0x88] sm:$0xf]
        %v414 = vld [vmem:[%s2 + $0x8c] sm:$0xf]
        %vm415 = vcmask 261120
        %416 = vst.msk [vmem:[#allocation3] sm:$0xff] %vm415, %v325
        %417 = vst.msk [vmem:[#allocation3 + $0x18] sm:$0xff] %vm415, %v326
        %418 = vst.msk [vmem:[#allocation3 + $0x30] sm:$0xff] %vm415, %v328
        %419 = vst.msk [vmem:[#allocation3 + $0x48] sm:$0xff] %vm415, %v329
        %420 = vst.msk [vmem:[#allocation3 + $0x60] sm:$0xff] %vm415, %v331
        %421 = vst.msk [vmem:[#allocation3 + $0x78] sm:$0xff] %vm415, %v332
        %422 = vst.msk [vmem:[#allocation3 + $0x90] sm:$0xff] %vm415, %v334
        %423 = vst.msk [vmem:[#allocation3 + $0xa8] sm:$0xff] %vm415, %v335
        %424 = vst.msk [vmem:[#allocation3 + $0xc0] sm:$0xff] %vm415, %v337
        %425 = vst.msk [vmem:[#allocation3 + $0xd8] sm:$0xff] %vm415, %v338
        %426 = vst.msk [vmem:[#allocation3 + $0xf0] sm:$0xff] %vm415, %v340
        %427 = vst.msk [vmem:[#allocation3 + $0x108] sm:$0xff] %vm415, %v341
        %428 = vst.msk [vmem:[#allocation3 + $0x120] sm:$0xff] %vm415, %v343
        %429 = vst.msk [vmem:[#allocation3 + $0x138] sm:$0xff] %vm415, %v344
        %430 = vst.msk [vmem:[#allocation3 + $0x150] sm:$0xff] %vm415, %v346
        %431 = vst.msk [vmem:[#allocation3 + $0x168] sm:$0xff] %vm415, %v347
        %432 = vst.msk [vmem:[#allocation3 + $0x180] sm:$0xff] %vm415, %v349
        %433 = vst.msk [vmem:[#allocation3 + $0x198] sm:$0xff] %vm415, %v350
        %434 = vst.msk [vmem:[#allocation3 + $0x1b0] sm:$0xff] %vm415, %v352
        %435 = vst.msk [vmem:[#allocation3 + $0x1c8] sm:$0xff] %vm415, %v353
        %436 = vst.msk [vmem:[#allocation3 + $0x1e0] sm:$0xff] %vm415, %v355
        %437 = vst.msk [vmem:[#allocation3 + $0x1f8] sm:$0xff] %vm415, %v356
        %438 = vst.msk [vmem:[#allocation3 + $0x210] sm:$0xff] %vm415, %v358
        %439 = vst.msk [vmem:[#allocation3 + $0x228] sm:$0xff] %vm415, %v359
        %440 = vst.msk [vmem:[#allocation3 + $0x240] sm:$0xff] %vm415, %v361
        %441 = vst.msk [vmem:[#allocation3 + $0x258] sm:$0xff] %vm415, %v362
        %442 = vst.msk [vmem:[#allocation3 + $0x270] sm:$0xff] %vm415, %v364
        %443 = vst.msk [vmem:[#allocation3 + $0x288] sm:$0xff] %vm415, %v365
        %444 = vst.msk [vmem:[#allocation3 + $0x2a0] sm:$0xff] %vm415, %v367
        %445 = vst.msk [vmem:[#allocation3 + $0x2b8] sm:$0xff] %vm415, %v368
        %446 = vst.msk [vmem:[#allocation3 + $0x2d0] sm:$0xff] %vm415, %v370
        %447 = vst.msk [vmem:[#allocation3 + $0x2e8] sm:$0xff] %vm415, %v371
        %vm496 = vcmask 1046528
        %v497 = vrot.slane %v325, 1
        %v498 = vrot.slane %v326, 1
        %v499 = vsel %vm496, %v497, %v498
        %v500 = vrot.slane %v327, 1
        %v501 = vsel %vm496, %v498, %v500
        %v502 = vrot.slane %v328, 1
        %v503 = vrot.slane %v329, 1
        %v504 = vsel %vm496, %v502, %v503
        %v505 = vrot.slane %v330, 1
        %v506 = vsel %vm496, %v503, %v505
        %v507 = vrot.slane %v331, 1
        %v508 = vrot.slane %v332, 1
        %v509 = vsel %vm496, %v507, %v508
        %v510 = vrot.slane %v333, 1
        %v511 = vsel %vm496, %v508, %v510
        %v512 = vrot.slane %v334, 1
        %v513 = vrot.slane %v335, 1
        %v514 = vsel %vm496, %v512, %v513
        %v515 = vrot.slane %v336, 1
        %v516 = vsel %vm496, %v513, %v515
        %v517 = vrot.slane %v337, 1
        %v518 = vrot.slane %v338, 1
        %v519 = vsel %vm496, %v517, %v518
        %v520 = vrot.slane %v339, 1
        %v521 = vsel %vm496, %v518, %v520
        %v522 = vrot.slane %v340, 1
        %v523 = vrot.slane %v341, 1
        %v524 = vsel %vm496, %v522, %v523
        %v525 = vrot.slane %v342, 1
        %v526 = vsel %vm496, %v523, %v525
        %v527 = vrot.slane %v343, 1
        %v528 = vrot.slane %v344, 1
        %v529 = vsel %vm496, %v527, %v528
        %v530 = vrot.slane %v345, 1
        %v531 = vsel %vm496, %v528, %v530
        %v532 = vrot.slane %v346, 1
        %v533 = vrot.slane %v347, 1
        %v534 = vsel %vm496, %v532, %v533
        %v535 = vrot.slane %v348, 1
        %v536 = vsel %vm496, %v533, %v535
        %v537 = vrot.slane %v349, 1
        %v538 = vrot.slane %v350, 1
        %v539 = vsel %vm496, %v537, %v538
        %v540 = vrot.slane %v351, 1
        %v541 = vsel %vm496, %v538, %v540
        %v542 = vrot.slane %v352, 1
        %v543 = vrot.slane %v353, 1
        %v544 = vsel %vm496, %v542, %v543
        %v545 = vrot.slane %v354, 1
        %v546 = vsel %vm496, %v543, %v545
        %v547 = vrot.slane %v355, 1
        %v548 = vrot.slane %v356, 1
        %v549 = vsel %vm496, %v547, %v548
        %v550 = vrot.slane %v357, 1
        %v551 = vsel %vm496, %v548, %v550
        %v552 = vrot.slane %v358, 1
        %v553 = vrot.slane %v359, 1
        %v554 = vsel %vm496, %v552, %v553
        %v555 = vrot.slane %v360, 1
        %v556 = vsel %vm496, %v553, %v555
        %v557 = vrot.slane %v361, 1
        %v558 = vrot.slane %v362, 1
        %v559 = vsel %vm496, %v557, %v558
        %v560 = vrot.slane %v363, 1
        %v561 = vsel %vm496, %v558, %v560
        %v562 = vrot.slane %v364, 1
        %v563 = vrot.slane %v365, 1
        %v564 = vsel %vm496, %v562, %v563
        %v565 = vrot.slane %v366, 1
        %v566 = vsel %vm496, %v563, %v565
        %v567 = vrot.slane %v367, 1
        %v568 = vrot.slane %v368, 1
        %v569 = vsel %vm496, %v567, %v568
        %v570 = vrot.slane %v369, 1
        %v571 = vsel %vm496, %v568, %v570
        %v572 = vrot.slane %v370, 1
        %v573 = vrot.slane %v371, 1
        %v574 = vsel %vm496, %v572, %v573
        %v575 = vrot.slane %v372, 1
        %v576 = vsel %vm496, %v573, %v575
        %577 = vrot.lane.b32.xlu0 %v499, 32
        %v578 = vpop.permute.xlu0 %577
        %579 = vrot.lane.b32.xlu0 %v501, 32
        %v580 = vpop.permute.xlu0 %579
        %581 = vrot.lane.b32.xlu0 %v504, 32
        %v582 = vpop.permute.xlu0 %581
        %583 = vrot.lane.b32.xlu0 %v506, 32
        %v584 = vpop.permute.xlu0 %583
        %585 = vrot.lane.b32.xlu0 %v509, 32
        %v586 = vpop.permute.xlu0 %585
        %587 = vrot.lane.b32.xlu0 %v511, 32
        %v588 = vpop.permute.xlu0 %587
        %589 = vrot.lane.b32.xlu0 %v514, 32
        %v590 = vpop.permute.xlu0 %589
        %591 = vrot.lane.b32.xlu0 %v516, 32
        %v592 = vpop.permute.xlu0 %591
        %593 = vrot.lane.b32.xlu0 %v519, 32
        %v594 = vpop.permute.xlu0 %593
        %595 = vrot.lane.b32.xlu0 %v521, 32
        %v596 = vpop.permute.xlu0 %595
        %597 = vrot.lane.b32.xlu0 %v524, 32
        %v598 = vpop.permute.xlu0 %597
        %599 = vrot.lane.b32.xlu0 %v526, 32
        %v600 = vpop.permute.xlu0 %599
        %601 = vrot.lane.b32.xlu0 %v529, 32
        %v602 = vpop.permute.xlu0 %601
        %603 = vrot.lane.b32.xlu0 %v531, 32
        %v604 = vpop.permute.xlu0 %603
        %605 = vrot.lane.b32.xlu0 %v534, 32
        %v606 = vpop.permute.xlu0 %605
        %607 = vrot.lane.b32.xlu0 %v536, 32
        %v608 = vpop.permute.xlu0 %607
        %609 = vrot.lane.b32.xlu0 %v539, 32
        %v610 = vpop.permute.xlu0 %609
        %611 = vrot.lane.b32.xlu0 %v541, 32
        %v612 = vpop.permute.xlu0 %611
        %613 = vrot.lane.b32.xlu0 %v544, 32
        %v614 = vpop.permute.xlu0 %613
        %615 = vrot.lane.b32.xlu0 %v546, 32
        %v616 = vpop.permute.xlu0 %615
        %617 = vrot.lane.b32.xlu0 %v549, 32
        %v618 = vpop.permute.xlu0 %617
        %619 = vrot.lane.b32.xlu0 %v551, 32
        %v620 = vpop.permute.xlu0 %619
        %621 = vrot.lane.b32.xlu0 %v554, 32
        %v622 = vpop.permute.xlu0 %621
        %623 = vrot.lane.b32.xlu0 %v556, 32
        %v624 = vpop.permute.xlu0 %623
        %625 = vrot.lane.b32.xlu0 %v559, 32
        %v626 = vpop.permute.xlu0 %625
        %627 = vrot.lane.b32.xlu0 %v561, 32
        %v628 = vpop.permute.xlu0 %627
        %629 = vrot.lane.b32.xlu0 %v564, 32
        %v630 = vpop.permute.xlu0 %629
        %631 = vrot.lane.b32.xlu0 %v566, 32
        %v632 = vpop.permute.xlu0 %631
        %633 = vrot.lane.b32.xlu0 %v569, 32
        %v634 = vpop.permute.xlu0 %633
        %635 = vrot.lane.b32.xlu0 %v571, 32
        %v636 = vpop.permute.xlu0 %635
        %637 = vrot.lane.b32.xlu0 %v574, 32
        %v638 = vpop.permute.xlu0 %637
        %639 = vrot.lane.b32.xlu0 %v576, 32
        %v640 = vpop.permute.xlu0 %639
        %vm673 = vcmask 523520
        %674 = vst.msk [vmem:[#allocation3] sm:$0xff] %vm673, %v578
        %675 = vst.msk [vmem:[#allocation3 + $0x18] sm:$0xff] %vm673, %v580
        %676 = vst.msk [vmem:[#allocation3 + $0x30] sm:$0xff] %vm673, %v582
        %677 = vst.msk [vmem:[#allocation3 + $0x48] sm:$0xff] %vm673, %v584
        %678 = vst.msk [vmem:[#allocation3 + $0x60] sm:$0xff] %vm673, %v586
        %679 = vst.msk [vmem:[#allocation3 + $0x78] sm:$0xff] %vm673, %v588
        %680 = vst.msk [vmem:[#allocation3 + $0x90] sm:$0xff] %vm673, %v590
        %681 = vst.msk [vmem:[#allocation3 + $0xa8] sm:$0xff] %vm673, %v592
        %682 = vst.msk [vmem:[#allocation3 + $0xc0] sm:$0xff] %vm673, %v594
        %683 = vst.msk [vmem:[#allocation3 + $0xd8] sm:$0xff] %vm673, %v596
        %684 = vst.msk [vmem:[#allocation3 + $0xf0] sm:$0xff] %vm673, %v598
        %685 = vst.msk [vmem:[#allocation3 + $0x108] sm:$0xff] %vm673, %v600
        %686 = vst.msk [vmem:[#allocation3 + $0x120] sm:$0xff] %vm673, %v602
        %687 = vst.msk [vmem:[#allocation3 + $0x138] sm:$0xff] %vm673, %v604
        %688 = vst.msk [vmem:[#allocation3 + $0x150] sm:$0xff] %vm673, %v606
        %689 = vst.msk [vmem:[#allocation3 + $0x168] sm:$0xff] %vm673, %v608
        %690 = vst.msk [vmem:[#allocation3 + $0x180] sm:$0xff] %vm673, %v610
        %691 = vst.msk [vmem:[#allocation3 + $0x198] sm:$0xff] %vm673, %v612
        %692 = vst.msk [vmem:[#allocation3 + $0x1b0] sm:$0xff] %vm673, %v614
        %693 = vst.msk [vmem:[#allocation3 + $0x1c8] sm:$0xff] %vm673, %v616
        %694 = vst.msk [vmem:[#allocation3 + $0x1e0] sm:$0xff] %vm673, %v618
        %695 = vst.msk [vmem:[#allocation3 + $0x1f8] sm:$0xff] %vm673, %v620
        %696 = vst.msk [vmem:[#allocation3 + $0x210] sm:$0xff] %vm673, %v622
        %697 = vst.msk [vmem:[#allocation3 + $0x228] sm:$0xff] %vm673, %v624
        %698 = vst.msk [vmem:[#allocation3 + $0x240] sm:$0xff] %vm673, %v626
        %699 = vst.msk [vmem:[#allocation3 + $0x258] sm:$0xff] %vm673, %v628
        %700 = vst.msk [vmem:[#allocation3 + $0x270] sm:$0xff] %vm673, %v630
        %701 = vst.msk [vmem:[#allocation3 + $0x288] sm:$0xff] %vm673, %v632
        %702 = vst.msk [vmem:[#allocation3 + $0x2a0] sm:$0xff] %vm673, %v634
        %703 = vst.msk [vmem:[#allocation3 + $0x2b8] sm:$0xff] %vm673, %v636
        %704 = vst.msk [vmem:[#allocation3 + $0x2d0] sm:$0xff] %vm673, %v638
        %705 = vst.msk [vmem:[#allocation3 + $0x2e8] sm:$0xff] %vm673, %v640
        %vm706 = vcmask 1045504
        %v707 = vrot.slane %v325, 2
        %v708 = vrot.slane %v326, 2
        %v709 = vsel %vm706, %v707, %v708
        %v710 = vrot.slane %v327, 2
        %v711 = vsel %vm706, %v708, %v710
        %v712 = vrot.slane %v328, 2
        %v713 = vrot.slane %v329, 2
        %v714 = vsel %vm706, %v712, %v713
        %v715 = vrot.slane %v330, 2
        %v716 = vsel %vm706, %v713, %v715
        %v717 = vrot.slane %v331, 2
        %v718 = vrot.slane %v332, 2
        %v719 = vsel %vm706, %v717, %v718
        %v720 = vrot.slane %v333, 2
        %v721 = vsel %vm706, %v718, %v720
        %v722 = vrot.slane %v334, 2
        %v723 = vrot.slane %v335, 2
        %v724 = vsel %vm706, %v722, %v723
        %v725 = vrot.slane %v336, 2
        %v726 = vsel %vm706, %v723, %v725
        %v727 = vrot.slane %v337, 2
        %v728 = vrot.slane %v338, 2
        %v729 = vsel %vm706, %v727, %v728
        %v730 = vrot.slane %v339, 2
        %v731 = vsel %vm706, %v728, %v730
        %v732 = vrot.slane %v340, 2
        %v733 = vrot.slane %v341, 2
        %v734 = vsel %vm706, %v732, %v733
        %v735 = vrot.slane %v342, 2
        %v736 = vsel %vm706, %v733, %v735
        %v737 = vrot.slane %v343, 2
        %v738 = vrot.slane %v344, 2
        %v739 = vsel %vm706, %v737, %v738
        %v740 = vrot.slane %v345, 2
        %v741 = vsel %vm706, %v738, %v740
        %v742 = vrot.slane %v346, 2
        %v743 = vrot.slane %v347, 2
        %v744 = vsel %vm706, %v742, %v743
        %v745 = vrot.slane %v348, 2
        %v746 = vsel %vm706, %v743, %v745
        %v747 = vrot.slane %v349, 2
        %v748 = vrot.slane %v350, 2
        %v749 = vsel %vm706, %v747, %v748
        %v750 = vrot.slane %v351, 2
        %v751 = vsel %vm706, %v748, %v750
        %v752 = vrot.slane %v352, 2
        %v753 = vrot.slane %v353, 2
        %v754 = vsel %vm706, %v752, %v753
        %v755 = vrot.slane %v354, 2
        %v756 = vsel %vm706, %v753, %v755
        %v757 = vrot.slane %v355, 2
        %v758 = vrot.slane %v356, 2
        %v759 = vsel %vm706, %v757, %v758
        %v760 = vrot.slane %v357, 2
        %v761 = vsel %vm706, %v758, %v760
        %v762 = vrot.slane %v358, 2
        %v763 = vrot.slane %v359, 2
        %v764 = vsel %vm706, %v762, %v763
        %v765 = vrot.slane %v360, 2
        %v766 = vsel %vm706, %v763, %v765
        %v767 = vrot.slane %v361, 2
        %v768 = vrot.slane %v362, 2
        %v769 = vsel %vm706, %v767, %v768
        %v770 = vrot.slane %v363, 2
        %v771 = vsel %vm706, %v768, %v770
        %v772 = vrot.slane %v364, 2
        %v773 = vrot.slane %v365, 2
        %v774 = vsel %vm706, %v772, %v773
        %v775 = vrot.slane %v366, 2
        %v776 = vsel %vm706, %v773, %v775
        %v777 = vrot.slane %v367, 2
        %v778 = vrot.slane %v368, 2
        %v779 = vsel %vm706, %v777, %v778
        %v780 = vrot.slane %v369, 2
        %v781 = vsel %vm706, %v778, %v780
        %v782 = vrot.slane %v370, 2
        %v783 = vrot.slane %v371, 2
        %v784 = vsel %vm706, %v782, %v783
        %v785 = vrot.slane %v372, 2
        %v786 = vsel %vm706, %v783, %v785
        %787 = vrot.lane.b32.xlu0 %v709, 64
        %v788 = vpop.permute.xlu0 %787
        %789 = vrot.lane.b32.xlu0 %v711, 64
        %v790 = vpop.permute.xlu0 %789
        %791 = vrot.lane.b32.xlu0 %v714, 64
        %v792 = vpop.permute.xlu0 %791
        %793 = vrot.lane.b32.xlu0 %v716, 64
        %v794 = vpop.permute.xlu0 %793
        %795 = vrot.lane.b32.xlu0 %v719, 64
        %v796 = vpop.permute.xlu0 %795
        %797 = vrot.lane.b32.xlu0 %v721, 64
        %v798 = vpop.permute.xlu0 %797
        %799 = vrot.lane.b32.xlu0 %v724, 64
        %v800 = vpop.permute.xlu0 %799
        %801 = vrot.lane.b32.xlu0 %v726, 64
        %v802 = vpop.permute.xlu0 %801
        %803 = vrot.lane.b32.xlu0 %v729, 64
        %v804 = vpop.permute.xlu0 %803
        %805 = vrot.lane.b32.xlu0 %v731, 64
        %v806 = vpop.permute.xlu0 %805
        %807 = vrot.lane.b32.xlu0 %v734, 64
        %v808 = vpop.permute.xlu0 %807
        %809 = vrot.lane.b32.xlu0 %v736, 64
        %v810 = vpop.permute.xlu0 %809
        %811 = vrot.lane.b32.xlu0 %v739, 64
        %v812 = vpop.permute.xlu0 %811
        %813 = vrot.lane.b32.xlu0 %v741, 64
        %v814 = vpop.permute.xlu0 %813
        %815 = vrot.lane.b32.xlu0 %v744, 64
        %v816 = vpop.permute.xlu0 %815
        %817 = vrot.lane.b32.xlu0 %v746, 64
        %v818 = vpop.permute.xlu0 %817
        %819 = vrot.lane.b32.xlu0 %v749, 64
        %v820 = vpop.permute.xlu0 %819
        %821 = vrot.lane.b32.xlu0 %v751, 64
        %v822 = vpop.permute.xlu0 %821
        %823 = vrot.lane.b32.xlu0 %v754, 64
        %v824 = vpop.permute.xlu0 %823
        %825 = vrot.lane.b32.xlu0 %v756, 64
        %v826 = vpop.permute.xlu0 %825
        %827 = vrot.lane.b32.xlu0 %v759, 64
        %v828 = vpop.permute.xlu0 %827
        %829 = vrot.lane.b32.xlu0 %v761, 64
        %v830 = vpop.permute.xlu0 %829
        %831 = vrot.lane.b32.xlu0 %v764, 64
        %v832 = vpop.permute.xlu0 %831
        %833 = vrot.lane.b32.xlu0 %v766, 64
        %v834 = vpop.permute.xlu0 %833
        %835 = vrot.lane.b32.xlu0 %v769, 64
        %v836 = vpop.permute.xlu0 %835
        %837 = vrot.lane.b32.xlu0 %v771, 64
        %v838 = vpop.permute.xlu0 %837
        %839 = vrot.lane.b32.xlu0 %v774, 64
        %v840 = vpop.permute.xlu0 %839
        %841 = vrot.lane.b32.xlu0 %v776, 64
        %v842 = vpop.permute.xlu0 %841
        %843 = vrot.lane.b32.xlu0 %v779, 64
        %v844 = vpop.permute.xlu0 %843
        %845 = vrot.lane.b32.xlu0 %v781, 64
        %v846 = vpop.permute.xlu0 %845
        %847 = vrot.lane.b32.xlu0 %v784, 64
        %v848 = vpop.permute.xlu0 %847
        %849 = vrot.lane.b32.xlu0 %v786, 64
        %v850 = vpop.permute.xlu0 %849
        %vm883 = vcmask 785920
        %884 = vst.msk [vmem:[#allocation3] sm:$0xff] %vm883, %v788
        %885 = vst.msk [vmem:[#allocation3 + $0x18] sm:$0xff] %vm883, %v790
        %886 = vst.msk [vmem:[#allocation3 + $0x30] sm:$0xff] %vm883, %v792
        %887 = vst.msk [vmem:[#allocation3 + $0x48] sm:$0xff] %vm883, %v794
        %888 = vst.msk [vmem:[#allocation3 + $0x60] sm:$0xff] %vm883, %v796
        %889 = vst.msk [vmem:[#allocation3 + $0x78] sm:$0xff] %vm883, %v798
        %890 = vst.msk [vmem:[#allocation3 + $0x90] sm:$0xff] %vm883, %v800
        %891 = vst.msk [vmem:[#allocation3 + $0xa8] sm:$0xff] %vm883, %v802
        %892 = vst.msk [vmem:[#allocation3 + $0xc0] sm:$0xff] %vm883, %v804
        %893 = vst.msk [vmem:[#allocation3 + $0xd8] sm:$0xff] %vm883, %v806
        %894 = vst.msk [vmem:[#allocation3 + $0xf0] sm:$0xff] %vm883, %v808
        %895 = vst.msk [vmem:[#allocation3 + $0x108] sm:$0xff] %vm883, %v810
        %896 = vst.msk [vmem:[#allocation3 + $0x120] sm:$0xff] %vm883, %v812
        %897 = vst.msk [vmem:[#allocation3 + $0x138] sm:$0xff] %vm883, %v814
        %898 = vst.msk [vmem:[#allocation3 + $0x150] sm:$0xff] %vm883, %v816
        %899 = vst.msk [vmem:[#allocation3 + $0x168] sm:$0xff] %vm883, %v818
        %900 = vst.msk [vmem:[#allocation3 + $0x180] sm:$0xff] %vm883, %v820
        %901 = vst.msk [vmem:[#allocation3 + $0x198] sm:$0xff] %vm883, %v822
        %902 = vst.msk [vmem:[#allocation3 + $0x1b0] sm:$0xff] %vm883, %v824
        %903 = vst.msk [vmem:[#allocation3 + $0x1c8] sm:$0xff] %vm883, %v826
        %904 = vst.msk [vmem:[#allocation3 + $0x1e0] sm:$0xff] %vm883, %v828
        %905 = vst.msk [vmem:[#allocation3 + $0x1f8] sm:$0xff] %vm883, %v830
        %906 = vst.msk [vmem:[#allocation3 + $0x210] sm:$0xff] %vm883, %v832
        %907 = vst.msk [vmem:[#allocation3 + $0x228] sm:$0xff] %vm883, %v834
        %908 = vst.msk [vmem:[#allocation3 + $0x240] sm:$0xff] %vm883, %v836
        %909 = vst.msk [vmem:[#allocation3 + $0x258] sm:$0xff] %vm883, %v838
        %910 = vst.msk [vmem:[#allocation3 + $0x270] sm:$0xff] %vm883, %v840
        %911 = vst.msk [vmem:[#allocation3 + $0x288] sm:$0xff] %vm883, %v842
        %912 = vst.msk [vmem:[#allocation3 + $0x2a0] sm:$0xff] %vm883, %v844
        %913 = vst.msk [vmem:[#allocation3 + $0x2b8] sm:$0xff] %vm883, %v846
        %914 = vst.msk [vmem:[#allocation3 + $0x2d0] sm:$0xff] %vm883, %v848
        %915 = vst.msk [vmem:[#allocation3 + $0x2e8] sm:$0xff] %vm883, %v850
        %918 = vrot.lane.b32.xlu0 %v328, 96
        %v919 = vpop.permute.xlu0 %918
        %920 = vrot.lane.b32.xlu0 %v329, 96
        %v921 = vpop.permute.xlu0 %920
        %922 = vrot.lane.b32.xlu0 %v331, 96
        %v923 = vpop.permute.xlu0 %922
        %924 = vrot.lane.b32.xlu0 %v332, 96
        %v925 = vpop.permute.xlu0 %924
        %926 = vrot.lane.b32.xlu0 %v334, 96
        %v927 = vpop.permute.xlu0 %926
        %928 = vrot.lane.b32.xlu0 %v335, 96
        %v929 = vpop.permute.xlu0 %928
        %930 = vrot.lane.b32.xlu0 %v337, 96
        %v931 = vpop.permute.xlu0 %930
        %932 = vrot.lane.b32.xlu0 %v338, 96
        %v933 = vpop.permute.xlu0 %932
        %934 = vrot.lane.b32.xlu0 %v340, 96
        %v935 = vpop.permute.xlu0 %934
        %936 = vrot.lane.b32.xlu0 %v341, 96
        %v937 = vpop.permute.xlu0 %936
        %938 = vrot.lane.b32.xlu0 %v343, 96
        %v939 = vpop.permute.xlu0 %938
        %940 = vrot.lane.b32.xlu0 %v344, 96
        %v941 = vpop.permute.xlu0 %940
        %942 = vrot.lane.b32.xlu0 %v346, 96
        %v943 = vpop.permute.xlu0 %942
        %944 = vrot.lane.b32.xlu0 %v347, 96
        %v945 = vpop.permute.xlu0 %944
        %946 = vrot.lane.b32.xlu0 %v349, 96
        %v947 = vpop.permute.xlu0 %946
        %948 = vrot.lane.b32.xlu0 %v350, 96
        %v949 = vpop.permute.xlu0 %948
        %950 = vrot.lane.b32.xlu0 %v352, 96
        %v951 = vpop.permute.xlu0 %950
        %952 = vrot.lane.b32.xlu0 %v353, 96
        %v953 = vpop.permute.xlu0 %952
        %954 = vrot.lane.b32.xlu0 %v355, 96
        %v955 = vpop.permute.xlu0 %954
        %956 = vrot.lane.b32.xlu0 %v356, 96
        %v957 = vpop.permute.xlu0 %956
        %958 = vrot.lane.b32.xlu0 %v358, 96
        %v959 = vpop.permute.xlu0 %958
        %960 = vrot.lane.b32.xlu0 %v359, 96
        %v961 = vpop.permute.xlu0 %960
        %962 = vrot.lane.b32.xlu0 %v361, 96
        %v963 = vpop.permute.xlu0 %962
        %964 = vrot.lane.b32.xlu0 %v362, 96
        %v965 = vpop.permute.xlu0 %964
        %966 = vrot.lane.b32.xlu0 %v364, 96
        %v967 = vpop.permute.xlu0 %966
        %968 = vrot.lane.b32.xlu0 %v365, 96
        %v969 = vpop.permute.xlu0 %968
        %970 = vrot.lane.b32.xlu0 %v367, 96
        %v971 = vpop.permute.xlu0 %970
        %972 = vrot.lane.b32.xlu0 %v368, 96
        %v973 = vpop.permute.xlu0 %972
        %974 = vrot.lane.b32.xlu0 %v370, 96
        %v975 = vpop.permute.xlu0 %974
        %976 = vrot.lane.b32.xlu0 %v371, 96
        %v977 = vpop.permute.xlu0 %976
        %978 = vrot.lane.b32.xlu0 %v373, 96
        %v979 = vpop.permute.xlu0 %978
        %980 = vrot.lane.b32.xlu0 %v374, 96
        %v981 = vpop.permute.xlu0 %980
        %vm1014 = vcmask 1048320
        %1015 = vst.msk [vmem:[#allocation3] sm:$0xff] %vm1014, %v919
        %1016 = vst.msk [vmem:[#allocation3 + $0x18] sm:$0xff] %vm1014, %v921
        %1017 = vst.msk [vmem:[#allocation3 + $0x30] sm:$0xff] %vm1014, %v923
        %1018 = vst.msk [vmem:[#allocation3 + $0x48] sm:$0xff] %vm1014, %v925
        %1019 = vst.msk [vmem:[#allocation3 + $0x60] sm:$0xff] %vm1014, %v927
        %1020 = vst.msk [vmem:[#allocation3 + $0x78] sm:$0xff] %vm1014, %v929
        %1021 = vst.msk [vmem:[#allocation3 + $0x90] sm:$0xff] %vm1014, %v931
        %1022 = vst.msk [vmem:[#allocation3 + $0xa8] sm:$0xff] %vm1014, %v933
        %1023 = vst.msk [vmem:[#allocation3 + $0xc0] sm:$0xff] %vm1014, %v935
        %1024 = vst.msk [vmem:[#allocation3 + $0xd8] sm:$0xff] %vm1014, %v937
        %1025 = vst.msk [vmem:[#allocation3 + $0xf0] sm:$0xff] %vm1014, %v939
        %1026 = vst.msk [vmem:[#allocation3 + $0x108] sm:$0xff] %vm1014, %v941
        %1027 = vst.msk [vmem:[#allocation3 + $0x120] sm:$0xff] %vm1014, %v943
        %1028 = vst.msk [vmem:[#allocation3 + $0x138] sm:$0xff] %vm1014, %v945
        %1029 = vst.msk [vmem:[#allocation3 + $0x150] sm:$0xff] %vm1014, %v947
        %1030 = vst.msk [vmem:[#allocation3 + $0x168] sm:$0xff] %vm1014, %v949
        %1031 = vst.msk [vmem:[#allocation3 + $0x180] sm:$0xff] %vm1014, %v951
        %1032 = vst.msk [vmem:[#allocation3 + $0x198] sm:$0xff] %vm1014, %v953
        %1033 = vst.msk [vmem:[#allocation3 + $0x1b0] sm:$0xff] %vm1014, %v955
        %1034 = vst.msk [vmem:[#allocation3 + $0x1c8] sm:$0xff] %vm1014, %v957
        %1035 = vst.msk [vmem:[#allocation3 + $0x1e0] sm:$0xff] %vm1014, %v959
        %1036 = vst.msk [vmem:[#allocation3 + $0x1f8] sm:$0xff] %vm1014, %v961
        %1037 = vst.msk [vmem:[#allocation3 + $0x210] sm:$0xff] %vm1014, %v963
        %1038 = vst.msk [vmem:[#allocation3 + $0x228] sm:$0xff] %vm1014, %v965
        %1039 = vst.msk [vmem:[#allocation3 + $0x240] sm:$0xff] %vm1014, %v967
        %1040 = vst.msk [vmem:[#allocation3 + $0x258] sm:$0xff] %vm1014, %v969
        %1041 = vst.msk [vmem:[#allocation3 + $0x270] sm:$0xff] %vm1014, %v971
        %1042 = vst.msk [vmem:[#allocation3 + $0x288] sm:$0xff] %vm1014, %v973
        %1043 = vst.msk [vmem:[#allocation3 + $0x2a0] sm:$0xff] %vm1014, %v975
        %1044 = vst.msk [vmem:[#allocation3 + $0x2b8] sm:$0xff] %vm1014, %v977
        %1045 = vst.msk [vmem:[#allocation3 + $0x2d0] sm:$0xff] %vm1014, %v979
        %1046 = vst.msk [vmem:[#allocation3 + $0x2e8] sm:$0xff] %vm1014, %v981
        %v1048 = vrot.slane %v373, 1
        %v1049 = vrot.slane %v374, 1
        %v1050 = vsel %vm496, %v1048, %v1049
        %v1051 = vrot.slane %v375, 1
        %v1052 = vsel %vm496, %v1049, %v1051
        %1085 = vst.msk [vmem:[#allocation3 + $0x8] sm:$0xff] %vm415, %v504
        %1086 = vst.msk [vmem:[#allocation3 + $0x20] sm:$0xff] %vm415, %v506
        %1087 = vst.msk [vmem:[#allocation3 + $0x38] sm:$0xff] %vm415, %v509
        %1088 = vst.msk [vmem:[#allocation3 + $0x50] sm:$0xff] %vm415, %v511
        %1089 = vst.msk [vmem:[#allocation3 + $0x68] sm:$0xff] %vm415, %v514
        %1090 = vst.msk [vmem:[#allocation3 + $0x80] sm:$0xff] %vm415, %v516
        %1091 = vst.msk [vmem:[#allocation3 + $0x98] sm:$0xff] %vm415, %v519
        %1092 = vst.msk [vmem:[#allocation3 + $0xb0] sm:$0xff] %vm415, %v521
        %1093 = vst.msk [vmem:[#allocation3 + $0xc8] sm:$0xff] %vm415, %v524
        %1094 = vst.msk [vmem:[#allocation3 + $0xe0] sm:$0xff] %vm415, %v526
        %1095 = vst.msk [vmem:[#allocation3 + $0xf8] sm:$0xff] %vm415, %v529
        %1096 = vst.msk [vmem:[#allocation3 + $0x110] sm:$0xff] %vm415, %v531
        %1097 = vst.msk [vmem:[#allocation3 + $0x128] sm:$0xff] %vm415, %v534
        %1098 = vst.msk [vmem:[#allocation3 + $0x140] sm:$0xff] %vm415, %v536
        %1099 = vst.msk [vmem:[#allocation3 + $0x158] sm:$0xff] %vm415, %v539
        %1100 = vst.msk [vmem:[#allocation3 + $0x170] sm:$0xff] %vm415, %v541
        %1101 = vst.msk [vmem:[#allocation3 + $0x188] sm:$0xff] %vm415, %v544
        %1102 = vst.msk [vmem:[#allocation3 + $0x1a0] sm:$0xff] %vm415, %v546
        %1103 = vst.msk [vmem:[#allocation3 + $0x1b8] sm:$0xff] %vm415, %v549
        %1104 = vst.msk [vmem:[#allocation3 + $0x1d0] sm:$0xff] %vm415, %v551
        %1105 = vst.msk [vmem:[#allocation3 + $0x1e8] sm:$0xff] %vm415, %v554
        %1106 = vst.msk [vmem:[#allocation3 + $0x200] sm:$0xff] %vm415, %v556
        %1107 = vst.msk [vmem:[#allocation3 + $0x218] sm:$0xff] %vm415, %v559
        %1108 = vst.msk [vmem:[#allocation3 + $0x230] sm:$0xff] %vm415, %v561
        %1109 = vst.msk [vmem:[#allocation3 + $0x248] sm:$0xff] %vm415, %v564
        %1110 = vst.msk [vmem:[#allocation3 + $0x260] sm:$0xff] %vm415, %v566
        %1111 = vst.msk [vmem:[#allocation3 + $0x278] sm:$0xff] %vm415, %v569
        %1112 = vst.msk [vmem:[#allocation3 + $0x290] sm:$0xff] %vm415, %v571
        %1113 = vst.msk [vmem:[#allocation3 + $0x2a8] sm:$0xff] %vm415, %v574
        %1114 = vst.msk [vmem:[#allocation3 + $0x2c0] sm:$0xff] %vm415, %v576
        %1115 = vst.msk [vmem:[#allocation3 + $0x2d8] sm:$0xff] %vm415, %v1050
        %1116 = vst.msk [vmem:[#allocation3 + $0x2f0] sm:$0xff] %vm415, %v1052
        %v1117 = vrot.slane %v373, 2
        %v1118 = vrot.slane %v374, 2
        %v1119 = vsel %vm706, %v1117, %v1118
        %v1120 = vrot.slane %v375, 2
        %v1121 = vsel %vm706, %v1118, %v1120
        %1122 = vrot.lane.b32.xlu0 %v714, 32
        %v1123 = vpop.permute.xlu0 %1122
        %1124 = vrot.lane.b32.xlu0 %v716, 32
        %v1125 = vpop.permute.xlu0 %1124
        %1126 = vrot.lane.b32.xlu0 %v719, 32
        %v1127 = vpop.permute.xlu0 %1126
        %1128 = vrot.lane.b32.xlu0 %v721, 32
        %v1129 = vpop.permute.xlu0 %1128
        %1130 = vrot.lane.b32.xlu0 %v724, 32
        %v1131 = vpop.permute.xlu0 %1130
        %1132 = vrot.lane.b32.xlu0 %v726, 32
        %v1133 = vpop.permute.xlu0 %1132
        %1134 = vrot.lane.b32.xlu0 %v729, 32
        %v1135 = vpop.permute.xlu0 %1134
        %1136 = vrot.lane.b32.xlu0 %v731, 32
        %v1137 = vpop.permute.xlu0 %1136
        %1138 = vrot.lane.b32.xlu0 %v734, 32
        %v1139 = vpop.permute.xlu0 %1138
        %1140 = vrot.lane.b32.xlu0 %v736, 32
        %v1141 = vpop.permute.xlu0 %1140
        %1142 = vrot.lane.b32.xlu0 %v739, 32
        %v1143 = vpop.permute.xlu0 %1142
        %1144 = vrot.lane.b32.xlu0 %v741, 32
        %v1145 = vpop.permute.xlu0 %1144
        %1146 = vrot.lane.b32.xlu0 %v744, 32
        %v1147 = vpop.permute.xlu0 %1146
        %1148 = vrot.lane.b32.xlu0 %v746, 32
        %v1149 = vpop.permute.xlu0 %1148
        %1150 = vrot.lane.b32.xlu0 %v749, 32
        %v1151 = vpop.permute.xlu0 %1150
        %1152 = vrot.lane.b32.xlu0 %v751, 32
        %v1153 = vpop.permute.xlu0 %1152
        %1154 = vrot.lane.b32.xlu0 %v754, 32
        %v1155 = vpop.permute.xlu0 %1154
        %1156 = vrot.lane.b32.xlu0 %v756, 32
        %v1157 = vpop.permute.xlu0 %1156
        %1158 = vrot.lane.b32.xlu0 %v759, 32
        %v1159 = vpop.permute.xlu0 %1158
        %1160 = vrot.lane.b32.xlu0 %v761, 32
        %v1161 = vpop.permute.xlu0 %1160
        %1162 = vrot.lane.b32.xlu0 %v764, 32
        %v1163 = vpop.permute.xlu0 %1162
        %1164 = vrot.lane.b32.xlu0 %v766, 32
        %v1165 = vpop.permute.xlu0 %1164
        %1166 = vrot.lane.b32.xlu0 %v769, 32
        %v1167 = vpop.permute.xlu0 %1166
        %1168 = vrot.lane.b32.xlu0 %v771, 32
        %v1169 = vpop.permute.xlu0 %1168
        %1170 = vrot.lane.b32.xlu0 %v774, 32
        %v1171 = vpop.permute.xlu0 %1170
        %1172 = vrot.lane.b32.xlu0 %v776, 32
        %v1173 = vpop.permute.xlu0 %1172
        %1174 = vrot.lane.b32.xlu0 %v779, 32
        %v1175 = vpop.permute.xlu0 %1174
        %1176 = vrot.lane.b32.xlu0 %v781, 32
        %v1177 = vpop.permute.xlu0 %1176
        %1178 = vrot.lane.b32.xlu0 %v784, 32
        %v1179 = vpop.permute.xlu0 %1178
        %1180 = vrot.lane.b32.xlu0 %v786, 32
        %v1181 = vpop.permute.xlu0 %1180
        %1182 = vrot.lane.b32.xlu0 %v1119, 32
        %v1183 = vpop.permute.xlu0 %1182
        %1184 = vrot.lane.b32.xlu0 %v1121, 32
        %v1185 = vpop.permute.xlu0 %1184
        %1218 = vst.msk [vmem:[#allocation3 + $0x8] sm:$0xff] %vm673, %v1123
        %1219 = vst.msk [vmem:[#allocation3 + $0x20] sm:$0xff] %vm673, %v1125
        %1220 = vst.msk [vmem:[#allocation3 + $0x38] sm:$0xff] %vm673, %v1127
        %1221 = vst.msk [vmem:[#allocation3 + $0x50] sm:$0xff] %vm673, %v1129
        %1222 = vst.msk [vmem:[#allocation3 + $0x68] sm:$0xff] %vm673, %v1131
        %1223 = vst.msk [vmem:[#allocation3 + $0x80] sm:$0xff] %vm673, %v1133
        %1224 = vst.msk [vmem:[#allocation3 + $0x98] sm:$0xff] %vm673, %v1135
        %1225 = vst.msk [vmem:[#allocation3 + $0xb0] sm:$0xff] %vm673, %v1137
        %1226 = vst.msk [vmem:[#allocation3 + $0xc8] sm:$0xff] %vm673, %v1139
        %1227 = vst.msk [vmem:[#allocation3 + $0xe0] sm:$0xff] %vm673, %v1141
        %1228 = vst.msk [vmem:[#allocation3 + $0xf8] sm:$0xff] %vm673, %v1143
        %1229 = vst.msk [vmem:[#allocation3 + $0x110] sm:$0xff] %vm673, %v1145
        %1230 = vst.msk [vmem:[#allocation3 + $0x128] sm:$0xff] %vm673, %v1147
        %1231 = vst.msk [vmem:[#allocation3 + $0x140] sm:$0xff] %vm673, %v1149
        %1232 = vst.msk [vmem:[#allocation3 + $0x158] sm:$0xff] %vm673, %v1151
        %1233 = vst.msk [vmem:[#allocation3 + $0x170] sm:$0xff] %vm673, %v1153
        %1234 = vst.msk [vmem:[#allocation3 + $0x188] sm:$0xff] %vm673, %v1155
        %1235 = vst.msk [vmem:[#allocation3 + $0x1a0] sm:$0xff] %vm673, %v1157
        %1236 = vst.msk [vmem:[#allocation3 + $0x1b8] sm:$0xff] %vm673, %v1159
        %1237 = vst.msk [vmem:[#allocation3 + $0x1d0] sm:$0xff] %vm673, %v1161
        %1238 = vst.msk [vmem:[#allocation3 + $0x1e8] sm:$0xff] %vm673, %v1163
        %1239 = vst.msk [vmem:[#allocation3 + $0x200] sm:$0xff] %vm673, %v1165
        %1240 = vst.msk [vmem:[#allocation3 + $0x218] sm:$0xff] %vm673, %v1167
        %1241 = vst.msk [vmem:[#allocation3 + $0x230] sm:$0xff] %vm673, %v1169
        %1242 = vst.msk [vmem:[#allocation3 + $0x248] sm:$0xff] %vm673, %v1171
        %1243 = vst.msk [vmem:[#allocation3 + $0x260] sm:$0xff] %vm673, %v1173
        %1244 = vst.msk [vmem:[#allocation3 + $0x278] sm:$0xff] %vm673, %v1175
        %1245 = vst.msk [vmem:[#allocation3 + $0x290] sm:$0xff] %vm673, %v1177
        %1246 = vst.msk [vmem:[#allocation3 + $0x2a8] sm:$0xff] %vm673, %v1179
        %1247 = vst.msk [vmem:[#allocation3 + $0x2c0] sm:$0xff] %vm673, %v1181
        %1248 = vst.msk [vmem:[#allocation3 + $0x2d8] sm:$0xff] %vm673, %v1183
        %1249 = vst.msk [vmem:[#allocation3 + $0x2f0] sm:$0xff] %vm673, %v1185
        %1252 = vrot.lane.b32.xlu0 %v331, 64
        %v1253 = vpop.permute.xlu0 %1252
        %1254 = vrot.lane.b32.xlu0 %v332, 64
        %v1255 = vpop.permute.xlu0 %1254
        %1256 = vrot.lane.b32.xlu0 %v334, 64
        %v1257 = vpop.permute.xlu0 %1256
        %1258 = vrot.lane.b32.xlu0 %v335, 64
        %v1259 = vpop.permute.xlu0 %1258
        %1260 = vrot.lane.b32.xlu0 %v337, 64
        %v1261 = vpop.permute.xlu0 %1260
        %1262 = vrot.lane.b32.xlu0 %v338, 64
        %v1263 = vpop.permute.xlu0 %1262
        %1264 = vrot.lane.b32.xlu0 %v340, 64
        %v1265 = vpop.permute.xlu0 %1264
        %1266 = vrot.lane.b32.xlu0 %v341, 64
        %v1267 = vpop.permute.xlu0 %1266
        %1268 = vrot.lane.b32.xlu0 %v343, 64
        %v1269 = vpop.permute.xlu0 %1268
        %1270 = vrot.lane.b32.xlu0 %v344, 64
        %v1271 = vpop.permute.xlu0 %1270
        %1272 = vrot.lane.b32.xlu0 %v346, 64
        %v1273 = vpop.permute.xlu0 %1272
        %1274 = vrot.lane.b32.xlu0 %v347, 64
        %v1275 = vpop.permute.xlu0 %1274
        %1276 = vrot.lane.b32.xlu0 %v349, 64
        %v1277 = vpop.permute.xlu0 %1276
        %1278 = vrot.lane.b32.xlu0 %v350, 64
        %v1279 = vpop.permute.xlu0 %1278
        %1280 = vrot.lane.b32.xlu0 %v352, 64
        %v1281 = vpop.permute.xlu0 %1280
        %1282 = vrot.lane.b32.xlu0 %v353, 64
        %v1283 = vpop.permute.xlu0 %1282
        %1284 = vrot.lane.b32.xlu0 %v355, 64
        %v1285 = vpop.permute.xlu0 %1284
        %1286 = vrot.lane.b32.xlu0 %v356, 64
        %v1287 = vpop.permute.xlu0 %1286
        %1288 = vrot.lane.b32.xlu0 %v358, 64
        %v1289 = vpop.permute.xlu0 %1288
        %1290 = vrot.lane.b32.xlu0 %v359, 64
        %v1291 = vpop.permute.xlu0 %1290
        %1292 = vrot.lane.b32.xlu0 %v361, 64
        %v1293 = vpop.permute.xlu0 %1292
        %1294 = vrot.lane.b32.xlu0 %v362, 64
        %v1295 = vpop.permute.xlu0 %1294
        %1296 = vrot.lane.b32.xlu0 %v364, 64
        %v1297 = vpop.permute.xlu0 %1296
        %1298 = vrot.lane.b32.xlu0 %v365, 64
        %v1299 = vpop.permute.xlu0 %1298
        %1300 = vrot.lane.b32.xlu0 %v367, 64
        %v1301 = vpop.permute.xlu0 %1300
        %1302 = vrot.lane.b32.xlu0 %v368, 64
        %v1303 = vpop.permute.xlu0 %1302
        %1304 = vrot.lane.b32.xlu0 %v370, 64
        %v1305 = vpop.permute.xlu0 %1304
        %1306 = vrot.lane.b32.xlu0 %v371, 64
        %v1307 = vpop.permute.xlu0 %1306
        %1308 = vrot.lane.b32.xlu0 %v373, 64
        %v1309 = vpop.permute.xlu0 %1308
        %1310 = vrot.lane.b32.xlu0 %v374, 64
        %v1311 = vpop.permute.xlu0 %1310
        %1312 = vrot.lane.b32.xlu0 %v376, 64
        %v1313 = vpop.permute.xlu0 %1312
        %1314 = vrot.lane.b32.xlu0 %v377, 64
        %v1315 = vpop.permute.xlu0 %1314
        %1348 = vst.msk [vmem:[#allocation3 + $0x8] sm:$0xff] %vm883, %v1253
        %1349 = vst.msk [vmem:[#allocation3 + $0x20] sm:$0xff] %vm883, %v1255
        %1350 = vst.msk [vmem:[#allocation3 + $0x38] sm:$0xff] %vm883, %v1257
        %1351 = vst.msk [vmem:[#allocation3 + $0x50] sm:$0xff] %vm883, %v1259
        %1352 = vst.msk [vmem:[#allocation3 + $0x68] sm:$0xff] %vm883, %v1261
        %1353 = vst.msk [vmem:[#allocation3 + $0x80] sm:$0xff] %vm883, %v1263
        %1354 = vst.msk [vmem:[#allocation3 + $0x98] sm:$0xff] %vm883, %v1265
        %1355 = vst.msk [vmem:[#allocation3 + $0xb0] sm:$0xff] %vm883, %v1267
        %1356 = vst.msk [vmem:[#allocation3 + $0xc8] sm:$0xff] %vm883, %v1269
        %1357 = vst.msk [vmem:[#allocation3 + $0xe0] sm:$0xff] %vm883, %v1271
        %1358 = vst.msk [vmem:[#allocation3 + $0xf8] sm:$0xff] %vm883, %v1273
        %1359 = vst.msk [vmem:[#allocation3 + $0x110] sm:$0xff] %vm883, %v1275
        %1360 = vst.msk [vmem:[#allocation3 + $0x128] sm:$0xff] %vm883, %v1277
        %1361 = vst.msk [vmem:[#allocation3 + $0x140] sm:$0xff] %vm883, %v1279
        %1362 = vst.msk [vmem:[#allocation3 + $0x158] sm:$0xff] %vm883, %v1281
        %1363 = vst.msk [vmem:[#allocation3 + $0x170] sm:$0xff] %vm883, %v1283
        %1364 = vst.msk [vmem:[#allocation3 + $0x188] sm:$0xff] %vm883, %v1285
        %1365 = vst.msk [vmem:[#allocation3 + $0x1a0] sm:$0xff] %vm883, %v1287
        %1366 = vst.msk [vmem:[#allocation3 + $0x1b8] sm:$0xff] %vm883, %v1289
        %1367 = vst.msk [vmem:[#allocation3 + $0x1d0] sm:$0xff] %vm883, %v1291
        %1368 = vst.msk [vmem:[#allocation3 + $0x1e8] sm:$0xff] %vm883, %v1293
        %1369 = vst.msk [vmem:[#allocation3 + $0x200] sm:$0xff] %vm883, %v1295
        %1370 = vst.msk [vmem:[#allocation3 + $0x218] sm:$0xff] %vm883, %v1297
        %1371 = vst.msk [vmem:[#allocation3 + $0x230] sm:$0xff] %vm883, %v1299
        %1372 = vst.msk [vmem:[#allocation3 + $0x248] sm:$0xff] %vm883, %v1301
        %1373 = vst.msk [vmem:[#allocation3 + $0x260] sm:$0xff] %vm883, %v1303
        %1374 = vst.msk [vmem:[#allocation3 + $0x278] sm:$0xff] %vm883, %v1305
        %1375 = vst.msk [vmem:[#allocation3 + $0x290] sm:$0xff] %vm883, %v1307
        %1376 = vst.msk [vmem:[#allocation3 + $0x2a8] sm:$0xff] %vm883, %v1309
        %1377 = vst.msk [vmem:[#allocation3 + $0x2c0] sm:$0xff] %vm883, %v1311
        %1378 = vst.msk [vmem:[#allocation3 + $0x2d8] sm:$0xff] %vm883, %v1313
        %1379 = vst.msk [vmem:[#allocation3 + $0x2f0] sm:$0xff] %vm883, %v1315
        %v1381 = vrot.slane %v376, 1
        %v1382 = vrot.slane %v377, 1
        %v1383 = vsel %vm496, %v1381, %v1382
        %v1384 = vrot.slane %v378, 1
        %v1385 = vsel %vm496, %v1382, %v1384
        %1386 = vrot.lane.b32.xlu0 %v509, 96
        %v1387 = vpop.permute.xlu0 %1386
        %1388 = vrot.lane.b32.xlu0 %v511, 96
        %v1389 = vpop.permute.xlu0 %1388
        %1390 = vrot.lane.b32.xlu0 %v514, 96
        %v1391 = vpop.permute.xlu0 %1390
        %1392 = vrot.lane.b32.xlu0 %v516, 96
        %v1393 = vpop.permute.xlu0 %1392
        %1394 = vrot.lane.b32.xlu0 %v519, 96
        %v1395 = vpop.permute.xlu0 %1394
        %1396 = vrot.lane.b32.xlu0 %v521, 96
        %v1397 = vpop.permute.xlu0 %1396
        %1398 = vrot.lane.b32.xlu0 %v524, 96
        %v1399 = vpop.permute.xlu0 %1398
        %1400 = vrot.lane.b32.xlu0 %v526, 96
        %v1401 = vpop.permute.xlu0 %1400
        %1402 = vrot.lane.b32.xlu0 %v529, 96
        %v1403 = vpop.permute.xlu0 %1402
        %1404 = vrot.lane.b32.xlu0 %v531, 96
        %v1405 = vpop.permute.xlu0 %1404
        %1406 = vrot.lane.b32.xlu0 %v534, 96
        %v1407 = vpop.permute.xlu0 %1406
        %1408 = vrot.lane.b32.xlu0 %v536, 96
        %v1409 = vpop.permute.xlu0 %1408
        %1410 = vrot.lane.b32.xlu0 %v539, 96
        %v1411 = vpop.permute.xlu0 %1410
        %1412 = vrot.lane.b32.xlu0 %v541, 96
        %v1413 = vpop.permute.xlu0 %1412
        %1414 = vrot.lane.b32.xlu0 %v544, 96
        %v1415 = vpop.permute.xlu0 %1414
        %1416 = vrot.lane.b32.xlu0 %v546, 96
        %v1417 = vpop.permute.xlu0 %1416
        %1418 = vrot.lane.b32.xlu0 %v549, 96
        %v1419 = vpop.permute.xlu0 %1418
        %1420 = vrot.lane.b32.xlu0 %v551, 96
        %v1421 = vpop.permute.xlu0 %1420
        %1422 = vrot.lane.b32.xlu0 %v554, 96
        %v1423 = vpop.permute.xlu0 %1422
        %1424 = vrot.lane.b32.xlu0 %v556, 96
        %v1425 = vpop.permute.xlu0 %1424
        %1426 = vrot.lane.b32.xlu0 %v559, 96
        %v1427 = vpop.permute.xlu0 %1426
        %1428 = vrot.lane.b32.xlu0 %v561, 96
        %v1429 = vpop.permute.xlu0 %1428
        %1430 = vrot.lane.b32.xlu0 %v564, 96
        %v1431 = vpop.permute.xlu0 %1430
        %1432 = vrot.lane.b32.xlu0 %v566, 96
        %v1433 = vpop.permute.xlu0 %1432
        %1434 = vrot.lane.b32.xlu0 %v569, 96
        %v1435 = vpop.permute.xlu0 %1434
        %1436 = vrot.lane.b32.xlu0 %v571, 96
        %v1437 = vpop.permute.xlu0 %1436
        %1438 = vrot.lane.b32.xlu0 %v574, 96
        %v1439 = vpop.permute.xlu0 %1438
        %1440 = vrot.lane.b32.xlu0 %v576, 96
        %v1441 = vpop.permute.xlu0 %1440
        %1442 = vrot.lane.b32.xlu0 %v1050, 96
        %v1443 = vpop.permute.xlu0 %1442
        %1444 = vrot.lane.b32.xlu0 %v1052, 96
        %v1445 = vpop.permute.xlu0 %1444
        %1446 = vrot.lane.b32.xlu0 %v1383, 96
        %v1447 = vpop.permute.xlu0 %1446
        %1448 = vrot.lane.b32.xlu0 %v1385, 96
        %v1449 = vpop.permute.xlu0 %1448
        %1482 = vst.msk [vmem:[#allocation3 + $0x8] sm:$0xff] %vm1014, %v1387
        %1483 = vst.msk [vmem:[#allocation3 + $0x20] sm:$0xff] %vm1014, %v1389
        %1484 = vst.msk [vmem:[#allocation3 + $0x38] sm:$0xff] %vm1014, %v1391
        %1485 = vst.msk [vmem:[#allocation3 + $0x50] sm:$0xff] %vm1014, %v1393
        %1486 = vst.msk [vmem:[#allocation3 + $0x68] sm:$0xff] %vm1014, %v1395
        %1487 = vst.msk [vmem:[#allocation3 + $0x80] sm:$0xff] %vm1014, %v1397
        %1488 = vst.msk [vmem:[#allocation3 + $0x98] sm:$0xff] %vm1014, %v1399
        %1489 = vst.msk [vmem:[#allocation3 + $0xb0] sm:$0xff] %vm1014, %v1401
        %1490 = vst.msk [vmem:[#allocation3 + $0xc8] sm:$0xff] %vm1014, %v1403
        %1491 = vst.msk [vmem:[#allocation3 + $0xe0] sm:$0xff] %vm1014, %v1405
        %1492 = vst.msk [vmem:[#allocation3 + $0xf8] sm:$0xff] %vm1014, %v1407
        %1493 = vst.msk [vmem:[#allocation3 + $0x110] sm:$0xff] %vm1014, %v1409
        %1494 = vst.msk [vmem:[#allocation3 + $0x128] sm:$0xff] %vm1014, %v1411
        %1495 = vst.msk [vmem:[#allocation3 + $0x140] sm:$0xff] %vm1014, %v1413
        %1496 = vst.msk [vmem:[#allocation3 + $0x158] sm:$0xff] %vm1014, %v1415
        %1497 = vst.msk [vmem:[#allocation3 + $0x170] sm:$0xff] %vm1014, %v1417
        %1498 = vst.msk [vmem:[#allocation3 + $0x188] sm:$0xff] %vm1014, %v1419
        %1499 = vst.msk [vmem:[#allocation3 + $0x1a0] sm:$0xff] %vm1014, %v1421
        %1500 = vst.msk [vmem:[#allocation3 + $0x1b8] sm:$0xff] %vm1014, %v1423
        %1501 = vst.msk [vmem:[#allocation3 + $0x1d0] sm:$0xff] %vm1014, %v1425
        %1502 = vst.msk [vmem:[#allocation3 + $0x1e8] sm:$0xff] %vm1014, %v1427
        %1503 = vst.msk [vmem:[#allocation3 + $0x200] sm:$0xff] %vm1014, %v1429
        %1504 = vst.msk [vmem:[#allocation3 + $0x218] sm:$0xff] %vm1014, %v1431
        %1505 = vst.msk [vmem:[#allocation3 + $0x230] sm:$0xff] %vm1014, %v1433
        %1506 = vst.msk [vmem:[#allocation3 + $0x248] sm:$0xff] %vm1014, %v1435
        %1507 = vst.msk [vmem:[#allocation3 + $0x260] sm:$0xff] %vm1014, %v1437
        %1508 = vst.msk [vmem:[#allocation3 + $0x278] sm:$0xff] %vm1014, %v1439
        %1509 = vst.msk [vmem:[#allocation3 + $0x290] sm:$0xff] %vm1014, %v1441
        %1510 = vst.msk [vmem:[#allocation3 + $0x2a8] sm:$0xff] %vm1014, %v1443
        %1511 = vst.msk [vmem:[#allocation3 + $0x2c0] sm:$0xff] %vm1014, %v1445
        %1512 = vst.msk [vmem:[#allocation3 + $0x2d8] sm:$0xff] %vm1014, %v1447
        %1513 = vst.msk [vmem:[#allocation3 + $0x2f0] sm:$0xff] %vm1014, %v1449
        %v1514 = vrot.slane %v376, 2
        %v1515 = vrot.slane %v377, 2
        %v1516 = vsel %vm706, %v1514, %v1515
        %v1517 = vrot.slane %v378, 2
        %v1518 = vsel %vm706, %v1515, %v1517
        %1551 = vst.msk [vmem:[#allocation3 + $0x10] sm:$0xff] %vm415, %v719
        %1552 = vst.msk [vmem:[#allocation3 + $0x28] sm:$0xff] %vm415, %v721
        %1553 = vst.msk [vmem:[#allocation3 + $0x40] sm:$0xff] %vm415, %v724
        %1554 = vst.msk [vmem:[#allocation3 + $0x58] sm:$0xff] %vm415, %v726
        %1555 = vst.msk [vmem:[#allocation3 + $0x70] sm:$0xff] %vm415, %v729
        %1556 = vst.msk [vmem:[#allocation3 + $0x88] sm:$0xff] %vm415, %v731
        %1557 = vst.msk [vmem:[#allocation3 + $0xa0] sm:$0xff] %vm415, %v734
        %1558 = vst.msk [vmem:[#allocation3 + $0xb8] sm:$0xff] %vm415, %v736
        %1559 = vst.msk [vmem:[#allocation3 + $0xd0] sm:$0xff] %vm415, %v739
        %1560 = vst.msk [vmem:[#allocation3 + $0xe8] sm:$0xff] %vm415, %v741
        %1561 = vst.msk [vmem:[#allocation3 + $0x100] sm:$0xff] %vm415, %v744
        %1562 = vst.msk [vmem:[#allocation3 + $0x118] sm:$0xff] %vm415, %v746
        %1563 = vst.msk [vmem:[#allocation3 + $0x130] sm:$0xff] %vm415, %v749
        %1564 = vst.msk [vmem:[#allocation3 + $0x148] sm:$0xff] %vm415, %v751
        %1565 = vst.msk [vmem:[#allocation3 + $0x160] sm:$0xff] %vm415, %v754
        %1566 = vst.msk [vmem:[#allocation3 + $0x178] sm:$0xff] %vm415, %v756
        %1567 = vst.msk [vmem:[#allocation3 + $0x190] sm:$0xff] %vm415, %v759
        %1568 = vst.msk [vmem:[#allocation3 + $0x1a8] sm:$0xff] %vm415, %v761
        %1569 = vst.msk [vmem:[#allocation3 + $0x1c0] sm:$0xff] %vm415, %v764
        %1570 = vst.msk [vmem:[#allocation3 + $0x1d8] sm:$0xff] %vm415, %v766
        %1571 = vst.msk [vmem:[#allocation3 + $0x1f0] sm:$0xff] %vm415, %v769
        %1572 = vst.msk [vmem:[#allocation3 + $0x208] sm:$0xff] %vm415, %v771
        %1573 = vst.msk [vmem:[#allocation3 + $0x220] sm:$0xff] %vm415, %v774
        %1574 = vst.msk [vmem:[#allocation3 + $0x238] sm:$0xff] %vm415, %v776
        %1575 = vst.msk [vmem:[#allocation3 + $0x250] sm:$0xff] %vm415, %v779
        %1576 = vst.msk [vmem:[#allocation3 + $0x268] sm:$0xff] %vm415, %v781
        %1577 = vst.msk [vmem:[#allocation3 + $0x280] sm:$0xff] %vm415, %v784
        %1578 = vst.msk [vmem:[#allocation3 + $0x298] sm:$0xff] %vm415, %v786
        %1579 = vst.msk [vmem:[#allocation3 + $0x2b0] sm:$0xff] %vm415, %v1119
        %1580 = vst.msk [vmem:[#allocation3 + $0x2c8] sm:$0xff] %vm415, %v1121
        %1581 = vst.msk [vmem:[#allocation3 + $0x2e0] sm:$0xff] %vm415, %v1516
        %1582 = vst.msk [vmem:[#allocation3 + $0x2f8] sm:$0xff] %vm415, %v1518
        %v1583 = vld [vmem:[#allocation3] sm:$0xff]
        %v1584 = vld [vmem:[#allocation3 + $0x8] sm:$0xff]
        %v1585 = vld [vmem:[#allocation3 + $0x10] sm:$0xff]
        %v1586 = vld [vmem:[#allocation3 + $0x18] sm:$0xff]
        %v1587 = vld [vmem:[#allocation3 + $0x20] sm:$0xff]
        %v1588 = vld [vmem:[#allocation3 + $0x28] sm:$0xff]
        %v1589 = vld [vmem:[#allocation3 + $0x30] sm:$0xff]
        %v1590 = vld [vmem:[#allocation3 + $0x38] sm:$0xff]
        %v1591 = vld [vmem:[#allocation3 + $0x40] sm:$0xff]
        %v1592 = vld [vmem:[#allocation3 + $0x48] sm:$0xff]
        %v1593 = vld [vmem:[#allocation3 + $0x50] sm:$0xff]
        %v1594 = vld [vmem:[#allocation3 + $0x58] sm:$0xff]
        %v1595 = vld [vmem:[#allocation3 + $0x60] sm:$0xff]
        %v1596 = vld [vmem:[#allocation3 + $0x68] sm:$0xff]
        %v1597 = vld [vmem:[#allocation3 + $0x70] sm:$0xff]
        %v1598 = vld [vmem:[#allocation3 + $0x78] sm:$0xff]
        %v1599 = vld [vmem:[#allocation3 + $0x80] sm:$0xff]
        %v1600 = vld [vmem:[#allocation3 + $0x88] sm:$0xff]
        %v1601 = vld [vmem:[#allocation3 + $0x90] sm:$0xff]
        %v1602 = vld [vmem:[#allocation3 + $0x98] sm:$0xff]
        %v1603 = vld [vmem:[#allocation3 + $0xa0] sm:$0xff]
        %v1604 = vld [vmem:[#allocation3 + $0xa8] sm:$0xff]
        %v1605 = vld [vmem:[#allocation3 + $0xb0] sm:$0xff]
        %v1606 = vld [vmem:[#allocation3 + $0xb8] sm:$0xff]
        %v1607 = vld [vmem:[#allocation3 + $0xc0] sm:$0xff]
        %v1608 = vld [vmem:[#allocation3 + $0xc8] sm:$0xff]
        %v1609 = vld [vmem:[#allocation3 + $0xd0] sm:$0xff]
        %v1610 = vld [vmem:[#allocation3 + $0xd8] sm:$0xff]
        %v1611 = vld [vmem:[#allocation3 + $0xe0] sm:$0xff]
        %v1612 = vld [vmem:[#allocation3 + $0xe8] sm:$0xff]
        %v1613 = vld [vmem:[#allocation3 + $0xf0] sm:$0xff]
        %v1614 = vld [vmem:[#allocation3 + $0xf8] sm:$0xff]
        %v1615 = vld [vmem:[#allocation3 + $0x100] sm:$0xff]
        %v1616 = vld [vmem:[#allocation3 + $0x108] sm:$0xff]
        %v1617 = vld [vmem:[#allocation3 + $0x110] sm:$0xff]
        %v1618 = vld [vmem:[#allocation3 + $0x118] sm:$0xff]
        %v1619 = vld [vmem:[#allocation3 + $0x120] sm:$0xff]
        %v1620 = vld [vmem:[#allocation3 + $0x128] sm:$0xff]
        %v1621 = vld [vmem:[#allocation3 + $0x130] sm:$0xff]
        %v1622 = vld [vmem:[#allocation3 + $0x138] sm:$0xff]
        %v1623 = vld [vmem:[#allocation3 + $0x140] sm:$0xff]
        %v1624 = vld [vmem:[#allocation3 + $0x148] sm:$0xff]
        %v1625 = vld [vmem:[#allocation3 + $0x150] sm:$0xff]
        %v1626 = vld [vmem:[#allocation3 + $0x158] sm:$0xff]
        %v1627 = vld [vmem:[#allocation3 + $0x160] sm:$0xff]
        %v1628 = vld [vmem:[#allocation3 + $0x168] sm:$0xff]
        %v1629 = vld [vmem:[#allocation3 + $0x170] sm:$0xff]
        %v1630 = vld [vmem:[#allocation3 + $0x178] sm:$0xff]
        %v1631 = vld [vmem:[#allocation3 + $0x180] sm:$0xff]
        %v1632 = vld [vmem:[#allocation3 + $0x188] sm:$0xff]
        %v1633 = vld [vmem:[#allocation3 + $0x190] sm:$0xff]
        %v1634 = vld [vmem:[#allocation3 + $0x198] sm:$0xff]
        %v1635 = vld [vmem:[#allocation3 + $0x1a0] sm:$0xff]
        %v1636 = vld [vmem:[#allocation3 + $0x1a8] sm:$0xff]
        %v1637 = vld [vmem:[#allocation3 + $0x1b0] sm:$0xff]
        %v1638 = vld [vmem:[#allocation3 + $0x1b8] sm:$0xff]
        %v1639 = vld [vmem:[#allocation3 + $0x1c0] sm:$0xff]
        %v1640 = vld [vmem:[#allocation3 + $0x1c8] sm:$0xff]
        %v1641 = vld [vmem:[#allocation3 + $0x1d0] sm:$0xff]
        %v1642 = vld [vmem:[#allocation3 + $0x1d8] sm:$0xff]
        %v1643 = vld [vmem:[#allocation3 + $0x1e0] sm:$0xff]
        %v1644 = vld [vmem:[#allocation3 + $0x1e8] sm:$0xff]
        %v1645 = vld [vmem:[#allocation3 + $0x1f0] sm:$0xff]
        %v1646 = vld [vmem:[#allocation3 + $0x1f8] sm:$0xff]
        %v1647 = vld [vmem:[#allocation3 + $0x200] sm:$0xff]
        %v1648 = vld [vmem:[#allocation3 + $0x208] sm:$0xff]
        %v1649 = vld [vmem:[#allocation3 + $0x210] sm:$0xff]
        %v1650 = vld [vmem:[#allocation3 + $0x218] sm:$0xff]
        %v1651 = vld [vmem:[#allocation3 + $0x220] sm:$0xff]
        %v1652 = vld [vmem:[#allocation3 + $0x228] sm:$0xff]
        %v1653 = vld [vmem:[#allocation3 + $0x230] sm:$0xff]
        %v1654 = vld [vmem:[#allocation3 + $0x238] sm:$0xff]
        %v1655 = vld [vmem:[#allocation3 + $0x240] sm:$0xff]
        %v1656 = vld [vmem:[#allocation3 + $0x248] sm:$0xff]
        %v1657 = vld [vmem:[#allocation3 + $0x250] sm:$0xff]
        %v1658 = vld [vmem:[#allocation3 + $0x258] sm:$0xff]
        %v1659 = vld [vmem:[#allocation3 + $0x260] sm:$0xff]
        %v1660 = vld [vmem:[#allocation3 + $0x268] sm:$0xff]
        %v1661 = vld [vmem:[#allocation3 + $0x270] sm:$0xff]
        %v1662 = vld [vmem:[#allocation3 + $0x278] sm:$0xff]
        %v1663 = vld [vmem:[#allocation3 + $0x280] sm:$0xff]
        %v1664 = vld [vmem:[#allocation3 + $0x288] sm:$0xff]
        %v1665 = vld [vmem:[#allocation3 + $0x290] sm:$0xff]
        %v1666 = vld [vmem:[#allocation3 + $0x298] sm:$0xff]
        %v1667 = vld [vmem:[#allocation3 + $0x2a0] sm:$0xff]
        %v1668 = vld [vmem:[#allocation3 + $0x2a8] sm:$0xff]
        %v1669 = vld [vmem:[#allocation3 + $0x2b0] sm:$0xff]
        %v1670 = vld [vmem:[#allocation3 + $0x2b8] sm:$0xff]
        %v1671 = vld [vmem:[#allocation3 + $0x2c0] sm:$0xff]
        %v1672 = vld [vmem:[#allocation3 + $0x2c8] sm:$0xff]
        %v1673 = vld [vmem:[#allocation3 + $0x2d0] sm:$0xff]
        %v1674 = vld [vmem:[#allocation3 + $0x2d8] sm:$0xff]
        %v1675 = vld [vmem:[#allocation3 + $0x2e0] sm:$0xff]
        %v1676 = vld [vmem:[#allocation3 + $0x2e8] sm:$0xff]
        %v1677 = vld [vmem:[#allocation3 + $0x2f0] sm:$0xff]
        %v1678 = vld [vmem:[#allocation3 + $0x2f8] sm:$0xff]
        %v1679 = vpack.c.bf16 %v1586, %v1583
        %v1680 = vpack.c.bf16 %v1587, %v1584
        %v1681 = vpack.c.bf16 %v1588, %v1585
        %v1682 = vpack.c.bf16 %v1592, %v1589
        %v1683 = vpack.c.bf16 %v1593, %v1590
        %v1684 = vpack.c.bf16 %v1594, %v1591
        %v1685 = vpack.c.bf16 %v1598, %v1595
        %v1686 = vpack.c.bf16 %v1599, %v1596
        %v1687 = vpack.c.bf16 %v1600, %v1597
        %v1688 = vpack.c.bf16 %v1604, %v1601
        %v1689 = vpack.c.bf16 %v1605, %v1602
        %v1690 = vpack.c.bf16 %v1606, %v1603
        %v1691 = vpack.c.bf16 %v1610, %v1607
        %v1692 = vpack.c.bf16 %v1611, %v1608
        %v1693 = vpack.c.bf16 %v1612, %v1609
        %v1694 = vpack.c.bf16 %v1616, %v1613
        %v1695 = vpack.c.bf16 %v1617, %v1614
        %v1696 = vpack.c.bf16 %v1618, %v1615
        %v1697 = vpack.c.bf16 %v1622, %v1619
        %v1698 = vpack.c.bf16 %v1623, %v1620
        %v1699 = vpack.c.bf16 %v1624, %v1621
        %v1700 = vpack.c.bf16 %v1628, %v1625
        %v1701 = vpack.c.bf16 %v1629, %v1626
        %v1702 = vpack.c.bf16 %v1630, %v1627
        %v1703 = vpack.c.bf16 %v1634, %v1631
        %v1704 = vpack.c.bf16 %v1635, %v1632
        %v1705 = vpack.c.bf16 %v1636, %v1633
        %v1706 = vpack.c.bf16 %v1640, %v1637
        %v1707 = vpack.c.bf16 %v1641, %v1638
        %v1708 = vpack.c.bf16 %v1642, %v1639
        %v1709 = vpack.c.bf16 %v1646, %v1643
        %v1710 = vpack.c.bf16 %v1647, %v1644
        %v1711 = vpack.c.bf16 %v1648, %v1645
        %v1712 = vpack.c.bf16 %v1652, %v1649
        %v1713 = vpack.c.bf16 %v1653, %v1650
        %v1714 = vpack.c.bf16 %v1654, %v1651
        %v1715 = vpack.c.bf16 %v1658, %v1655
        %v1716 = vpack.c.bf16 %v1659, %v1656
        %v1717 = vpack.c.bf16 %v1660, %v1657
        %v1718 = vpack.c.bf16 %v1664, %v1661
        %v1719 = vpack.c.bf16 %v1665, %v1662
        %v1720 = vpack.c.bf16 %v1666, %v1663
        %v1721 = vpack.c.bf16 %v1670, %v1667
        %v1722 = vpack.c.bf16 %v1671, %v1668
        %v1723 = vpack.c.bf16 %v1672, %v1669
        %v1724 = vpack.c.bf16 %v1676, %v1673
        %v1725 = vpack.c.bf16 %v1677, %v1674
        %v1726 = vpack.c.bf16 %v1678, %v1675
        %v1763 = vunpack.c.l.b16 %v379
        %v1764 = vunpack.c.l.b16 %v380
        %v1765 = vunpack.c.l.b16 %v381
        %v1766 = vunpack.c.l.b16 %v382
        %v1767 = vunpack.c.l.b16 %v383
        %v1768 = vunpack.c.l.b16 %v384
        %v1769 = vunpack.c.l.b16 %v385
        %v1770 = vunpack.c.l.b16 %v386
        %v1771 = vunpack.c.l.b16 %v387
        %v1772 = vunpack.c.l.b16 %v388
        %v1773 = vunpack.c.l.b16 %v389
        %v1774 = vunpack.c.l.b16 %v390
        %v1775 = vunpack.c.l.b16 %v391
        %v1776 = vunpack.c.l.b16 %v392
        %v1777 = vunpack.c.l.b16 %v393
        %v1778 = vunpack.c.l.b16 %v394
        %v1779 = vunpack.c.l.b16 %v395
        %v1780 = vunpack.c.l.b16 %v396
        %v1781 = vunpack.c.l.b16 %v397
        %v1782 = vunpack.c.l.b16 %v398
        %v1783 = vunpack.c.l.b16 %v399
        %v1784 = vunpack.c.l.b16 %v400
        %v1785 = vunpack.c.l.b16 %v401
        %v1786 = vunpack.c.l.b16 %v402
        %v1787 = vunpack.c.l.b16 %v403
        %v1788 = vunpack.c.l.b16 %v404
        %v1789 = vunpack.c.l.b16 %v405
        %v1790 = vunpack.c.l.b16 %v406
        %v1791 = vunpack.c.l.b16 %v407
        %v1792 = vunpack.c.l.b16 %v408
        %v1793 = vunpack.c.l.b16 %v409
        %v1794 = vunpack.c.l.b16 %v410
        %v1795 = vunpack.c.l.b16 %v411
        %v1796 = vunpack.c.l.b16 %v412
        %v1797 = vunpack.c.l.b16 %v413
        %v1798 = vunpack.c.l.b16 %v414
        %v1799 = vpack.c.b16 %v1764, %v1763
        %v1800 = vpack.c.b16 %v1766, %v1765
        %v1801 = vpack.c.b16 %v1768, %v1767
        %v1802 = vpack.c.b16 %v1770, %v1769
        %v1803 = vpack.c.b16 %v1772, %v1771
        %v1804 = vpack.c.b16 %v1774, %v1773
        %v1805 = vpack.c.b16 %v1776, %v1775
        %v1806 = vpack.c.b16 %v1778, %v1777
        %v1807 = vpack.c.b16 %v1780, %v1779
        %v1808 = vpack.c.b16 %v1782, %v1781
        %v1809 = vpack.c.b16 %v1784, %v1783
        %v1810 = vpack.c.b16 %v1786, %v1785
        %v1811 = vpack.c.b16 %v1788, %v1787
        %v1812 = vpack.c.b16 %v1790, %v1789
        %v1813 = vpack.c.b16 %v1792, %v1791
        %v1814 = vpack.c.b16 %v1794, %v1793
        %v1815 = vpack.c.b16 %v1796, %v1795
        %v1816 = vpack.c.b16 %v1798, %v1797
        %v1836 = vsel %vm415, %v1681, 0
        %v1839 = vsel %vm415, %v1684, 0
        %v1842 = vsel %vm415, %v1687, 0
        %v1845 = vsel %vm415, %v1690, 0
        %v1848 = vsel %vm415, %v1693, 0
        %v1851 = vsel %vm415, %v1696, 0
        %v1854 = vsel %vm415, %v1699, 0
        %v1857 = vsel %vm415, %v1702, 0
        %v1860 = vsel %vm415, %v1705, 0
        %v1863 = vsel %vm415, %v1708, 0
        %v1866 = vsel %vm415, %v1711, 0
        %v1869 = vsel %vm415, %v1714, 0
        %v1872 = vsel %vm415, %v1717, 0
        %v1875 = vsel %vm415, %v1720, 0
        %v1878 = vsel %vm415, %v1723, 0
        %v1881 = vsel %vm415, %v1726, 0
        %1883 = vmatprep.subr.bf16.mxu0 0
        %1884 = vmatpush1.bf16.msra.mxu0 %v1799
        %1885 = vmatprep.subr.bf16.mxu0 0
        %1886 = vmatpush1.bf16.msra.mxu0 %v1800
        %1887 = vmatprep.subr.bf16.mxu0 0
        %1888 = vmatpush1.bf16.msra.mxu0 %v1801
        %1889 = vmatprep.subr.bf16.mxu0 0
        %1890 = vmatpush1.bf16.msra.mxu0 %v1802
        %1891 = vmatprep.subr.bf16.mxu0 0
        %1892 = vmatpush1.bf16.msra.mxu0 %v1803
        %1893 = vmatprep.subr.bf16.mxu0 0
        %1894 = vmatpush1.bf16.msra.mxu0 %v1804
        %1895 = vmatprep.subr.bf16.mxu0 0
        %1896 = vmatpush1.bf16.msra.mxu0 %v1805
        %1897 = vmatprep.subr.bf16.mxu0 0
        %1898 = vmatpush1.bf16.msra.mxu0 %v1806
        %1899 = vmatprep.subr.bf16.mxu0 0
        %1900 = vmatpush1.bf16.msra.mxu0 %v1807
        %1901 = vmatprep.subr.bf16.mxu0 0
        %1902 = vmatpush1.bf16.msra.mxu0 %v1808
        %1903 = vmatprep.subr.bf16.mxu0 0
        %1904 = vmatpush1.bf16.msra.mxu0 %v1809
        %1905 = vmatprep.subr.bf16.mxu0 0
        %1906 = vmatpush1.bf16.msra.mxu0 %v1810
        %1907 = vmatprep.subr.bf16.mxu0 0
        %1908 = vmatpush1.bf16.msra.mxu0 %v1811
        %1909 = vmatprep.subr.bf16.mxu0 0
        %1910 = vmatpush1.bf16.msra.mxu0 %v1812
        %1911 = vmatprep.subr.bf16.mxu0 0
        %1912 = vmatpush1.bf16.msra.mxu0 %v1813
        %1913 = vmatprep.subr.bf16.mxu0 0
        %1914 = vmatpush1.bf16.msra.mxu0 %v1814
        %1915 = vmatprep.mubr.bf16.mxu0 %v1680
        %1916 = vmatmul.mubr.bf16.gmra.mrb[0].mxu0 %v1679
        %v1917 = vpop.f32.mrb[0].mxu0
        %v1918 = vadd.f32 0.0, %v1917
        %v1919 = vpop.f32.mrb[0].mxu0
        %v1920 = vpop.f32.mrb[0].mxu0
        %v1921 = vadd.f32 0.0, %v1920
        %v1922 = vpop.f32.mrb[0].mxu0
        %1923 = vmatprep.mubr.bf16.mxu0 %v1683
        %1924 = vmatmul.mubr.bf16.gmra.mrb[0].mxu0 %v1682
        %v1925 = vpop.f32.mrb[0].mxu0
        %v1926 = vadd.f32 0.0, %v1925
        %v1927 = vpop.f32.mrb[0].mxu0
        %v1928 = vpop.f32.mrb[0].mxu0
        %v1929 = vadd.f32 0.0, %v1928
        %v1930 = vpop.f32.mrb[0].mxu0
        %1931 = vmatprep.mubr.bf16.mxu0 %v1686
        %1932 = vmatmul.mubr.bf16.gmra.mrb[0].mxu0 %v1685
        %v1933 = vpop.f32.mrb[0].mxu0
        %v1934 = vadd.f32 0.0, %v1933
        %v1935 = vpop.f32.mrb[0].mxu0
        %v1936 = vpop.f32.mrb[0].mxu0
        %v1937 = vadd.f32 0.0, %v1936
        %v1938 = vpop.f32.mrb[0].mxu0
        %1939 = vmatprep.mubr.bf16.mxu0 %v1689
        %1940 = vmatmul.mubr.bf16.gmra.mrb[0].mxu0 %v1688
        %v1941 = vpop.f32.mrb[0].mxu0
        %v1942 = vadd.f32 0.0, %v1941
        %v1943 = vpop.f32.mrb[0].mxu0
        %v1944 = vpop.f32.mrb[0].mxu0
        %v1945 = vadd.f32 0.0, %v1944
        %v1946 = vpop.f32.mrb[0].mxu0
        %1947 = vmatprep.mubr.bf16.mxu0 %v1692
        %1948 = vmatmul.mubr.bf16.gmra.mrb[0].mxu0 %v1691
        %v1949 = vpop.f32.mrb[0].mxu0
        %v1950 = vadd.f32 0.0, %v1949
        %v1951 = vpop.f32.mrb[0].mxu0
        %v1952 = vpop.f32.mrb[0].mxu0
        %v1953 = vadd.f32 0.0, %v1952
        %v1954 = vpop.f32.mrb[0].mxu0
        %1955 = vmatprep.mubr.bf16.mxu0 %v1695
        %1956 = vmatmul.mubr.bf16.gmra.mrb[0].mxu0 %v1694
        %v1957 = vpop.f32.mrb[0].mxu0
        %v1958 = vadd.f32 0.0, %v1957
        %v1959 = vpop.f32.mrb[0].mxu0
        %v1960 = vpop.f32.mrb[0].mxu0
        %v1961 = vadd.f32 0.0, %v1960
        %v1962 = vpop.f32.mrb[0].mxu0
        %1963 = vmatprep.mubr.bf16.mxu0 %v1698
        %1964 = vmatmul.mubr.bf16.gmra.mrb[0].mxu0 %v1697
        %v1965 = vpop.f32.mrb[0].mxu0
        %v1966 = vadd.f32 0.0, %v1965
        %v1967 = vpop.f32.mrb[0].mxu0
        %v1968 = vpop.f32.mrb[0].mxu0
        %v1969 = vadd.f32 0.0, %v1968
        %v1970 = vpop.f32.mrb[0].mxu0
        %1971 = vmatprep.mubr.bf16.mxu0 %v1701
        %1972 = vmatmul.mubr.bf16.gmra.mrb[0].mxu0 %v1700
        %v1973 = vpop.f32.mrb[0].mxu0
        %v1974 = vadd.f32 0.0, %v1973
        %v1975 = vpop.f32.mrb[0].mxu0
        %v1976 = vpop.f32.mrb[0].mxu0
        %v1977 = vadd.f32 0.0, %v1976
        %v1978 = vpop.f32.mrb[0].mxu0
        %1979 = vmatprep.mubr.bf16.mxu0 %v1704
        %1980 = vmatmul.mubr.bf16.gmra.mrb[0].mxu0 %v1703
        %v1981 = vpop.f32.mrb[0].mxu0
        %v1982 = vadd.f32 0.0, %v1981
        %v1983 = vpop.f32.mrb[0].mxu0
        %v1984 = vpop.f32.mrb[0].mxu0
        %v1985 = vadd.f32 0.0, %v1984
        %v1986 = vpop.f32.mrb[0].mxu0
        %1987 = vmatprep.mubr.bf16.mxu0 %v1707
        %1988 = vmatmul.mubr.bf16.gmra.mrb[0].mxu0 %v1706
        %v1989 = vpop.f32.mrb[0].mxu0
        %v1990 = vadd.f32 0.0, %v1989
        %v1991 = vpop.f32.mrb[0].mxu0
        %v1992 = vpop.f32.mrb[0].mxu0
        %v1993 = vadd.f32 0.0, %v1992
        %v1994 = vpop.f32.mrb[0].mxu0
        %1995 = vmatprep.mubr.bf16.mxu0 %v1710
        %1996 = vmatmul.mubr.bf16.gmra.mrb[0].mxu0 %v1709
        %v1997 = vpop.f32.mrb[0].mxu0
        %v1998 = vadd.f32 0.0, %v1997
        %v1999 = vpop.f32.mrb[0].mxu0
        %v2000 = vpop.f32.mrb[0].mxu0
        %v2001 = vadd.f32 0.0, %v2000
        %v2002 = vpop.f32.mrb[0].mxu0
        %2003 = vmatprep.mubr.bf16.mxu0 %v1713
        %2004 = vmatmul.mubr.bf16.gmra.mrb[0].mxu0 %v1712
        %v2005 = vpop.f32.mrb[0].mxu0
        %v2006 = vadd.f32 0.0, %v2005
        %v2007 = vpop.f32.mrb[0].mxu0
        %v2008 = vpop.f32.mrb[0].mxu0
        %v2009 = vadd.f32 0.0, %v2008
        %v2010 = vpop.f32.mrb[0].mxu0
        %2011 = vmatprep.mubr.bf16.mxu0 %v1716
        %2012 = vmatmul.mubr.bf16.gmra.mrb[0].mxu0 %v1715
        %v2013 = vpop.f32.mrb[0].mxu0
        %v2014 = vadd.f32 0.0, %v2013
        %v2015 = vpop.f32.mrb[0].mxu0
        %v2016 = vpop.f32.mrb[0].mxu0
        %v2017 = vadd.f32 0.0, %v2016
        %v2018 = vpop.f32.mrb[0].mxu0
        %2019 = vmatprep.mubr.bf16.mxu0 %v1719
        %2020 = vmatmul.mubr.bf16.gmra.mrb[0].mxu0 %v1718
        %v2021 = vpop.f32.mrb[0].mxu0
        %v2022 = vadd.f32 0.0, %v2021
        %v2023 = vpop.f32.mrb[0].mxu0
        %v2024 = vpop.f32.mrb[0].mxu0
        %v2025 = vadd.f32 0.0, %v2024
        %v2026 = vpop.f32.mrb[0].mxu0
        %2027 = vmatprep.mubr.bf16.mxu0 %v1722
        %2028 = vmatmul.mubr.bf16.gmra.mrb[0].mxu0 %v1721
        %v2029 = vpop.f32.mrb[0].mxu0
        %v2030 = vadd.f32 0.0, %v2029
        %v2031 = vpop.f32.mrb[0].mxu0
        %v2032 = vpop.f32.mrb[0].mxu0
        %v2033 = vadd.f32 0.0, %v2032
        %v2034 = vpop.f32.mrb[0].mxu0
        %2035 = vmatprep.mubr.bf16.mxu0 %v1725
        %2036 = vmatmul.mubr.bf16.gmra.mrb[0].mxu0 %v1724
        %v2037 = vpop.f32.mrb[0].mxu0
        %v2038 = vadd.f32 0.0, %v2037
        %v2039 = vpop.f32.mrb[0].mxu0
        %v2040 = vpop.f32.mrb[0].mxu0
        %v2041 = vadd.f32 0.0, %v2040
        %v2042 = vpop.f32.mrb[0].mxu0
        %2043 = vdwg.mxu0
        %2044 = vmatprep.subr.bf16.mxu0 0
        %2045 = vmatpush1.bf16.msra.mxu0 %v1815
        %2046 = vmatprep.subr.bf16.mxu0 0
        %2047 = vmatpush1.bf16.msra.mxu0 %v1816
        %2048 = vmatprep.subr.bf16.mxu0 0
        %2049 = vmatpush1.bf16.msra.mxu0 0
        %2050 = vmatprep.subr.bf16.mxu0 0
        %2051 = vmatpush1.bf16.msra.mxu0 0
        %2052 = vmatprep.subr.bf16.mxu0 0
        %2053 = vmatpush1.bf16.msra.mxu0 0
        %2054 = vmatprep.subr.bf16.mxu0 0
        %2055 = vmatpush1.bf16.msra.mxu0 0
        %2056 = vmatprep.subr.bf16.mxu0 0
        %2057 = vmatpush1.bf16.msra.mxu0 0
        %2058 = vmatprep.subr.bf16.mxu0 0
        %2059 = vmatpush1.bf16.msra.mxu0 0
        %2060 = vmatprep.subr.bf16.mxu0 0
        %2061 = vmatpush1.bf16.msra.mxu0 0
        %2062 = vmatprep.subr.bf16.mxu0 0
        %2063 = vmatpush1.bf16.msra.mxu0 0
        %2064 = vmatprep.subr.bf16.mxu0 0
        %2065 = vmatpush1.bf16.msra.mxu0 0
        %2066 = vmatprep.subr.bf16.mxu0 0
        %2067 = vmatpush1.bf16.msra.mxu0 0
        %2068 = vmatprep.subr.bf16.mxu0 0
        %2069 = vmatpush1.bf16.msra.mxu0 0
        %2070 = vmatprep.subr.bf16.mxu0 0
        %2071 = vmatpush1.bf16.msra.mxu0 0
        %2072 = vmatprep.subr.bf16.mxu0 0
        %2073 = vmatpush1.bf16.msra.mxu0 0
        %2074 = vmatprep.subr.bf16.mxu0 0
        %2075 = vmatpush1.bf16.msra.mxu0 0
        %2076 = vmatprep.mubr.bf16.mxu0 0
        %2077 = vmatmul.mubr.bf16.gmra.mrb[0].mxu0 %v1836
        %v2078 = vpop.f32.mrb[0].mxu0
        %v2079 = vadd.f32 %v1918, %v2078
        %v2080 = vpop.f32.mrb[0].mxu0
        %v2081 = vpop.f32.mrb[0].mxu0
        %v2082 = vadd.f32 %v1921, %v2081
        %v2083 = vpop.f32.mrb[0].mxu0
        %2084 = vmatprep.mubr.bf16.mxu0 0
        %2085 = vmatmul.mubr.bf16.gmra.mrb[0].mxu0 %v1839
        %v2086 = vpop.f32.mrb[0].mxu0
        %v2087 = vadd.f32 %v1926, %v2086
        %v2088 = vpop.f32.mrb[0].mxu0
        %v2089 = vpop.f32.mrb[0].mxu0
        %v2090 = vadd.f32 %v1929, %v2089
        %v2091 = vpop.f32.mrb[0].mxu0
        %2092 = vmatprep.mubr.bf16.mxu0 0
        %2093 = vmatmul.mubr.bf16.gmra.mrb[0].mxu0 %v1842
        %v2094 = vpop.f32.mrb[0].mxu0
        %v2095 = vadd.f32 %v1934, %v2094
        %v2096 = vpop.f32.mrb[0].mxu0
        %v2097 = vpop.f32.mrb[0].mxu0
        %v2098 = vadd.f32 %v1937, %v2097
        %v2099 = vpop.f32.mrb[0].mxu0
        %2100 = vmatprep.mubr.bf16.mxu0 0
        %2101 = vmatmul.mubr.bf16.gmra.mrb[0].mxu0 %v1845
        %v2102 = vpop.f32.mrb[0].mxu0
        %v2103 = vadd.f32 %v1942, %v2102
        %v2104 = vpop.f32.mrb[0].mxu0
        %v2105 = vpop.f32.mrb[0].mxu0
        %v2106 = vadd.f32 %v1945, %v2105
        %v2107 = vpop.f32.mrb[0].mxu0
        %2108 = vmatprep.mubr.bf16.mxu0 0
        %2109 = vmatmul.mubr.bf16.gmra.mrb[0].mxu0 %v1848
        %v2110 = vpop.f32.mrb[0].mxu0
        %v2111 = vadd.f32 %v1950, %v2110
        %v2112 = vpop.f32.mrb[0].mxu0
        %v2113 = vpop.f32.mrb[0].mxu0
        %v2114 = vadd.f32 %v1953, %v2113
        %v2115 = vpop.f32.mrb[0].mxu0
        %2116 = vmatprep.mubr.bf16.mxu0 0
        %2117 = vmatmul.mubr.bf16.gmra.mrb[0].mxu0 %v1851
        %v2118 = vpop.f32.mrb[0].mxu0
        %v2119 = vadd.f32 %v1958, %v2118
        %v2120 = vpop.f32.mrb[0].mxu0
        %v2121 = vpop.f32.mrb[0].mxu0
        %v2122 = vadd.f32 %v1961, %v2121
        %v2123 = vpop.f32.mrb[0].mxu0
        %2124 = vmatprep.mubr.bf16.mxu0 0
        %2125 = vmatmul.mubr.bf16.gmra.mrb[0].mxu0 %v1854
        %v2126 = vpop.f32.mrb[0].mxu0
        %v2127 = vadd.f32 %v1966, %v2126
        %v2128 = vpop.f32.mrb[0].mxu0
        %v2129 = vpop.f32.mrb[0].mxu0
        %v2130 = vadd.f32 %v1969, %v2129
        %v2131 = vpop.f32.mrb[0].mxu0
        %2132 = vmatprep.mubr.bf16.mxu0 0
        %2133 = vmatmul.mubr.bf16.gmra.mrb[0].mxu0 %v1857
        %v2134 = vpop.f32.mrb[0].mxu0
        %v2135 = vadd.f32 %v1974, %v2134
        %v2136 = vpop.f32.mrb[0].mxu0
        %v2137 = vpop.f32.mrb[0].mxu0
        %v2138 = vadd.f32 %v1977, %v2137
        %v2139 = vpop.f32.mrb[0].mxu0
        %2140 = vmatprep.mubr.bf16.mxu0 0
        %2141 = vmatmul.mubr.bf16.gmra.mrb[0].mxu0 %v1860
        %v2142 = vpop.f32.mrb[0].mxu0
        %v2143 = vadd.f32 %v1982, %v2142
        %v2144 = vpop.f32.mrb[0].mxu0
        %v2145 = vpop.f32.mrb[0].mxu0
        %v2146 = vadd.f32 %v1985, %v2145
        %v2147 = vpop.f32.mrb[0].mxu0
        %2148 = vmatprep.mubr.bf16.mxu0 0
        %2149 = vmatmul.mubr.bf16.gmra.mrb[0].mxu0 %v1863
        %v2150 = vpop.f32.mrb[0].mxu0
        %v2151 = vadd.f32 %v1990, %v2150
        %v2152 = vpop.f32.mrb[0].mxu0
        %v2153 = vpop.f32.mrb[0].mxu0
        %v2154 = vadd.f32 %v1993, %v2153
        %v2155 = vpop.f32.mrb[0].mxu0
        %2156 = vmatprep.mubr.bf16.mxu0 0
        %2157 = vmatmul.mubr.bf16.gmra.mrb[0].mxu0 %v1866
        %v2158 = vpop.f32.mrb[0].mxu0
        %v2159 = vadd.f32 %v1998, %v2158
        %v2160 = vpop.f32.mrb[0].mxu0
        %v2161 = vpop.f32.mrb[0].mxu0
        %v2162 = vadd.f32 %v2001, %v2161
        %v2163 = vpop.f32.mrb[0].mxu0
        %2164 = vmatprep.mubr.bf16.mxu0 0
        %2165 = vmatmul.mubr.bf16.gmra.mrb[0].mxu0 %v1869
        %v2166 = vpop.f32.mrb[0].mxu0
        %v2167 = vadd.f32 %v2006, %v2166
        %v2168 = vpop.f32.mrb[0].mxu0
        %v2169 = vpop.f32.mrb[0].mxu0
        %v2170 = vadd.f32 %v2009, %v2169
        %v2171 = vpop.f32.mrb[0].mxu0
        %2172 = vmatprep.mubr.bf16.mxu0 0
        %2173 = vmatmul.mubr.bf16.gmra.mrb[0].mxu0 %v1872
        %v2174 = vpop.f32.mrb[0].mxu0
        %v2175 = vadd.f32 %v2014, %v2174
        %v2176 = vpop.f32.mrb[0].mxu0
        %v2177 = vpop.f32.mrb[0].mxu0
        %v2178 = vadd.f32 %v2017, %v2177
        %v2179 = vpop.f32.mrb[0].mxu0
        %2180 = vmatprep.mubr.bf16.mxu0 0
        %2181 = vmatmul.mubr.bf16.gmra.mrb[0].mxu0 %v1875
        %v2182 = vpop.f32.mrb[0].mxu0
        %v2183 = vadd.f32 %v2022, %v2182
        %v2184 = vpop.f32.mrb[0].mxu0
        %v2185 = vpop.f32.mrb[0].mxu0
        %v2186 = vadd.f32 %v2025, %v2185
        %v2187 = vpop.f32.mrb[0].mxu0
        %2188 = vmatprep.mubr.bf16.mxu0 0
        %2189 = vmatmul.mubr.bf16.gmra.mrb[0].mxu0 %v1878
        %v2190 = vpop.f32.mrb[0].mxu0
        %v2191 = vadd.f32 %v2030, %v2190
        %v2192 = vpop.f32.mrb[0].mxu0
        %v2193 = vpop.f32.mrb[0].mxu0
        %v2194 = vadd.f32 %v2033, %v2193
        %v2195 = vpop.f32.mrb[0].mxu0
        %2196 = vmatprep.mubr.bf16.mxu0 0
        %2197 = vmatmul.mubr.bf16.gmra.mrb[0].mxu0 %v1881
        %v2198 = vpop.f32.mrb[0].mxu0
        %v2199 = vadd.f32 %v2038, %v2198
        %v2200 = vpop.f32.mrb[0].mxu0
        %v2201 = vpop.f32.mrb[0].mxu0
        %v2202 = vadd.f32 %v2041, %v2201
        %v2203 = vpop.f32.mrb[0].mxu0
        %2204 = vdwg.mxu0
        %v2205 = vld [vmem:[%s4] sm:$0x1]
        %v2206 = vld [vmem:[%s5] sm:$0x1]
        %v2207 = vsel %vm415, %v2079, 0.0
        %v2208 = vsel %vm415, %v2082, 0.0
        %v2209 = vadd.f32 %v2207, %v2208
        %v2210 = vsel %vm415, %v2087, 0.0
        %v2211 = vadd.f32 %v2209, %v2210
        %v2212 = vsel %vm415, %v2090, 0.0
        %v2213 = vadd.f32 %v2211, %v2212
        %v2214 = vsel %vm415, %v2095, 0.0
        %v2215 = vadd.f32 %v2213, %v2214
        %v2216 = vsel %vm415, %v2098, 0.0
        %v2217 = vadd.f32 %v2215, %v2216
        %v2218 = vsel %vm415, %v2103, 0.0
        %v2219 = vadd.f32 %v2217, %v2218
        %v2220 = vsel %vm415, %v2106, 0.0
        %v2221 = vadd.f32 %v2219, %v2220
        %v2222 = vsel %vm415, %v2111, 0.0
        %v2223 = vadd.f32 %v2221, %v2222
        %v2224 = vsel %vm415, %v2114, 0.0
        %v2225 = vadd.f32 %v2223, %v2224
        %v2226 = vsel %vm415, %v2119, 0.0
        %v2227 = vadd.f32 %v2225, %v2226
        %v2228 = vsel %vm415, %v2122, 0.0
        %v2229 = vadd.f32 %v2227, %v2228
        %v2230 = vsel %vm415, %v2127, 0.0
        %v2231 = vadd.f32 %v2229, %v2230
        %v2232 = vsel %vm415, %v2130, 0.0
        %v2233 = vadd.f32 %v2231, %v2232
        %v2234 = vsel %vm415, %v2135, 0.0
        %v2235 = vadd.f32 %v2233, %v2234
        %v2236 = vsel %vm415, %v2138, 0.0
        %v2237 = vadd.f32 %v2235, %v2236
        %v2238 = vsel %vm415, %v2143, 0.0
        %v2239 = vadd.f32 %v2237, %v2238
        %v2240 = vsel %vm415, %v2146, 0.0
        %v2241 = vadd.f32 %v2239, %v2240
        %v2242 = vsel %vm415, %v2151, 0.0
        %v2243 = vadd.f32 %v2241, %v2242
        %v2244 = vsel %vm415, %v2154, 0.0
        %v2245 = vadd.f32 %v2243, %v2244
        %v2246 = vsel %vm415, %v2159, 0.0
        %v2247 = vadd.f32 %v2245, %v2246
        %v2248 = vsel %vm415, %v2162, 0.0
        %v2249 = vadd.f32 %v2247, %v2248
        %v2250 = vsel %vm415, %v2167, 0.0
        %v2251 = vadd.f32 %v2249, %v2250
        %v2252 = vsel %vm415, %v2170, 0.0
        %v2253 = vadd.f32 %v2251, %v2252
        %v2254 = vsel %vm415, %v2175, 0.0
        %v2255 = vadd.f32 %v2253, %v2254
        %v2256 = vsel %vm415, %v2178, 0.0
        %v2257 = vadd.f32 %v2255, %v2256
        %v2258 = vsel %vm415, %v2183, 0.0
        %v2259 = vadd.f32 %v2257, %v2258
        %v2260 = vsel %vm415, %v2186, 0.0
        %v2261 = vadd.f32 %v2259, %v2260
        %v2262 = vsel %vm415, %v2191, 0.0
        %v2263 = vadd.f32 %v2261, %v2262
        %v2264 = vsel %vm415, %v2194, 0.0
        %v2265 = vadd.f32 %v2263, %v2264
        %v2266 = vsel %vm415, %v2199, 0.0
        %v2267 = vadd.f32 %v2265, %v2266
        %v2268 = vsel %vm415, %v2202, 0.0
        %v2269 = vadd.f32 %v2267, %v2268
        %v2270 = vrot.slane %v2269, 4
        %v2271 = vadd.f32 %v2269, %v2270
        %v2272 = vrot.slane %v2271, 2
        %v2273 = vadd.f32 %v2271, %v2272
        %v2274 = vrot.slane %v2273, 1
        %v2275 = vadd.f32 %v2273, %v2274
        %v2276 = vmul.f32 %v2079, %v2079
        %v2277 = vmul.f32 %v2082, %v2082
        %v2278 = vmul.f32 %v2087, %v2087
        %v2279 = vmul.f32 %v2090, %v2090
        %v2280 = vmul.f32 %v2095, %v2095
        %v2281 = vmul.f32 %v2098, %v2098
        %v2282 = vmul.f32 %v2103, %v2103
        %v2283 = vmul.f32 %v2106, %v2106
        %v2284 = vmul.f32 %v2111, %v2111
        %v2285 = vmul.f32 %v2114, %v2114
        %v2286 = vmul.f32 %v2119, %v2119
        %v2287 = vmul.f32 %v2122, %v2122
        %v2288 = vmul.f32 %v2127, %v2127
        %v2289 = vmul.f32 %v2130, %v2130
        %v2290 = vmul.f32 %v2135, %v2135
        %v2291 = vmul.f32 %v2138, %v2138
        %v2292 = vmul.f32 %v2143, %v2143
        %v2293 = vmul.f32 %v2146, %v2146
        %v2294 = vmul.f32 %v2151, %v2151
        %v2295 = vmul.f32 %v2154, %v2154
        %v2296 = vmul.f32 %v2159, %v2159
        %v2297 = vmul.f32 %v2162, %v2162
        %v2298 = vmul.f32 %v2167, %v2167
        %v2299 = vmul.f32 %v2170, %v2170
        %v2300 = vmul.f32 %v2175, %v2175
        %v2301 = vmul.f32 %v2178, %v2178
        %v2302 = vmul.f32 %v2183, %v2183
        %v2303 = vmul.f32 %v2186, %v2186
        %v2304 = vmul.f32 %v2191, %v2191
        %v2305 = vmul.f32 %v2194, %v2194
        %v2306 = vmul.f32 %v2199, %v2199
        %v2307 = vmul.f32 %v2202, %v2202
        %v2308 = vsel %vm415, %v2276, 0.0
        %v2309 = vsel %vm415, %v2277, 0.0
        %v2310 = vadd.f32 %v2308, %v2309
        %v2311 = vsel %vm415, %v2278, 0.0
        %v2312 = vadd.f32 %v2310, %v2311
        %v2313 = vsel %vm415, %v2279, 0.0
        %v2314 = vadd.f32 %v2312, %v2313
        %v2315 = vsel %vm415, %v2280, 0.0
        %v2316 = vadd.f32 %v2314, %v2315
        %v2317 = vsel %vm415, %v2281, 0.0
        %v2318 = vadd.f32 %v2316, %v2317
        %v2319 = vsel %vm415, %v2282, 0.0
        %v2320 = vadd.f32 %v2318, %v2319
        %v2321 = vsel %vm415, %v2283, 0.0
        %v2322 = vadd.f32 %v2320, %v2321
        %v2323 = vsel %vm415, %v2284, 0.0
        %v2324 = vadd.f32 %v2322, %v2323
        %v2325 = vsel %vm415, %v2285, 0.0
        %v2326 = vadd.f32 %v2324, %v2325
        %v2327 = vsel %vm415, %v2286, 0.0
        %v2328 = vadd.f32 %v2326, %v2327
        %v2329 = vsel %vm415, %v2287, 0.0
        %v2330 = vadd.f32 %v2328, %v2329
        %v2331 = vsel %vm415, %v2288, 0.0
        %v2332 = vadd.f32 %v2330, %v2331
        %v2333 = vsel %vm415, %v2289, 0.0
        %v2334 = vadd.f32 %v2332, %v2333
        %v2335 = vsel %vm415, %v2290, 0.0
        %v2336 = vadd.f32 %v2334, %v2335
        %v2337 = vsel %vm415, %v2291, 0.0
        %v2338 = vadd.f32 %v2336, %v2337
        %v2339 = vsel %vm415, %v2292, 0.0
        %v2340 = vadd.f32 %v2338, %v2339
        %v2341 = vsel %vm415, %v2293, 0.0
        %v2342 = vadd.f32 %v2340, %v2341
        %v2343 = vsel %vm415, %v2294, 0.0
        %v2344 = vadd.f32 %v2342, %v2343
        %v2345 = vsel %vm415, %v2295, 0.0
        %v2346 = vadd.f32 %v2344, %v2345
        %v2347 = vsel %vm415, %v2296, 0.0
        %v2348 = vadd.f32 %v2346, %v2347
        %v2349 = vsel %vm415, %v2297, 0.0
        %v2350 = vadd.f32 %v2348, %v2349
        %v2351 = vsel %vm415, %v2298, 0.0
        %v2352 = vadd.f32 %v2350, %v2351
        %v2353 = vsel %vm415, %v2299, 0.0
        %v2354 = vadd.f32 %v2352, %v2353
        %v2355 = vsel %vm415, %v2300, 0.0
        %v2356 = vadd.f32 %v2354, %v2355
        %v2357 = vsel %vm415, %v2301, 0.0
        %v2358 = vadd.f32 %v2356, %v2357
        %v2359 = vsel %vm415, %v2302, 0.0
        %v2360 = vadd.f32 %v2358, %v2359
        %v2361 = vsel %vm415, %v2303, 0.0
        %v2362 = vadd.f32 %v2360, %v2361
        %v2363 = vsel %vm415, %v2304, 0.0
        %v2364 = vadd.f32 %v2362, %v2363
        %v2365 = vsel %vm415, %v2305, 0.0
        %v2366 = vadd.f32 %v2364, %v2365
        %v2367 = vsel %vm415, %v2306, 0.0
        %v2368 = vadd.f32 %v2366, %v2367
        %v2369 = vsel %vm415, %v2307, 0.0
        %v2370 = vadd.f32 %v2368, %v2369
        %v2371 = vrot.slane %v2370, 4
        %v2372 = vadd.f32 %v2370, %v2371
        %v2373 = vrot.slane %v2372, 2
        %v2374 = vadd.f32 %v2372, %v2373
        %v2375 = vrot.slane %v2374, 1
        %v2376 = vadd.f32 %v2374, %v2375
        %v2377 = vmul.f32 %v2275, 0.00390625
        %v2378 = vmul.f32 %v2376, 0.00390625
        %v2379 = vmul.f32 %v2377, %v2377
        %v2380 = vsub.f32 %v2378, %v2379
        %v2381 = vmax.f32 %v2380, 0.0
        %v2382 = vadd.f32 %v2381, 1e-05
        %v2383 = vrsqrt.pop %v2382
        %v2384 = vmul.f32 %v2205, %v2383
        %v2385 = vmul.f32 %v2377, %v2384
        %v2386 = vsub.f32 %v2206, %v2385
        %v2388 = vlaneseq
        %v2389 = vshrl.u32 %v2388, 7
        %v2390 = vsub.s32 0, %v2389
        %v2391 = vrot.slane %v2384, %v2390
        %v2393 = vmul.f32 %v2079, %v2391
        %v2394 = vmul.f32 %v2082, %v2391
        %v2395 = vmul.f32 %v2087, %v2391
        %v2396 = vmul.f32 %v2090, %v2391
        %v2397 = vmul.f32 %v2095, %v2391
        %v2398 = vmul.f32 %v2098, %v2391
        %v2399 = vmul.f32 %v2103, %v2391
        %v2400 = vmul.f32 %v2106, %v2391
        %v2401 = vmul.f32 %v2111, %v2391
        %v2402 = vmul.f32 %v2114, %v2391
        %v2403 = vmul.f32 %v2119, %v2391
        %v2404 = vmul.f32 %v2122, %v2391
        %v2405 = vmul.f32 %v2127, %v2391
        %v2406 = vmul.f32 %v2130, %v2391
        %v2407 = vmul.f32 %v2135, %v2391
        %v2408 = vmul.f32 %v2138, %v2391
        %v2409 = vmul.f32 %v2143, %v2391
        %v2410 = vmul.f32 %v2146, %v2391
        %v2411 = vmul.f32 %v2151, %v2391
        %v2412 = vmul.f32 %v2154, %v2391
        %v2413 = vmul.f32 %v2159, %v2391
        %v2414 = vmul.f32 %v2162, %v2391
        %v2415 = vmul.f32 %v2167, %v2391
        %v2416 = vmul.f32 %v2170, %v2391
        %v2417 = vmul.f32 %v2175, %v2391
        %v2418 = vmul.f32 %v2178, %v2391
        %v2419 = vmul.f32 %v2183, %v2391
        %v2420 = vmul.f32 %v2186, %v2391
        %v2421 = vmul.f32 %v2191, %v2391
        %v2422 = vmul.f32 %v2194, %v2391
        %v2423 = vmul.f32 %v2199, %v2391
        %v2424 = vmul.f32 %v2202, %v2391
        %v2426 = vlaneseq
        %v2427 = vshrl.u32 %v2426, 7
        %v2428 = vsub.s32 0, %v2427
        %v2429 = vrot.slane %v2386, %v2428
        %v2431 = vadd.f32 %v2393, %v2429
        %v2432 = vadd.f32 %v2394, %v2429
        %v2433 = vadd.f32 %v2395, %v2429
        %v2434 = vadd.f32 %v2396, %v2429
        %v2435 = vadd.f32 %v2397, %v2429
        %v2436 = vadd.f32 %v2398, %v2429
        %v2437 = vadd.f32 %v2399, %v2429
        %v2438 = vadd.f32 %v2400, %v2429
        %v2439 = vadd.f32 %v2401, %v2429
        %v2440 = vadd.f32 %v2402, %v2429
        %v2441 = vadd.f32 %v2403, %v2429
        %v2442 = vadd.f32 %v2404, %v2429
        %v2443 = vadd.f32 %v2405, %v2429
        %v2444 = vadd.f32 %v2406, %v2429
        %v2445 = vadd.f32 %v2407, %v2429
        %v2446 = vadd.f32 %v2408, %v2429
        %v2447 = vadd.f32 %v2409, %v2429
        %v2448 = vadd.f32 %v2410, %v2429
        %v2449 = vadd.f32 %v2411, %v2429
        %v2450 = vadd.f32 %v2412, %v2429
        %v2451 = vadd.f32 %v2413, %v2429
        %v2452 = vadd.f32 %v2414, %v2429
        %v2453 = vadd.f32 %v2415, %v2429
        %v2454 = vadd.f32 %v2416, %v2429
        %v2455 = vadd.f32 %v2417, %v2429
        %v2456 = vadd.f32 %v2418, %v2429
        %v2457 = vadd.f32 %v2419, %v2429
        %v2458 = vadd.f32 %v2420, %v2429
        %v2459 = vadd.f32 %v2421, %v2429
        %v2460 = vadd.f32 %v2422, %v2429
        %v2461 = vadd.f32 %v2423, %v2429
        %v2462 = vadd.f32 %v2424, %v2429
        %v2463 = vmax.f32 %v2431, 0.0
        %v2464 = vmax.f32 %v2432, 0.0
        %v2465 = vmax.f32 %v2433, 0.0
        %v2466 = vmax.f32 %v2434, 0.0
        %v2467 = vmax.f32 %v2435, 0.0
        %v2468 = vmax.f32 %v2436, 0.0
        %v2469 = vmax.f32 %v2437, 0.0
        %v2470 = vmax.f32 %v2438, 0.0
        %v2471 = vmax.f32 %v2439, 0.0
        %v2472 = vmax.f32 %v2440, 0.0
        %v2473 = vmax.f32 %v2441, 0.0
        %v2474 = vmax.f32 %v2442, 0.0
        %v2475 = vmax.f32 %v2443, 0.0
        %v2476 = vmax.f32 %v2444, 0.0
        %v2477 = vmax.f32 %v2445, 0.0
        %v2478 = vmax.f32 %v2446, 0.0
        %v2479 = vmax.f32 %v2447, 0.0
        %v2480 = vmax.f32 %v2448, 0.0
        %v2481 = vmax.f32 %v2449, 0.0
        %v2482 = vmax.f32 %v2450, 0.0
        %v2483 = vmax.f32 %v2451, 0.0
        %v2484 = vmax.f32 %v2452, 0.0
        %v2485 = vmax.f32 %v2453, 0.0
        %v2486 = vmax.f32 %v2454, 0.0
        %v2487 = vmax.f32 %v2455, 0.0
        %v2488 = vmax.f32 %v2456, 0.0
        %v2489 = vmax.f32 %v2457, 0.0
        %v2490 = vmax.f32 %v2458, 0.0
        %v2491 = vmax.f32 %v2459, 0.0
        %v2492 = vmax.f32 %v2460, 0.0
        %v2493 = vmax.f32 %v2461, 0.0
        %v2494 = vmax.f32 %v2462, 0.0
        %2495 = vst.msk [vmem:[#allocation2] sm:$0xff] %vm415, 0.0
        %2496 = vst.msk [vmem:[#allocation2 + $0x8] sm:$0xff] %vm415, 0.0
        %vm2497 = vcmask 254976
        %2498 = vst.msk [vmem:[#allocation2 + $0x10] sm:$0x3] %vm2497, 0.0
        %s2499 = scalar_lea.vmem [#allocation2], 408
        %2500 = vst.msk [vmem:[%s2499] sm:$0xff] %vm415, 0.0
        %2501 = vst.msk [vmem:[%s2499 + $0x8] sm:$0xff] %vm415, 0.0
        %2502 = vst.msk [vmem:[%s2499 + $0x10] sm:$0x3] %vm2497, 0.0
        %vm2503 = vcmask 253952
        %2504 = vst.msk [vmem:[#allocation2] sm:$0x1] %vm2503, 0.0
        %2505 = vst.msk [vmem:[#allocation2 + $0x18] sm:$0x1] %vm2503, 0.0
        %2506 = vst.msk [vmem:[#allocation2 + $0x30] sm:$0x1] %vm2503, 0.0
        %2507 = vst.msk [vmem:[#allocation2 + $0x48] sm:$0x1] %vm2503, 0.0
        %2508 = vst.msk [vmem:[#allocation2 + $0x60] sm:$0x1] %vm2503, 0.0
        %2509 = vst.msk [vmem:[#allocation2 + $0x78] sm:$0x1] %vm2503, 0.0
        %2510 = vst.msk [vmem:[#allocation2 + $0x90] sm:$0x1] %vm2503, 0.0
        %2511 = vst.msk [vmem:[#allocation2 + $0xa8] sm:$0x1] %vm2503, 0.0
        %2512 = vst.msk [vmem:[#allocation2 + $0xc0] sm:$0x1] %vm2503, 0.0
        %2513 = vst.msk [vmem:[#allocation2 + $0xd8] sm:$0x1] %vm2503, 0.0
        %2514 = vst.msk [vmem:[#allocation2 + $0xf0] sm:$0x1] %vm2503, 0.0
        %2515 = vst.msk [vmem:[#allocation2 + $0x108] sm:$0x1] %vm2503, 0.0
        %2516 = vst.msk [vmem:[#allocation2 + $0x120] sm:$0x1] %vm2503, 0.0
        %2517 = vst.msk [vmem:[#allocation2 + $0x138] sm:$0x1] %vm2503, 0.0
        %2518 = vst.msk [vmem:[#allocation2 + $0x150] sm:$0x1] %vm2503, 0.0
        %2519 = vst.msk [vmem:[#allocation2 + $0x168] sm:$0x1] %vm2503, 0.0
        %2520 = vst.msk [vmem:[#allocation2 + $0x180] sm:$0x1] %vm2503, 0.0
        %2521 = vst.msk [vmem:[#allocation2 + $0x198] sm:$0x1] %vm2503, 0.0
        %2522 = vst.msk [vmem:[#allocation2 + $0x11] sm:$0x1] %vm2503, 0.0
        %2523 = vst.msk [vmem:[#allocation2 + $0x29] sm:$0x1] %vm2503, 0.0
        %2524 = vst.msk [vmem:[#allocation2 + $0x41] sm:$0x1] %vm2503, 0.0
        %2525 = vst.msk [vmem:[#allocation2 + $0x59] sm:$0x1] %vm2503, 0.0
        %2526 = vst.msk [vmem:[#allocation2 + $0x71] sm:$0x1] %vm2503, 0.0
        %2527 = vst.msk [vmem:[#allocation2 + $0x89] sm:$0x1] %vm2503, 0.0
        %2528 = vst.msk [vmem:[#allocation2 + $0xa1] sm:$0x1] %vm2503, 0.0
        %2529 = vst.msk [vmem:[#allocation2 + $0xb9] sm:$0x1] %vm2503, 0.0
        %2530 = vst.msk [vmem:[#allocation2 + $0xd1] sm:$0x1] %vm2503, 0.0
        %2531 = vst.msk [vmem:[#allocation2 + $0xe9] sm:$0x1] %vm2503, 0.0
        %2532 = vst.msk [vmem:[#allocation2 + $0x101] sm:$0x1] %vm2503, 0.0
        %2533 = vst.msk [vmem:[#allocation2 + $0x119] sm:$0x1] %vm2503, 0.0
        %2534 = vst.msk [vmem:[#allocation2 + $0x131] sm:$0x1] %vm2503, 0.0
        %2535 = vst.msk [vmem:[#allocation2 + $0x149] sm:$0x1] %vm2503, 0.0
        %2536 = vst.msk [vmem:[#allocation2 + $0x161] sm:$0x1] %vm2503, 0.0
        %2537 = vst.msk [vmem:[#allocation2 + $0x179] sm:$0x1] %vm2503, 0.0
        %2538 = vst.msk [vmem:[#allocation2 + $0x191] sm:$0x1] %vm2503, 0.0
        %2539 = vst.msk [vmem:[#allocation2 + $0x1a9] sm:$0x1] %vm2503, 0.0
        %s2540 = scalar_lea.vmem [#allocation2], 24
        %2541 = vst.msk [vmem:[%s2540 + $0x1] sm:$0xff] %vm415, %v2463
        %2542 = vst.msk [vmem:[%s2540 + $0x9] sm:$0xff] %vm415, %v2464
        %2543 = vst.msk [vmem:[%s2540 + $0x19] sm:$0xff] %vm415, %v2465
        %2544 = vst.msk [vmem:[%s2540 + $0x21] sm:$0xff] %vm415, %v2466
        %2545 = vst.msk [vmem:[%s2540 + $0x31] sm:$0xff] %vm415, %v2467
        %2546 = vst.msk [vmem:[%s2540 + $0x39] sm:$0xff] %vm415, %v2468
        %2547 = vst.msk [vmem:[%s2540 + $0x49] sm:$0xff] %vm415, %v2469
        %2548 = vst.msk [vmem:[%s2540 + $0x51] sm:$0xff] %vm415, %v2470
        %2549 = vst.msk [vmem:[%s2540 + $0x61] sm:$0xff] %vm415, %v2471
        %2550 = vst.msk [vmem:[%s2540 + $0x69] sm:$0xff] %vm415, %v2472
        %2551 = vst.msk [vmem:[%s2540 + $0x79] sm:$0xff] %vm415, %v2473
        %2552 = vst.msk [vmem:[%s2540 + $0x81] sm:$0xff] %vm415, %v2474
        %2553 = vst.msk [vmem:[%s2540 + $0x91] sm:$0xff] %vm415, %v2475
        %2554 = vst.msk [vmem:[%s2540 + $0x99] sm:$0xff] %vm415, %v2476
        %2555 = vst.msk [vmem:[%s2540 + $0xa9] sm:$0xff] %vm415, %v2477
        %2556 = vst.msk [vmem:[%s2540 + $0xb1] sm:$0xff] %vm415, %v2478
        %2557 = vst.msk [vmem:[%s2540 + $0xc1] sm:$0xff] %vm415, %v2479
        %2558 = vst.msk [vmem:[%s2540 + $0xc9] sm:$0xff] %vm415, %v2480
        %2559 = vst.msk [vmem:[%s2540 + $0xd9] sm:$0xff] %vm415, %v2481
        %2560 = vst.msk [vmem:[%s2540 + $0xe1] sm:$0xff] %vm415, %v2482
        %2561 = vst.msk [vmem:[%s2540 + $0xf1] sm:$0xff] %vm415, %v2483
        %2562 = vst.msk [vmem:[%s2540 + $0xf9] sm:$0xff] %vm415, %v2484
        %2563 = vst.msk [vmem:[%s2540 + $0x109] sm:$0xff] %vm415, %v2485
        %2564 = vst.msk [vmem:[%s2540 + $0x111] sm:$0xff] %vm415, %v2486
        %2565 = vst.msk [vmem:[%s2540 + $0x121] sm:$0xff] %vm415, %v2487
        %2566 = vst.msk [vmem:[%s2540 + $0x129] sm:$0xff] %vm415, %v2488
        %2567 = vst.msk [vmem:[%s2540 + $0x139] sm:$0xff] %vm415, %v2489
        %2568 = vst.msk [vmem:[%s2540 + $0x141] sm:$0xff] %vm415, %v2490
        %2569 = vst.msk [vmem:[%s2540 + $0x151] sm:$0xff] %vm415, %v2491
        %2570 = vst.msk [vmem:[%s2540 + $0x159] sm:$0xff] %vm415, %v2492
        %2571 = vst.msk [vmem:[%s2540 + $0x169] sm:$0xff] %vm415, %v2493
        %2572 = vst.msk [vmem:[%s2540 + $0x171] sm:$0xff] %vm415, %v2494
        %v2573 = vld [vmem:[#allocation2] sm:$0xff]
        %v2574 = vld [vmem:[#allocation2 + $0x8] sm:$0xff]
        %v2575 = vld [vmem:[#allocation2 + $0x10] sm:$0x3]
        %v2576 = vld [vmem:[#allocation2 + $0x18] sm:$0xff]
        %v2577 = vld [vmem:[#allocation2 + $0x20] sm:$0xff]
        %v2578 = vld [vmem:[#allocation2 + $0x28] sm:$0x3]
        %v2579 = vld [vmem:[#allocation2 + $0x30] sm:$0xff]
        %v2580 = vld [vmem:[#allocation2 + $0x38] sm:$0xff]
        %v2581 = vld [vmem:[#allocation2 + $0x40] sm:$0x3]
        %v2582 = vld [vmem:[#allocation2 + $0x48] sm:$0xff]
        %v2583 = vld [vmem:[#allocation2 + $0x50] sm:$0xff]
        %v2584 = vld [vmem:[#allocation2 + $0x58] sm:$0x3]
        %v2585 = vld [vmem:[#allocation2 + $0x60] sm:$0xff]
        %v2586 = vld [vmem:[#allocation2 + $0x68] sm:$0xff]
        %v2587 = vld [vmem:[#allocation2 + $0x70] sm:$0x3]
        %v2588 = vld [vmem:[#allocation2 + $0x78] sm:$0xff]
        %v2589 = vld [vmem:[#allocation2 + $0x80] sm:$0xff]
        %v2590 = vld [vmem:[#allocation2 + $0x88] sm:$0x3]
        %v2591 = vld [vmem:[#allocation2 + $0x90] sm:$0xff]
        %v2592 = vld [vmem:[#allocation2 + $0x98] sm:$0xff]
        %v2593 = vld [vmem:[#allocation2 + $0xa0] sm:$0x3]
        %v2594 = vld [vmem:[#allocation2 + $0xa8] sm:$0xff]
        %v2595 = vld [vmem:[#allocation2 + $0xb0] sm:$0xff]
        %v2596 = vld [vmem:[#allocation2 + $0xb8] sm:$0x3]
        %v2597 = vld [vmem:[#allocation2 + $0xc0] sm:$0xff]
        %v2598 = vld [vmem:[#allocation2 + $0xc8] sm:$0xff]
        %v2599 = vld [vmem:[#allocation2 + $0xd0] sm:$0x3]
        %v2600 = vld [vmem:[#allocation2 + $0xd8] sm:$0xff]
        %v2601 = vld [vmem:[#allocation2 + $0xe0] sm:$0xff]
        %v2602 = vld [vmem:[#allocation2 + $0xe8] sm:$0x3]
        %v2603 = vld [vmem:[#allocation2 + $0xf0] sm:$0xff]
        %v2604 = vld [vmem:[#allocation2 + $0xf8] sm:$0xff]
        %v2605 = vld [vmem:[#allocation2 + $0x100] sm:$0x3]
        %v2606 = vld [vmem:[#allocation2 + $0x108] sm:$0xff]
        %v2607 = vld [vmem:[#allocation2 + $0x110] sm:$0xff]
        %v2608 = vld [vmem:[#allocation2 + $0x118] sm:$0x3]
        %v2609 = vld [vmem:[#allocation2 + $0x120] sm:$0xff]
        %v2610 = vld [vmem:[#allocation2 + $0x128] sm:$0xff]
        %v2611 = vld [vmem:[#allocation2 + $0x130] sm:$0x3]
        %v2612 = vld [vmem:[#allocation2 + $0x138] sm:$0xff]
        %v2613 = vld [vmem:[#allocation2 + $0x140] sm:$0xff]
        %v2614 = vld [vmem:[#allocation2 + $0x148] sm:$0x3]
        %v2615 = vld [vmem:[#allocation2 + $0x150] sm:$0xff]
        %v2616 = vld [vmem:[#allocation2 + $0x158] sm:$0xff]
        %v2617 = vld [vmem:[#allocation2 + $0x160] sm:$0x3]
        %v2618 = vld [vmem:[#allocation2 + $0x168] sm:$0xff]
        %v2619 = vld [vmem:[#allocation2 + $0x170] sm:$0xff]
        %v2620 = vld [vmem:[#allocation2 + $0x178] sm:$0x3]
        %v2621 = vld [vmem:[#allocation2 + $0x180] sm:$0xff]
        %v2622 = vld [vmem:[#allocation2 + $0x188] sm:$0xff]
        %v2623 = vld [vmem:[#allocation2 + $0x190] sm:$0x3]
        %v2624 = vld [vmem:[#allocation2 + $0x198] sm:$0xff]
        %v2625 = vld [vmem:[#allocation2 + $0x1a0] sm:$0xff]
        %v2626 = vld [vmem:[#allocation2 + $0x1a8] sm:$0x3]
        %v2627 = vld [vmem:[%s3] sm:$0xf]
        %v2628 = vld [vmem:[%s3 + $0x4] sm:$0xf]
        %v2629 = vld [vmem:[%s3 + $0x8] sm:$0xf]
        %v2630 = vld [vmem:[%s3 + $0xc] sm:$0xf]
        %v2631 = vld [vmem:[%s3 + $0x10] sm:$0xf]
        %v2632 = vld [vmem:[%s3 + $0x14] sm:$0xf]
        %v2633 = vld [vmem:[%s3 + $0x18] sm:$0xf]
        %v2634 = vld [vmem:[%s3 + $0x1c] sm:$0xf]
        %v2635 = vld [vmem:[%s3 + $0x20] sm:$0xf]
        %v2636 = vld [vmem:[%s3 + $0x24] sm:$0xf]
        %v2637 = vld [vmem:[%s3 + $0x28] sm:$0xf]
        %v2638 = vld [vmem:[%s3 + $0x2c] sm:$0xf]
        %v2639 = vld [vmem:[%s3 + $0x30] sm:$0xf]
        %v2640 = vld [vmem:[%s3 + $0x34] sm:$0xf]
        %v2641 = vld [vmem:[%s3 + $0x38] sm:$0xf]
        %v2642 = vld [vmem:[%s3 + $0x3c] sm:$0xf]
        %v2643 = vld [vmem:[%s3 + $0x40] sm:$0xf]
        %v2644 = vld [vmem:[%s3 + $0x44] sm:$0xf]
        %v2645 = vld [vmem:[%s3 + $0x48] sm:$0xf]
        %v2646 = vld [vmem:[%s3 + $0x4c] sm:$0xf]
        %v2647 = vld [vmem:[%s3 + $0x50] sm:$0xf]
        %v2648 = vld [vmem:[%s3 + $0x54] sm:$0xf]
        %v2649 = vld [vmem:[%s3 + $0x58] sm:$0xf]
        %v2650 = vld [vmem:[%s3 + $0x5c] sm:$0xf]
        %v2651 = vld [vmem:[%s3 + $0x60] sm:$0xf]
        %v2652 = vld [vmem:[%s3 + $0x64] sm:$0xf]
        %v2653 = vld [vmem:[%s3 + $0x68] sm:$0xf]
        %v2654 = vld [vmem:[%s3 + $0x6c] sm:$0xf]
        %v2655 = vld [vmem:[%s3 + $0x70] sm:$0xf]
        %v2656 = vld [vmem:[%s3 + $0x74] sm:$0xf]
        %v2657 = vld [vmem:[%s3 + $0x78] sm:$0xf]
        %v2658 = vld [vmem:[%s3 + $0x7c] sm:$0xf]
        %v2659 = vld [vmem:[%s3 + $0x80] sm:$0xf]
        %v2660 = vld [vmem:[%s3 + $0x84] sm:$0xf]
        %v2661 = vld [vmem:[%s3 + $0x88] sm:$0xf]
        %v2662 = vld [vmem:[%s3 + $0x8c] sm:$0xf]
        %2663 = vst.msk [vmem:[#allocation3] sm:$0xff] %vm415, %v2573
        %2664 = vst.msk [vmem:[#allocation3 + $0x18] sm:$0xff] %vm415, %v2574
        %2665 = vst.msk [vmem:[#allocation3 + $0x30] sm:$0xff] %vm415, %v2576
        %2666 = vst.msk [vmem:[#allocation3 + $0x48] sm:$0xff] %vm415, %v2577
        %2667 = vst.msk [vmem:[#allocation3 + $0x60] sm:$0xff] %vm415, %v2579
        %2668 = vst.msk [vmem:[#allocation3 + $0x78] sm:$0xff] %vm415, %v2580
        %2669 = vst.msk [vmem:[#allocation3 + $0x90] sm:$0xff] %vm415, %v2582
        %2670 = vst.msk [vmem:[#allocation3 + $0xa8] sm:$0xff] %vm415, %v2583
        %2671 = vst.msk [vmem:[#allocation3 + $0xc0] sm:$0xff] %vm415, %v2585
        %2672 = vst.msk [vmem:[#allocation3 + $0xd8] sm:$0xff] %vm415, %v2586
        %2673 = vst.msk [vmem:[#allocation3 + $0xf0] sm:$0xff] %vm415, %v2588
        %2674 = vst.msk [vmem:[#allocation3 + $0x108] sm:$0xff] %vm415, %v2589
        %2675 = vst.msk [vmem:[#allocation3 + $0x120] sm:$0xff] %vm415, %v2591
        %2676 = vst.msk [vmem:[#allocation3 + $0x138] sm:$0xff] %vm415, %v2592
        %2677 = vst.msk [vmem:[#allocation3 + $0x150] sm:$0xff] %vm415, %v2594
        %2678 = vst.msk [vmem:[#allocation3 + $0x168] sm:$0xff] %vm415, %v2595
        %2679 = vst.msk [vmem:[#allocation3 + $0x180] sm:$0xff] %vm415, %v2597
        %2680 = vst.msk [vmem:[#allocation3 + $0x198] sm:$0xff] %vm415, %v2598
        %2681 = vst.msk [vmem:[#allocation3 + $0x1b0] sm:$0xff] %vm415, %v2600
        %2682 = vst.msk [vmem:[#allocation3 + $0x1c8] sm:$0xff] %vm415, %v2601
        %2683 = vst.msk [vmem:[#allocation3 + $0x1e0] sm:$0xff] %vm415, %v2603
        %2684 = vst.msk [vmem:[#allocation3 + $0x1f8] sm:$0xff] %vm415, %v2604
        %2685 = vst.msk [vmem:[#allocation3 + $0x210] sm:$0xff] %vm415, %v2606
        %2686 = vst.msk [vmem:[#allocation3 + $0x228] sm:$0xff] %vm415, %v2607
        %2687 = vst.msk [vmem:[#allocation3 + $0x240] sm:$0xff] %vm415, %v2609
        %2688 = vst.msk [vmem:[#allocation3 + $0x258] sm:$0xff] %vm415, %v2610
        %2689 = vst.msk [vmem:[#allocation3 + $0x270] sm:$0xff] %vm415, %v2612
        %2690 = vst.msk [vmem:[#allocation3 + $0x288] sm:$0xff] %vm415, %v2613
        %2691 = vst.msk [vmem:[#allocation3 + $0x2a0] sm:$0xff] %vm415, %v2615
        %2692 = vst.msk [vmem:[#allocation3 + $0x2b8] sm:$0xff] %vm415, %v2616
        %2693 = vst.msk [vmem:[#allocation3 + $0x2d0] sm:$0xff] %vm415, %v2618
        %2694 = vst.msk [vmem:[#allocation3 + $0x2e8] sm:$0xff] %vm415, %v2619
        %v2743 = vrot.slane %v2573, 1
        %v2744 = vrot.slane %v2574, 1
        %v2745 = vsel %vm496, %v2743, %v2744
        %v2746 = vrot.slane %v2575, 1
        %v2747 = vsel %vm496, %v2744, %v2746
        %v2748 = vrot.slane %v2576, 1
        %v2749 = vrot.slane %v2577, 1
        %v2750 = vsel %vm496, %v2748, %v2749
        %v2751 = vrot.slane %v2578, 1
        %v2752 = vsel %vm496, %v2749, %v2751
        %v2753 = vrot.slane %v2579, 1
        %v2754 = vrot.slane %v2580, 1
        %v2755 = vsel %vm496, %v2753, %v2754
        %v2756 = vrot.slane %v2581, 1
        %v2757 = vsel %vm496, %v2754, %v2756
        %v2758 = vrot.slane %v2582, 1
        %v2759 = vrot.slane %v2583, 1
        %v2760 = vsel %vm496, %v2758, %v2759
        %v2761 = vrot.slane %v2584, 1
        %v2762 = vsel %vm496, %v2759, %v2761
        %v2763 = vrot.slane %v2585, 1
        %v2764 = vrot.slane %v2586, 1
        %v2765 = vsel %vm496, %v2763, %v2764
        %v2766 = vrot.slane %v2587, 1
        %v2767 = vsel %vm496, %v2764, %v2766
        %v2768 = vrot.slane %v2588, 1
        %v2769 = vrot.slane %v2589, 1
        %v2770 = vsel %vm496, %v2768, %v2769
        %v2771 = vrot.slane %v2590, 1
        %v2772 = vsel %vm496, %v2769, %v2771
        %v2773 = vrot.slane %v2591, 1
        %v2774 = vrot.slane %v2592, 1
        %v2775 = vsel %vm496, %v2773, %v2774
        %v2776 = vrot.slane %v2593, 1
        %v2777 = vsel %vm496, %v2774, %v2776
        %v2778 = vrot.slane %v2594, 1
        %v2779 = vrot.slane %v2595, 1
        %v2780 = vsel %vm496, %v2778, %v2779
        %v2781 = vrot.slane %v2596, 1
        %v2782 = vsel %vm496, %v2779, %v2781
        %v2783 = vrot.slane %v2597, 1
        %v2784 = vrot.slane %v2598, 1
        %v2785 = vsel %vm496, %v2783, %v2784
        %v2786 = vrot.slane %v2599, 1
        %v2787 = vsel %vm496, %v2784, %v2786
        %v2788 = vrot.slane %v2600, 1
        %v2789 = vrot.slane %v2601, 1
        %v2790 = vsel %vm496, %v2788, %v2789
        %v2791 = vrot.slane %v2602, 1
        %v2792 = vsel %vm496, %v2789, %v2791
        %v2793 = vrot.slane %v2603, 1
        %v2794 = vrot.slane %v2604, 1
        %v2795 = vsel %vm496, %v2793, %v2794
        %v2796 = vrot.slane %v2605, 1
        %v2797 = vsel %vm496, %v2794, %v2796
        %v2798 = vrot.slane %v2606, 1
        %v2799 = vrot.slane %v2607, 1
        %v2800 = vsel %vm496, %v2798, %v2799
        %v2801 = vrot.slane %v2608, 1
        %v2802 = vsel %vm496, %v2799, %v2801
        %v2803 = vrot.slane %v2609, 1
        %v2804 = vrot.slane %v2610, 1
        %v2805 = vsel %vm496, %v2803, %v2804
        %v2806 = vrot.slane %v2611, 1
        %v2807 = vsel %vm496, %v2804, %v2806
        %v2808 = vrot.slane %v2612, 1
        %v2809 = vrot.slane %v2613, 1
        %v2810 = vsel %vm496, %v2808, %v2809
        %v2811 = vrot.slane %v2614, 1
        %v2812 = vsel %vm496, %v2809, %v2811
        %v2813 = vrot.slane %v2615, 1
        %v2814 = vrot.slane %v2616, 1
        %v2815 = vsel %vm496, %v2813, %v2814
        %v2816 = vrot.slane %v2617, 1
        %v2817 = vsel %vm496, %v2814, %v2816
        %v2818 = vrot.slane %v2618, 1
        %v2819 = vrot.slane %v2619, 1
        %v2820 = vsel %vm496, %v2818, %v2819
        %v2821 = vrot.slane %v2620, 1
        %v2822 = vsel %vm496, %v2819, %v2821
        %2823 = vrot.lane.b32.xlu0 %v2745, 32
        %v2824 = vpop.permute.xlu0 %2823
        %2825 = vrot.lane.b32.xlu0 %v2747, 32
        %v2826 = vpop.permute.xlu0 %2825
        %2827 = vrot.lane.b32.xlu0 %v2750, 32
        %v2828 = vpop.permute.xlu0 %2827
        %2829 = vrot.lane.b32.xlu0 %v2752, 32
        %v2830 = vpop.permute.xlu0 %2829
        %2831 = vrot.lane.b32.xlu0 %v2755, 32
        %v2832 = vpop.permute.xlu0 %2831
        %2833 = vrot.lane.b32.xlu0 %v2757, 32
        %v2834 = vpop.permute.xlu0 %2833
        %2835 = vrot.lane.b32.xlu0 %v2760, 32
        %v2836 = vpop.permute.xlu0 %2835
        %2837 = vrot.lane.b32.xlu0 %v2762, 32
        %v2838 = vpop.permute.xlu0 %2837
        %2839 = vrot.lane.b32.xlu0 %v2765, 32
        %v2840 = vpop.permute.xlu0 %2839
        %2841 = vrot.lane.b32.xlu0 %v2767, 32
        %v2842 = vpop.permute.xlu0 %2841
        %2843 = vrot.lane.b32.xlu0 %v2770, 32
        %v2844 = vpop.permute.xlu0 %2843
        %2845 = vrot.lane.b32.xlu0 %v2772, 32
        %v2846 = vpop.permute.xlu0 %2845
        %2847 = vrot.lane.b32.xlu0 %v2775, 32
        %v2848 = vpop.permute.xlu0 %2847
        %2849 = vrot.lane.b32.xlu0 %v2777, 32
        %v2850 = vpop.permute.xlu0 %2849
        %2851 = vrot.lane.b32.xlu0 %v2780, 32
        %v2852 = vpop.permute.xlu0 %2851
        %2853 = vrot.lane.b32.xlu0 %v2782, 32
        %v2854 = vpop.permute.xlu0 %2853
        %2855 = vrot.lane.b32.xlu0 %v2785, 32
        %v2856 = vpop.permute.xlu0 %2855
        %2857 = vrot.lane.b32.xlu0 %v2787, 32
        %v2858 = vpop.permute.xlu0 %2857
        %2859 = vrot.lane.b32.xlu0 %v2790, 32
        %v2860 = vpop.permute.xlu0 %2859
        %2861 = vrot.lane.b32.xlu0 %v2792, 32
        %v2862 = vpop.permute.xlu0 %2861
        %2863 = vrot.lane.b32.xlu0 %v2795, 32
        %v2864 = vpop.permute.xlu0 %2863
        %2865 = vrot.lane.b32.xlu0 %v2797, 32
        %v2866 = vpop.permute.xlu0 %2865
        %2867 = vrot.lane.b32.xlu0 %v2800, 32
        %v2868 = vpop.permute.xlu0 %2867
        %2869 = vrot.lane.b32.xlu0 %v2802, 32
        %v2870 = vpop.permute.xlu0 %2869
        %2871 = vrot.lane.b32.xlu0 %v2805, 32
        %v2872 = vpop.permute.xlu0 %2871
        %2873 = vrot.lane.b32.xlu0 %v2807, 32
        %v2874 = vpop.permute.xlu0 %2873
        %2875 = vrot.lane.b32.xlu0 %v2810, 32
        %v2876 = vpop.permute.xlu0 %2875
        %2877 = vrot.lane.b32.xlu0 %v2812, 32
        %v2878 = vpop.permute.xlu0 %2877
        %2879 = vrot.lane.b32.xlu0 %v2815, 32
        %v2880 = vpop.permute.xlu0 %2879
        %2881 = vrot.lane.b32.xlu0 %v2817, 32
        %v2882 = vpop.permute.xlu0 %2881
        %2883 = vrot.lane.b32.xlu0 %v2820, 32
        %v2884 = vpop.permute.xlu0 %2883
        %2885 = vrot.lane.b32.xlu0 %v2822, 32
        %v2886 = vpop.permute.xlu0 %2885
        %2919 = vst.msk [vmem:[#allocation3] sm:$0xff] %vm673, %v2824
        %2920 = vst.msk [vmem:[#allocation3 + $0x18] sm:$0xff] %vm673, %v2826
        %2921 = vst.msk [vmem:[#allocation3 + $0x30] sm:$0xff] %vm673, %v2828
        %2922 = vst.msk [vmem:[#allocation3 + $0x48] sm:$0xff] %vm673, %v2830
        %2923 = vst.msk [vmem:[#allocation3 + $0x60] sm:$0xff] %vm673, %v2832
        %2924 = vst.msk [vmem:[#allocation3 + $0x78] sm:$0xff] %vm673, %v2834
        %2925 = vst.msk [vmem:[#allocation3 + $0x90] sm:$0xff] %vm673, %v2836
        %2926 = vst.msk [vmem:[#allocation3 + $0xa8] sm:$0xff] %vm673, %v2838
        %2927 = vst.msk [vmem:[#allocation3 + $0xc0] sm:$0xff] %vm673, %v2840
        %2928 = vst.msk [vmem:[#allocation3 + $0xd8] sm:$0xff] %vm673, %v2842
        %2929 = vst.msk [vmem:[#allocation3 + $0xf0] sm:$0xff] %vm673, %v2844
        %2930 = vst.msk [vmem:[#allocation3 + $0x108] sm:$0xff] %vm673, %v2846
        %2931 = vst.msk [vmem:[#allocation3 + $0x120] sm:$0xff] %vm673, %v2848
        %2932 = vst.msk [vmem:[#allocation3 + $0x138] sm:$0xff] %vm673, %v2850
        %2933 = vst.msk [vmem:[#allocation3 + $0x150] sm:$0xff] %vm673, %v2852
        %2934 = vst.msk [vmem:[#allocation3 + $0x168] sm:$0xff] %vm673, %v2854
        %2935 = vst.msk [vmem:[#allocation3 + $0x180] sm:$0xff] %vm673, %v2856
        %2936 = vst.msk [vmem:[#allocation3 + $0x198] sm:$0xff] %vm673, %v2858
        %2937 = vst.msk [vmem:[#allocation3 + $0x1b0] sm:$0xff] %vm673, %v2860
        %2938 = vst.msk [vmem:[#allocation3 + $0x1c8] sm:$0xff] %vm673, %v2862
        %2939 = vst.msk [vmem:[#allocation3 + $0x1e0] sm:$0xff] %vm673, %v2864
        %2940 = vst.msk [vmem:[#allocation3 + $0x1f8] sm:$0xff] %vm673, %v2866
        %2941 = vst.msk [vmem:[#allocation3 + $0x210] sm:$0xff] %vm673, %v2868
        %2942 = vst.msk [vmem:[#allocation3 + $0x228] sm:$0xff] %vm673, %v2870
        %2943 = vst.msk [vmem:[#allocation3 + $0x240] sm:$0xff] %vm673, %v2872
        %2944 = vst.msk [vmem:[#allocation3 + $0x258] sm:$0xff] %vm673, %v2874
        %2945 = vst.msk [vmem:[#allocation3 + $0x270] sm:$0xff] %vm673, %v2876
        %2946 = vst.msk [vmem:[#allocation3 + $0x288] sm:$0xff] %vm673, %v2878
        %2947 = vst.msk [vmem:[#allocation3 + $0x2a0] sm:$0xff] %vm673, %v2880
        %2948 = vst.msk [vmem:[#allocation3 + $0x2b8] sm:$0xff] %vm673, %v2882
        %2949 = vst.msk [vmem:[#allocation3 + $0x2d0] sm:$0xff] %vm673, %v2884
        %2950 = vst.msk [vmem:[#allocation3 + $0x2e8] sm:$0xff] %vm673, %v2886
        %v2951 = vrot.slane %v2573, 2
        %v2952 = vrot.slane %v2574, 2
        %v2953 = vsel %vm706, %v2951, %v2952
        %v2954 = vrot.slane %v2575, 2
        %v2955 = vsel %vm706, %v2952, %v2954
        %v2956 = vrot.slane %v2576, 2
        %v2957 = vrot.slane %v2577, 2
        %v2958 = vsel %vm706, %v2956, %v2957
        %v2959 = vrot.slane %v2578, 2
        %v2960 = vsel %vm706, %v2957, %v2959
        %v2961 = vrot.slane %v2579, 2
        %v2962 = vrot.slane %v2580, 2
        %v2963 = vsel %vm706, %v2961, %v2962
        %v2964 = vrot.slane %v2581, 2
        %v2965 = vsel %vm706, %v2962, %v2964
        %v2966 = vrot.slane %v2582, 2
        %v2967 = vrot.slane %v2583, 2
        %v2968 = vsel %vm706, %v2966, %v2967
        %v2969 = vrot.slane %v2584, 2
        %v2970 = vsel %vm706, %v2967, %v2969
        %v2971 = vrot.slane %v2585, 2
        %v2972 = vrot.slane %v2586, 2
        %v2973 = vsel %vm706, %v2971, %v2972
        %v2974 = vrot.slane %v2587, 2
        %v2975 = vsel %vm706, %v2972, %v2974
        %v2976 = vrot.slane %v2588, 2
        %v2977 = vrot.slane %v2589, 2
        %v2978 = vsel %vm706, %v2976, %v2977
        %v2979 = vrot.slane %v2590, 2
        %v2980 = vsel %vm706, %v2977, %v2979
        %v2981 = vrot.slane %v2591, 2
        %v2982 = vrot.slane %v2592, 2
        %v2983 = vsel %vm706, %v2981, %v2982
        %v2984 = vrot.slane %v2593, 2
        %v2985 = vsel %vm706, %v2982, %v2984
        %v2986 = vrot.slane %v2594, 2
        %v2987 = vrot.slane %v2595, 2
        %v2988 = vsel %vm706, %v2986, %v2987
        %v2989 = vrot.slane %v2596, 2
        %v2990 = vsel %vm706, %v2987, %v2989
        %v2991 = vrot.slane %v2597, 2
        %v2992 = vrot.slane %v2598, 2
        %v2993 = vsel %vm706, %v2991, %v2992
        %v2994 = vrot.slane %v2599, 2
        %v2995 = vsel %vm706, %v2992, %v2994
        %v2996 = vrot.slane %v2600, 2
        %v2997 = vrot.slane %v2601, 2
        %v2998 = vsel %vm706, %v2996, %v2997
        %v2999 = vrot.slane %v2602, 2
        %v3000 = vsel %vm706, %v2997, %v2999
        %v3001 = vrot.slane %v2603, 2
        %v3002 = vrot.slane %v2604, 2
        %v3003 = vsel %vm706, %v3001, %v3002
        %v3004 = vrot.slane %v2605, 2
        %v3005 = vsel %vm706, %v3002, %v3004
        %v3006 = vrot.slane %v2606, 2
        %v3007 = vrot.slane %v2607, 2
        %v3008 = vsel %vm706, %v3006, %v3007
        %v3009 = vrot.slane %v2608, 2
        %v3010 = vsel %vm706, %v3007, %v3009
        %v3011 = vrot.slane %v2609, 2
        %v3012 = vrot.slane %v2610, 2
        %v3013 = vsel %vm706, %v3011, %v3012
        %v3014 = vrot.slane %v2611, 2
        %v3015 = vsel %vm706, %v3012, %v3014
        %v3016 = vrot.slane %v2612, 2
        %v3017 = vrot.slane %v2613, 2
        %v3018 = vsel %vm706, %v3016, %v3017
        %v3019 = vrot.slane %v2614, 2
        %v3020 = vsel %vm706, %v3017, %v3019
        %v3021 = vrot.slane %v2615, 2
        %v3022 = vrot.slane %v2616, 2
        %v3023 = vsel %vm706, %v3021, %v3022
        %v3024 = vrot.slane %v2617, 2
        %v3025 = vsel %vm706, %v3022, %v3024
        %v3026 = vrot.slane %v2618, 2
        %v3027 = vrot.slane %v2619, 2
        %v3028 = vsel %vm706, %v3026, %v3027
        %v3029 = vrot.slane %v2620, 2
        %v3030 = vsel %vm706, %v3027, %v3029
        %3031 = vrot.lane.b32.xlu0 %v2953, 64
        %v3032 = vpop.permute.xlu0 %3031
        %3033 = vrot.lane.b32.xlu0 %v2955, 64
        %v3034 = vpop.permute.xlu0 %3033
        %3035 = vrot.lane.b32.xlu0 %v2958, 64
        %v3036 = vpop.permute.xlu0 %3035
        %3037 = vrot.lane.b32.xlu0 %v2960, 64
        %v3038 = vpop.permute.xlu0 %3037
        %3039 = vrot.lane.b32.xlu0 %v2963, 64
        %v3040 = vpop.permute.xlu0 %3039
        %3041 = vrot.lane.b32.xlu0 %v2965, 64
        %v3042 = vpop.permute.xlu0 %3041
        %3043 = vrot.lane.b32.xlu0 %v2968, 64
        %v3044 = vpop.permute.xlu0 %3043
        %3045 = vrot.lane.b32.xlu0 %v2970, 64
        %v3046 = vpop.permute.xlu0 %3045
        %3047 = vrot.lane.b32.xlu0 %v2973, 64
        %v3048 = vpop.permute.xlu0 %3047
        %3049 = vrot.lane.b32.xlu0 %v2975, 64
        %v3050 = vpop.permute.xlu0 %3049
        %3051 = vrot.lane.b32.xlu0 %v2978, 64
        %v3052 = vpop.permute.xlu0 %3051
        %3053 = vrot.lane.b32.xlu0 %v2980, 64
        %v3054 = vpop.permute.xlu0 %3053
        %3055 = vrot.lane.b32.xlu0 %v2983, 64
        %v3056 = vpop.permute.xlu0 %3055
        %3057 = vrot.lane.b32.xlu0 %v2985, 64
        %v3058 = vpop.permute.xlu0 %3057
        %3059 = vrot.lane.b32.xlu0 %v2988, 64
        %v3060 = vpop.permute.xlu0 %3059
        %3061 = vrot.lane.b32.xlu0 %v2990, 64
        %v3062 = vpop.permute.xlu0 %3061
        %3063 = vrot.lane.b32.xlu0 %v2993, 64
        %v3064 = vpop.permute.xlu0 %3063
        %3065 = vrot.lane.b32.xlu0 %v2995, 64
        %v3066 = vpop.permute.xlu0 %3065
        %3067 = vrot.lane.b32.xlu0 %v2998, 64
        %v3068 = vpop.permute.xlu0 %3067
        %3069 = vrot.lane.b32.xlu0 %v3000, 64
        %v3070 = vpop.permute.xlu0 %3069
        %3071 = vrot.lane.b32.xlu0 %v3003, 64
        %v3072 = vpop.permute.xlu0 %3071
        %3073 = vrot.lane.b32.xlu0 %v3005, 64
        %v3074 = vpop.permute.xlu0 %3073
        %3075 = vrot.lane.b32.xlu0 %v3008, 64
        %v3076 = vpop.permute.xlu0 %3075
        %3077 = vrot.lane.b32.xlu0 %v3010, 64
        %v3078 = vpop.permute.xlu0 %3077
        %3079 = vrot.lane.b32.xlu0 %v3013, 64
        %v3080 = vpop.permute.xlu0 %3079
        %3081 = vrot.lane.b32.xlu0 %v3015, 64
        %v3082 = vpop.permute.xlu0 %3081
        %3083 = vrot.lane.b32.xlu0 %v3018, 64
        %v3084 = vpop.permute.xlu0 %3083
        %3085 = vrot.lane.b32.xlu0 %v3020, 64
        %v3086 = vpop.permute.xlu0 %3085
        %3087 = vrot.lane.b32.xlu0 %v3023, 64
        %v3088 = vpop.permute.xlu0 %3087
        %3089 = vrot.lane.b32.xlu0 %v3025, 64
        %v3090 = vpop.permute.xlu0 %3089
        %3091 = vrot.lane.b32.xlu0 %v3028, 64
        %v3092 = vpop.permute.xlu0 %3091
        %3093 = vrot.lane.b32.xlu0 %v3030, 64
        %v3094 = vpop.permute.xlu0 %3093
        %3127 = vst.msk [vmem:[#allocation3] sm:$0xff] %vm883, %v3032
        %3128 = vst.msk [vmem:[#allocation3 + $0x18] sm:$0xff] %vm883, %v3034
        %3129 = vst.msk [vmem:[#allocation3 + $0x30] sm:$0xff] %vm883, %v3036
        %3130 = vst.msk [vmem:[#allocation3 + $0x48] sm:$0xff] %vm883, %v3038
        %3131 = vst.msk [vmem:[#allocation3 + $0x60] sm:$0xff] %vm883, %v3040
        %3132 = vst.msk [vmem:[#allocation3 + $0x78] sm:$0xff] %vm883, %v3042
        %3133 = vst.msk [vmem:[#allocation3 + $0x90] sm:$0xff] %vm883, %v3044
        %3134 = vst.msk [vmem:[#allocation3 + $0xa8] sm:$0xff] %vm883, %v3046
        %3135 = vst.msk [vmem:[#allocation3 + $0xc0] sm:$0xff] %vm883, %v3048
        %3136 = vst.msk [vmem:[#allocation3 + $0xd8] sm:$0xff] %vm883, %v3050
        %3137 = vst.msk [vmem:[#allocation3 + $0xf0] sm:$0xff] %vm883, %v3052
        %3138 = vst.msk [vmem:[#allocation3 + $0x108] sm:$0xff] %vm883, %v3054
        %3139 = vst.msk [vmem:[#allocation3 + $0x120] sm:$0xff] %vm883, %v3056
        %3140 = vst.msk [vmem:[#allocation3 + $0x138] sm:$0xff] %vm883, %v3058
        %3141 = vst.msk [vmem:[#allocation3 + $0x150] sm:$0xff] %vm883, %v3060
        %3142 = vst.msk [vmem:[#allocation3 + $0x168] sm:$0xff] %vm883, %v3062
        %3143 = vst.msk [vmem:[#allocation3 + $0x180] sm:$0xff] %vm883, %v3064
        %3144 = vst.msk [vmem:[#allocation3 + $0x198] sm:$0xff] %vm883, %v3066
        %3145 = vst.msk [vmem:[#allocation3 + $0x1b0] sm:$0xff] %vm883, %v3068
        %3146 = vst.msk [vmem:[#allocation3 + $0x1c8] sm:$0xff] %vm883, %v3070
        %3147 = vst.msk [vmem:[#allocation3 + $0x1e0] sm:$0xff] %vm883, %v3072
        %3148 = vst.msk [vmem:[#allocation3 + $0x1f8] sm:$0xff] %vm883, %v3074
        %3149 = vst.msk [vmem:[#allocation3 + $0x210] sm:$0xff] %vm883, %v3076
        %3150 = vst.msk [vmem:[#allocation3 + $0x228] sm:$0xff] %vm883, %v3078
        %3151 = vst.msk [vmem:[#allocation3 + $0x240] sm:$0xff] %vm883, %v3080
        %3152 = vst.msk [vmem:[#allocation3 + $0x258] sm:$0xff] %vm883, %v3082
        %3153 = vst.msk [vmem:[#allocation3 + $0x270] sm:$0xff] %vm883, %v3084
        %3154 = vst.msk [vmem:[#allocation3 + $0x288] sm:$0xff] %vm883, %v3086
        %3155 = vst.msk [vmem:[#allocation3 + $0x2a0] sm:$0xff] %vm883, %v3088
        %3156 = vst.msk [vmem:[#allocation3 + $0x2b8] sm:$0xff] %vm883, %v3090
        %3157 = vst.msk [vmem:[#allocation3 + $0x2d0] sm:$0xff] %vm883, %v3092
        %3158 = vst.msk [vmem:[#allocation3 + $0x2e8] sm:$0xff] %vm883, %v3094
        %3161 = vrot.lane.b32.xlu0 %v2576, 96
        %v3162 = vpop.permute.xlu0 %3161
        %3163 = vrot.lane.b32.xlu0 %v2577, 96
        %v3164 = vpop.permute.xlu0 %3163
        %3165 = vrot.lane.b32.xlu0 %v2579, 96
        %v3166 = vpop.permute.xlu0 %3165
        %3167 = vrot.lane.b32.xlu0 %v2580, 96
        %v3168 = vpop.permute.xlu0 %3167
        %3169 = vrot.lane.b32.xlu0 %v2582, 96
        %v3170 = vpop.permute.xlu0 %3169
        %3171 = vrot.lane.b32.xlu0 %v2583, 96
        %v3172 = vpop.permute.xlu0 %3171
        %3173 = vrot.lane.b32.xlu0 %v2585, 96
        %v3174 = vpop.permute.xlu0 %3173
        %3175 = vrot.lane.b32.xlu0 %v2586, 96
        %v3176 = vpop.permute.xlu0 %3175
        %3177 = vrot.lane.b32.xlu0 %v2588, 96
        %v3178 = vpop.permute.xlu0 %3177
        %3179 = vrot.lane.b32.xlu0 %v2589, 96
        %v3180 = vpop.permute.xlu0 %3179
        %3181 = vrot.lane.b32.xlu0 %v2591, 96
        %v3182 = vpop.permute.xlu0 %3181
        %3183 = vrot.lane.b32.xlu0 %v2592, 96
        %v3184 = vpop.permute.xlu0 %3183
        %3185 = vrot.lane.b32.xlu0 %v2594, 96
        %v3186 = vpop.permute.xlu0 %3185
        %3187 = vrot.lane.b32.xlu0 %v2595, 96
        %v3188 = vpop.permute.xlu0 %3187
        %3189 = vrot.lane.b32.xlu0 %v2597, 96
        %v3190 = vpop.permute.xlu0 %3189
        %3191 = vrot.lane.b32.xlu0 %v2598, 96
        %v3192 = vpop.permute.xlu0 %3191
        %3193 = vrot.lane.b32.xlu0 %v2600, 96
        %v3194 = vpop.permute.xlu0 %3193
        %3195 = vrot.lane.b32.xlu0 %v2601, 96
        %v3196 = vpop.permute.xlu0 %3195
        %3197 = vrot.lane.b32.xlu0 %v2603, 96
        %v3198 = vpop.permute.xlu0 %3197
        %3199 = vrot.lane.b32.xlu0 %v2604, 96
        %v3200 = vpop.permute.xlu0 %3199
        %3201 = vrot.lane.b32.xlu0 %v2606, 96
        %v3202 = vpop.permute.xlu0 %3201
        %3203 = vrot.lane.b32.xlu0 %v2607, 96
        %v3204 = vpop.permute.xlu0 %3203
        %3205 = vrot.lane.b32.xlu0 %v2609, 96
        %v3206 = vpop.permute.xlu0 %3205
        %3207 = vrot.lane.b32.xlu0 %v2610, 96
        %v3208 = vpop.permute.xlu0 %3207
        %3209 = vrot.lane.b32.xlu0 %v2612, 96
        %v3210 = vpop.permute.xlu0 %3209
        %3211 = vrot.lane.b32.xlu0 %v2613, 96
        %v3212 = vpop.permute.xlu0 %3211
        %3213 = vrot.lane.b32.xlu0 %v2615, 96
        %v3214 = vpop.permute.xlu0 %3213
        %3215 = vrot.lane.b32.xlu0 %v2616, 96
        %v3216 = vpop.permute.xlu0 %3215
        %3217 = vrot.lane.b32.xlu0 %v2618, 96
        %v3218 = vpop.permute.xlu0 %3217
        %3219 = vrot.lane.b32.xlu0 %v2619, 96
        %v3220 = vpop.permute.xlu0 %3219
        %3221 = vrot.lane.b32.xlu0 %v2621, 96
        %v3222 = vpop.permute.xlu0 %3221
        %3223 = vrot.lane.b32.xlu0 %v2622, 96
        %v3224 = vpop.permute.xlu0 %3223
        %3257 = vst.msk [vmem:[#allocation3] sm:$0xff] %vm1014, %v3162
        %3258 = vst.msk [vmem:[#allocation3 + $0x18] sm:$0xff] %vm1014, %v3164
        %3259 = vst.msk [vmem:[#allocation3 + $0x30] sm:$0xff] %vm1014, %v3166
        %3260 = vst.msk [vmem:[#allocation3 + $0x48] sm:$0xff] %vm1014, %v3168
        %3261 = vst.msk [vmem:[#allocation3 + $0x60] sm:$0xff] %vm1014, %v3170
        %3262 = vst.msk [vmem:[#allocation3 + $0x78] sm:$0xff] %vm1014, %v3172
        %3263 = vst.msk [vmem:[#allocation3 + $0x90] sm:$0xff] %vm1014, %v3174
        %3264 = vst.msk [vmem:[#allocation3 + $0xa8] sm:$0xff] %vm1014, %v3176
        %3265 = vst.msk [vmem:[#allocation3 + $0xc0] sm:$0xff] %vm1014, %v3178
        %3266 = vst.msk [vmem:[#allocation3 + $0xd8] sm:$0xff] %vm1014, %v3180
        %3267 = vst.msk [vmem:[#allocation3 + $0xf0] sm:$0xff] %vm1014, %v3182
        %3268 = vst.msk [vmem:[#allocation3 + $0x108] sm:$0xff] %vm1014, %v3184
        %3269 = vst.msk [vmem:[#allocation3 + $0x120] sm:$0xff] %vm1014, %v3186
        %3270 = vst.msk [vmem:[#allocation3 + $0x138] sm:$0xff] %vm1014, %v3188
        %3271 = vst.msk [vmem:[#allocation3 + $0x150] sm:$0xff] %vm1014, %v3190
        %3272 = vst.msk [vmem:[#allocation3 + $0x168] sm:$0xff] %vm1014, %v3192
        %3273 = vst.msk [vmem:[#allocation3 + $0x180] sm:$0xff] %vm1014, %v3194
        %3274 = vst.msk [vmem:[#allocation3 + $0x198] sm:$0xff] %vm1014, %v3196
        %3275 = vst.msk [vmem:[#allocation3 + $0x1b0] sm:$0xff] %vm1014, %v3198
        %3276 = vst.msk [vmem:[#allocation3 + $0x1c8] sm:$0xff] %vm1014, %v3200
        %3277 = vst.msk [vmem:[#allocation3 + $0x1e0] sm:$0xff] %vm1014, %v3202
        %3278 = vst.msk [vmem:[#allocation3 + $0x1f8] sm:$0xff] %vm1014, %v3204
        %3279 = vst.msk [vmem:[#allocation3 + $0x210] sm:$0xff] %vm1014, %v3206
        %3280 = vst.msk [vmem:[#allocation3 + $0x228] sm:$0xff] %vm1014, %v3208
        %3281 = vst.msk [vmem:[#allocation3 + $0x240] sm:$0xff] %vm1014, %v3210
        %3282 = vst.msk [vmem:[#allocation3 + $0x258] sm:$0xff] %vm1014, %v3212
        %3283 = vst.msk [vmem:[#allocation3 + $0x270] sm:$0xff] %vm1014, %v3214
        %3284 = vst.msk [vmem:[#allocation3 + $0x288] sm:$0xff] %vm1014, %v3216
        %3285 = vst.msk [vmem:[#allocation3 + $0x2a0] sm:$0xff] %vm1014, %v3218
        %3286 = vst.msk [vmem:[#allocation3 + $0x2b8] sm:$0xff] %vm1014, %v3220
        %3287 = vst.msk [vmem:[#allocation3 + $0x2d0] sm:$0xff] %vm1014, %v3222
        %3288 = vst.msk [vmem:[#allocation3 + $0x2e8] sm:$0xff] %vm1014, %v3224
        %v3290 = vrot.slane %v2621, 1
        %v3291 = vrot.slane %v2622, 1
        %v3292 = vsel %vm496, %v3290, %v3291
        %v3293 = vrot.slane %v2623, 1
        %v3294 = vsel %vm496, %v3291, %v3293
        %3327 = vst.msk [vmem:[#allocation3 + $0x8] sm:$0xff] %vm415, %v2750
        %3328 = vst.msk [vmem:[#allocation3 + $0x20] sm:$0xff] %vm415, %v2752
        %3329 = vst.msk [vmem:[#allocation3 + $0x38] sm:$0xff] %vm415, %v2755
        %3330 = vst.msk [vmem:[#allocation3 + $0x50] sm:$0xff] %vm415, %v2757
        %3331 = vst.msk [vmem:[#allocation3 + $0x68] sm:$0xff] %vm415, %v2760
        %3332 = vst.msk [vmem:[#allocation3 + $0x80] sm:$0xff] %vm415, %v2762
        %3333 = vst.msk [vmem:[#allocation3 + $0x98] sm:$0xff] %vm415, %v2765
        %3334 = vst.msk [vmem:[#allocation3 + $0xb0] sm:$0xff] %vm415, %v2767
        %3335 = vst.msk [vmem:[#allocation3 + $0xc8] sm:$0xff] %vm415, %v2770
        %3336 = vst.msk [vmem:[#allocation3 + $0xe0] sm:$0xff] %vm415, %v2772
        %3337 = vst.msk [vmem:[#allocation3 + $0xf8] sm:$0xff] %vm415, %v2775
        %3338 = vst.msk [vmem:[#allocation3 + $0x110] sm:$0xff] %vm415, %v2777
        %3339 = vst.msk [vmem:[#allocation3 + $0x128] sm:$0xff] %vm415, %v2780
        %3340 = vst.msk [vmem:[#allocation3 + $0x140] sm:$0xff] %vm415, %v2782
        %3341 = vst.msk [vmem:[#allocation3 + $0x158] sm:$0xff] %vm415, %v2785
        %3342 = vst.msk [vmem:[#allocation3 + $0x170] sm:$0xff] %vm415, %v2787
        %3343 = vst.msk [vmem:[#allocation3 + $0x188] sm:$0xff] %vm415, %v2790
        %3344 = vst.msk [vmem:[#allocation3 + $0x1a0] sm:$0xff] %vm415, %v2792
        %3345 = vst.msk [vmem:[#allocation3 + $0x1b8] sm:$0xff] %vm415, %v2795
        %3346 = vst.msk [vmem:[#allocation3 + $0x1d0] sm:$0xff] %vm415, %v2797
        %3347 = vst.msk [vmem:[#allocation3 + $0x1e8] sm:$0xff] %vm415, %v2800
        %3348 = vst.msk [vmem:[#allocation3 + $0x200] sm:$0xff] %vm415, %v2802
        %3349 = vst.msk [vmem:[#allocation3 + $0x218] sm:$0xff] %vm415, %v2805
        %3350 = vst.msk [vmem:[#allocation3 + $0x230] sm:$0xff] %vm415, %v2807
        %3351 = vst.msk [vmem:[#allocation3 + $0x248] sm:$0xff] %vm415, %v2810
        %3352 = vst.msk [vmem:[#allocation3 + $0x260] sm:$0xff] %vm415, %v2812
        %3353 = vst.msk [vmem:[#allocation3 + $0x278] sm:$0xff] %vm415, %v2815
        %3354 = vst.msk [vmem:[#allocation3 + $0x290] sm:$0xff] %vm415, %v2817
        %3355 = vst.msk [vmem:[#allocation3 + $0x2a8] sm:$0xff] %vm415, %v2820
        %3356 = vst.msk [vmem:[#allocation3 + $0x2c0] sm:$0xff] %vm415, %v2822
        %3357 = vst.msk [vmem:[#allocation3 + $0x2d8] sm:$0xff] %vm415, %v3292
        %3358 = vst.msk [vmem:[#allocation3 + $0x2f0] sm:$0xff] %vm415, %v3294
        %v3359 = vrot.slane %v2621, 2
        %v3360 = vrot.slane %v2622, 2
        %v3361 = vsel %vm706, %v3359, %v3360
        %v3362 = vrot.slane %v2623, 2
        %v3363 = vsel %vm706, %v3360, %v3362
        %3364 = vrot.lane.b32.xlu0 %v2958, 32
        %v3365 = vpop.permute.xlu0 %3364
        %3366 = vrot.lane.b32.xlu0 %v2960, 32
        %v3367 = vpop.permute.xlu0 %3366
        %3368 = vrot.lane.b32.xlu0 %v2963, 32
        %v3369 = vpop.permute.xlu0 %3368
        %3370 = vrot.lane.b32.xlu0 %v2965, 32
        %v3371 = vpop.permute.xlu0 %3370
        %3372 = vrot.lane.b32.xlu0 %v2968, 32
        %v3373 = vpop.permute.xlu0 %3372
        %3374 = vrot.lane.b32.xlu0 %v2970, 32
        %v3375 = vpop.permute.xlu0 %3374
        %3376 = vrot.lane.b32.xlu0 %v2973, 32
        %v3377 = vpop.permute.xlu0 %3376
        %3378 = vrot.lane.b32.xlu0 %v2975, 32
        %v3379 = vpop.permute.xlu0 %3378
        %3380 = vrot.lane.b32.xlu0 %v2978, 32
        %v3381 = vpop.permute.xlu0 %3380
        %3382 = vrot.lane.b32.xlu0 %v2980, 32
        %v3383 = vpop.permute.xlu0 %3382
        %3384 = vrot.lane.b32.xlu0 %v2983, 32
        %v3385 = vpop.permute.xlu0 %3384
        %3386 = vrot.lane.b32.xlu0 %v2985, 32
        %v3387 = vpop.permute.xlu0 %3386
        %3388 = vrot.lane.b32.xlu0 %v2988, 32
        %v3389 = vpop.permute.xlu0 %3388
        %3390 = vrot.lane.b32.xlu0 %v2990, 32
        %v3391 = vpop.permute.xlu0 %3390
        %3392 = vrot.lane.b32.xlu0 %v2993, 32
        %v3393 = vpop.permute.xlu0 %3392
        %3394 = vrot.lane.b32.xlu0 %v2995, 32
        %v3395 = vpop.permute.xlu0 %3394
        %3396 = vrot.lane.b32.xlu0 %v2998, 32
        %v3397 = vpop.permute.xlu0 %3396
        %3398 = vrot.lane.b32.xlu0 %v3000, 32
        %v3399 = vpop.permute.xlu0 %3398
        %3400 = vrot.lane.b32.xlu0 %v3003, 32
        %v3401 = vpop.permute.xlu0 %3400
        %3402 = vrot.lane.b32.xlu0 %v3005, 32
        %v3403 = vpop.permute.xlu0 %3402
        %3404 = vrot.lane.b32.xlu0 %v3008, 32
        %v3405 = vpop.permute.xlu0 %3404
        %3406 = vrot.lane.b32.xlu0 %v3010, 32
        %v3407 = vpop.permute.xlu0 %3406
        %3408 = vrot.lane.b32.xlu0 %v3013, 32
        %v3409 = vpop.permute.xlu0 %3408
        %3410 = vrot.lane.b32.xlu0 %v3015, 32
        %v3411 = vpop.permute.xlu0 %3410
        %3412 = vrot.lane.b32.xlu0 %v3018, 32
        %v3413 = vpop.permute.xlu0 %3412
        %3414 = vrot.lane.b32.xlu0 %v3020, 32
        %v3415 = vpop.permute.xlu0 %3414
        %3416 = vrot.lane.b32.xlu0 %v3023, 32
        %v3417 = vpop.permute.xlu0 %3416
        %3418 = vrot.lane.b32.xlu0 %v3025, 32
        %v3419 = vpop.permute.xlu0 %3418
        %3420 = vrot.lane.b32.xlu0 %v3028, 32
        %v3421 = vpop.permute.xlu0 %3420
        %3422 = vrot.lane.b32.xlu0 %v3030, 32
        %v3423 = vpop.permute.xlu0 %3422
        %3424 = vrot.lane.b32.xlu0 %v3361, 32
        %v3425 = vpop.permute.xlu0 %3424
        %3426 = vrot.lane.b32.xlu0 %v3363, 32
        %v3427 = vpop.permute.xlu0 %3426
        %3460 = vst.msk [vmem:[#allocation3 + $0x8] sm:$0xff] %vm673, %v3365
        %3461 = vst.msk [vmem:[#allocation3 + $0x20] sm:$0xff] %vm673, %v3367
        %3462 = vst.msk [vmem:[#allocation3 + $0x38] sm:$0xff] %vm673, %v3369
        %3463 = vst.msk [vmem:[#allocation3 + $0x50] sm:$0xff] %vm673, %v3371
        %3464 = vst.msk [vmem:[#allocation3 + $0x68] sm:$0xff] %vm673, %v3373
        %3465 = vst.msk [vmem:[#allocation3 + $0x80] sm:$0xff] %vm673, %v3375
        %3466 = vst.msk [vmem:[#allocation3 + $0x98] sm:$0xff] %vm673, %v3377
        %3467 = vst.msk [vmem:[#allocation3 + $0xb0] sm:$0xff] %vm673, %v3379
        %3468 = vst.msk [vmem:[#allocation3 + $0xc8] sm:$0xff] %vm673, %v3381
        %3469 = vst.msk [vmem:[#allocation3 + $0xe0] sm:$0xff] %vm673, %v3383
        %3470 = vst.msk [vmem:[#allocation3 + $0xf8] sm:$0xff] %vm673, %v3385
        %3471 = vst.msk [vmem:[#allocation3 + $0x110] sm:$0xff] %vm673, %v3387
        %3472 = vst.msk [vmem:[#allocation3 + $0x128] sm:$0xff] %vm673, %v3389
        %3473 = vst.msk [vmem:[#allocation3 + $0x140] sm:$0xff] %vm673, %v3391
        %3474 = vst.msk [vmem:[#allocation3 + $0x158] sm:$0xff] %vm673, %v3393
        %3475 = vst.msk [vmem:[#allocation3 + $0x170] sm:$0xff] %vm673, %v3395
        %3476 = vst.msk [vmem:[#allocation3 + $0x188] sm:$0xff] %vm673, %v3397
        %3477 = vst.msk [vmem:[#allocation3 + $0x1a0] sm:$0xff] %vm673, %v3399
        %3478 = vst.msk [vmem:[#allocation3 + $0x1b8] sm:$0xff] %vm673, %v3401
        %3479 = vst.msk [vmem:[#allocation3 + $0x1d0] sm:$0xff] %vm673, %v3403
        %3480 = vst.msk [vmem:[#allocation3 + $0x1e8] sm:$0xff] %vm673, %v3405
        %3481 = vst.msk [vmem:[#allocation3 + $0x200] sm:$0xff] %vm673, %v3407
        %3482 = vst.msk [vmem:[#allocation3 + $0x218] sm:$0xff] %vm673, %v3409
        %3483 = vst.msk [vmem:[#allocation3 + $0x230] sm:$0xff] %vm673, %v3411
        %3484 = vst.msk [vmem:[#allocation3 + $0x248] sm:$0xff] %vm673, %v3413
        %3485 = vst.msk [vmem:[#allocation3 + $0x260] sm:$0xff] %vm673, %v3415
        %3486 = vst.msk [vmem:[#allocation3 + $0x278] sm:$0xff] %vm673, %v3417
        %3487 = vst.msk [vmem:[#allocation3 + $0x290] sm:$0xff] %vm673, %v3419
        %3488 = vst.msk [vmem:[#allocation3 + $0x2a8] sm:$0xff] %vm673, %v3421
        %3489 = vst.msk [vmem:[#allocation3 + $0x2c0] sm:$0xff] %vm673, %v3423
        %3490 = vst.msk [vmem:[#allocation3 + $0x2d8] sm:$0xff] %vm673, %v3425
        %3491 = vst.msk [vmem:[#allocation3 + $0x2f0] sm:$0xff] %vm673, %v3427
        %3494 = vrot.lane.b32.xlu0 %v2579, 64
        %v3495 = vpop.permute.xlu0 %3494
        %3496 = vrot.lane.b32.xlu0 %v2580, 64
        %v3497 = vpop.permute.xlu0 %3496
        %3498 = vrot.lane.b32.xlu0 %v2582, 64
        %v3499 = vpop.permute.xlu0 %3498
        %3500 = vrot.lane.b32.xlu0 %v2583, 64
        %v3501 = vpop.permute.xlu0 %3500
        %3502 = vrot.lane.b32.xlu0 %v2585, 64
        %v3503 = vpop.permute.xlu0 %3502
        %3504 = vrot.lane.b32.xlu0 %v2586, 64
        %v3505 = vpop.permute.xlu0 %3504
        %3506 = vrot.lane.b32.xlu0 %v2588, 64
        %v3507 = vpop.permute.xlu0 %3506
        %3508 = vrot.lane.b32.xlu0 %v2589, 64
        %v3509 = vpop.permute.xlu0 %3508
        %3510 = vrot.lane.b32.xlu0 %v2591, 64
        %v3511 = vpop.permute.xlu0 %3510
        %3512 = vrot.lane.b32.xlu0 %v2592, 64
        %v3513 = vpop.permute.xlu0 %3512
        %3514 = vrot.lane.b32.xlu0 %v2594, 64
        %v3515 = vpop.permute.xlu0 %3514
        %3516 = vrot.lane.b32.xlu0 %v2595, 64
        %v3517 = vpop.permute.xlu0 %3516
        %3518 = vrot.lane.b32.xlu0 %v2597, 64
        %v3519 = vpop.permute.xlu0 %3518
        %3520 = vrot.lane.b32.xlu0 %v2598, 64
        %v3521 = vpop.permute.xlu0 %3520
        %3522 = vrot.lane.b32.xlu0 %v2600, 64
        %v3523 = vpop.permute.xlu0 %3522
        %3524 = vrot.lane.b32.xlu0 %v2601, 64
        %v3525 = vpop.permute.xlu0 %3524
        %3526 = vrot.lane.b32.xlu0 %v2603, 64
        %v3527 = vpop.permute.xlu0 %3526
        %3528 = vrot.lane.b32.xlu0 %v2604, 64
        %v3529 = vpop.permute.xlu0 %3528
        %3530 = vrot.lane.b32.xlu0 %v2606, 64
        %v3531 = vpop.permute.xlu0 %3530
        %3532 = vrot.lane.b32.xlu0 %v2607, 64
        %v3533 = vpop.permute.xlu0 %3532
        %3534 = vrot.lane.b32.xlu0 %v2609, 64
        %v3535 = vpop.permute.xlu0 %3534
        %3536 = vrot.lane.b32.xlu0 %v2610, 64
        %v3537 = vpop.permute.xlu0 %3536
        %3538 = vrot.lane.b32.xlu0 %v2612, 64
        %v3539 = vpop.permute.xlu0 %3538
        %3540 = vrot.lane.b32.xlu0 %v2613, 64
        %v3541 = vpop.permute.xlu0 %3540
        %3542 = vrot.lane.b32.xlu0 %v2615, 64
        %v3543 = vpop.permute.xlu0 %3542
        %3544 = vrot.lane.b32.xlu0 %v2616, 64
        %v3545 = vpop.permute.xlu0 %3544
        %3546 = vrot.lane.b32.xlu0 %v2618, 64
        %v3547 = vpop.permute.xlu0 %3546
        %3548 = vrot.lane.b32.xlu0 %v2619, 64
        %v3549 = vpop.permute.xlu0 %3548
        %3550 = vrot.lane.b32.xlu0 %v2621, 64
        %v3551 = vpop.permute.xlu0 %3550
        %3552 = vrot.lane.b32.xlu0 %v2622, 64
        %v3553 = vpop.permute.xlu0 %3552
        %3554 = vrot.lane.b32.xlu0 %v2624, 64
        %v3555 = vpop.permute.xlu0 %3554
        %3556 = vrot.lane.b32.xlu0 %v2625, 64
        %v3557 = vpop.permute.xlu0 %3556
        %3590 = vst.msk [vmem:[#allocation3 + $0x8] sm:$0xff] %vm883, %v3495
        %3591 = vst.msk [vmem:[#allocation3 + $0x20] sm:$0xff] %vm883, %v3497
        %3592 = vst.msk [vmem:[#allocation3 + $0x38] sm:$0xff] %vm883, %v3499
        %3593 = vst.msk [vmem:[#allocation3 + $0x50] sm:$0xff] %vm883, %v3501
        %3594 = vst.msk [vmem:[#allocation3 + $0x68] sm:$0xff] %vm883, %v3503
        %3595 = vst.msk [vmem:[#allocation3 + $0x80] sm:$0xff] %vm883, %v3505
        %3596 = vst.msk [vmem:[#allocation3 + $0x98] sm:$0xff] %vm883, %v3507
        %3597 = vst.msk [vmem:[#allocation3 + $0xb0] sm:$0xff] %vm883, %v3509
        %3598 = vst.msk [vmem:[#allocation3 + $0xc8] sm:$0xff] %vm883, %v3511
        %3599 = vst.msk [vmem:[#allocation3 + $0xe0] sm:$0xff] %vm883, %v3513
        %3600 = vst.msk [vmem:[#allocation3 + $0xf8] sm:$0xff] %vm883, %v3515
        %3601 = vst.msk [vmem:[#allocation3 + $0x110] sm:$0xff] %vm883, %v3517
        %3602 = vst.msk [vmem:[#allocation3 + $0x128] sm:$0xff] %vm883, %v3519
        %3603 = vst.msk [vmem:[#allocation3 + $0x140] sm:$0xff] %vm883, %v3521
        %3604 = vst.msk [vmem:[#allocation3 + $0x158] sm:$0xff] %vm883, %v3523
        %3605 = vst.msk [vmem:[#allocation3 + $0x170] sm:$0xff] %vm883, %v3525
        %3606 = vst.msk [vmem:[#allocation3 + $0x188] sm:$0xff] %vm883, %v3527
        %3607 = vst.msk [vmem:[#allocation3 + $0x1a0] sm:$0xff] %vm883, %v3529
        %3608 = vst.msk [vmem:[#allocation3 + $0x1b8] sm:$0xff] %vm883, %v3531
        %3609 = vst.msk [vmem:[#allocation3 + $0x1d0] sm:$0xff] %vm883, %v3533
        %3610 = vst.msk [vmem:[#allocation3 + $0x1e8] sm:$0xff] %vm883, %v3535
        %3611 = vst.msk [vmem:[#allocation3 + $0x200] sm:$0xff] %vm883, %v3537
        %3612 = vst.msk [vmem:[#allocation3 + $0x218] sm:$0xff] %vm883, %v3539
        %3613 = vst.msk [vmem:[#allocation3 + $0x230] sm:$0xff] %vm883, %v3541
        %3614 = vst.msk [vmem:[#allocation3 + $0x248] sm:$0xff] %vm883, %v3543
        %3615 = vst.msk [vmem:[#allocation3 + $0x260] sm:$0xff] %vm883, %v3545
        %3616 = vst.msk [vmem:[#allocation3 + $0x278] sm:$0xff] %vm883, %v3547
        %3617 = vst.msk [vmem:[#allocation3 + $0x290] sm:$0xff] %vm883, %v3549
        %3618 = vst.msk [vmem:[#allocation3 + $0x2a8] sm:$0xff] %vm883, %v3551
        %3619 = vst.msk [vmem:[#allocation3 + $0x2c0] sm:$0xff] %vm883, %v3553
        %3620 = vst.msk [vmem:[#allocation3 + $0x2d8] sm:$0xff] %vm883, %v3555
        %3621 = vst.msk [vmem:[#allocation3 + $0x2f0] sm:$0xff] %vm883, %v3557
        %v3623 = vrot.slane %v2624, 1
        %v3624 = vrot.slane %v2625, 1
        %v3625 = vsel %vm496, %v3623, %v3624
        %v3626 = vrot.slane %v2626, 1
        %v3627 = vsel %vm496, %v3624, %v3626
        %3628 = vrot.lane.b32.xlu0 %v2755, 96
        %v3629 = vpop.permute.xlu0 %3628
        %3630 = vrot.lane.b32.xlu0 %v2757, 96
        %v3631 = vpop.permute.xlu0 %3630
        %3632 = vrot.lane.b32.xlu0 %v2760, 96
        %v3633 = vpop.permute.xlu0 %3632
        %3634 = vrot.lane.b32.xlu0 %v2762, 96
        %v3635 = vpop.permute.xlu0 %3634
        %3636 = vrot.lane.b32.xlu0 %v2765, 96
        %v3637 = vpop.permute.xlu0 %3636
        %3638 = vrot.lane.b32.xlu0 %v2767, 96
        %v3639 = vpop.permute.xlu0 %3638
        %3640 = vrot.lane.b32.xlu0 %v2770, 96
        %v3641 = vpop.permute.xlu0 %3640
        %3642 = vrot.lane.b32.xlu0 %v2772, 96
        %v3643 = vpop.permute.xlu0 %3642
        %3644 = vrot.lane.b32.xlu0 %v2775, 96
        %v3645 = vpop.permute.xlu0 %3644
        %3646 = vrot.lane.b32.xlu0 %v2777, 96
        %v3647 = vpop.permute.xlu0 %3646
        %3648 = vrot.lane.b32.xlu0 %v2780, 96
        %v3649 = vpop.permute.xlu0 %3648
        %3650 = vrot.lane.b32.xlu0 %v2782, 96
        %v3651 = vpop.permute.xlu0 %3650
        %3652 = vrot.lane.b32.xlu0 %v2785, 96
        %v3653 = vpop.permute.xlu0 %3652
        %3654 = vrot.lane.b32.xlu0 %v2787, 96
        %v3655 = vpop.permute.xlu0 %3654
        %3656 = vrot.lane.b32.xlu0 %v2790, 96
        %v3657 = vpop.permute.xlu0 %3656
        %3658 = vrot.lane.b32.xlu0 %v2792, 96
        %v3659 = vpop.permute.xlu0 %3658
        %3660 = vrot.lane.b32.xlu0 %v2795, 96
        %v3661 = vpop.permute.xlu0 %3660
        %3662 = vrot.lane.b32.xlu0 %v2797, 96
        %v3663 = vpop.permute.xlu0 %3662
        %3664 = vrot.lane.b32.xlu0 %v2800, 96
        %v3665 = vpop.permute.xlu0 %3664
        %3666 = vrot.lane.b32.xlu0 %v2802, 96
        %v3667 = vpop.permute.xlu0 %3666
        %3668 = vrot.lane.b32.xlu0 %v2805, 96
        %v3669 = vpop.permute.xlu0 %3668
        %3670 = vrot.lane.b32.xlu0 %v2807, 96
        %v3671 = vpop.permute.xlu0 %3670
        %3672 = vrot.lane.b32.xlu0 %v2810, 96
        %v3673 = vpop.permute.xlu0 %3672
        %3674 = vrot.lane.b32.xlu0 %v2812, 96
        %v3675 = vpop.permute.xlu0 %3674
        %3676 = vrot.lane.b32.xlu0 %v2815, 96
        %v3677 = vpop.permute.xlu0 %3676
        %3678 = vrot.lane.b32.xlu0 %v2817, 96
        %v3679 = vpop.permute.xlu0 %3678
        %3680 = vrot.lane.b32.xlu0 %v2820, 96
        %v3681 = vpop.permute.xlu0 %3680
        %3682 = vrot.lane.b32.xlu0 %v2822, 96
        %v3683 = vpop.permute.xlu0 %3682
        %3684 = vrot.lane.b32.xlu0 %v3292, 96
        %v3685 = vpop.permute.xlu0 %3684
        %3686 = vrot.lane.b32.xlu0 %v3294, 96
        %v3687 = vpop.permute.xlu0 %3686
        %3688 = vrot.lane.b32.xlu0 %v3625, 96
        %v3689 = vpop.permute.xlu0 %3688
        %3690 = vrot.lane.b32.xlu0 %v3627, 96
        %v3691 = vpop.permute.xlu0 %3690
        %3724 = vst.msk [vmem:[#allocation3 + $0x8] sm:$0xff] %vm1014, %v3629
        %3725 = vst.msk [vmem:[#allocation3 + $0x20] sm:$0xff] %vm1014, %v3631
        %3726 = vst.msk [vmem:[#allocation3 + $0x38] sm:$0xff] %vm1014, %v3633
        %3727 = vst.msk [vmem:[#allocation3 + $0x50] sm:$0xff] %vm1014, %v3635
        %3728 = vst.msk [vmem:[#allocation3 + $0x68] sm:$0xff] %vm1014, %v3637
        %3729 = vst.msk [vmem:[#allocation3 + $0x80] sm:$0xff] %vm1014, %v3639
        %3730 = vst.msk [vmem:[#allocation3 + $0x98] sm:$0xff] %vm1014, %v3641
        %3731 = vst.msk [vmem:[#allocation3 + $0xb0] sm:$0xff] %vm1014, %v3643
        %3732 = vst.msk [vmem:[#allocation3 + $0xc8] sm:$0xff] %vm1014, %v3645
        %3733 = vst.msk [vmem:[#allocation3 + $0xe0] sm:$0xff] %vm1014, %v3647
        %3734 = vst.msk [vmem:[#allocation3 + $0xf8] sm:$0xff] %vm1014, %v3649
        %3735 = vst.msk [vmem:[#allocation3 + $0x110] sm:$0xff] %vm1014, %v3651
        %3736 = vst.msk [vmem:[#allocation3 + $0x128] sm:$0xff] %vm1014, %v3653
        %3737 = vst.msk [vmem:[#allocation3 + $0x140] sm:$0xff] %vm1014, %v3655
        %3738 = vst.msk [vmem:[#allocation3 + $0x158] sm:$0xff] %vm1014, %v3657
        %3739 = vst.msk [vmem:[#allocation3 + $0x170] sm:$0xff] %vm1014, %v3659
        %3740 = vst.msk [vmem:[#allocation3 + $0x188] sm:$0xff] %vm1014, %v3661
        %3741 = vst.msk [vmem:[#allocation3 + $0x1a0] sm:$0xff] %vm1014, %v3663
        %3742 = vst.msk [vmem:[#allocation3 + $0x1b8] sm:$0xff] %vm1014, %v3665
        %3743 = vst.msk [vmem:[#allocation3 + $0x1d0] sm:$0xff] %vm1014, %v3667
        %3744 = vst.msk [vmem:[#allocation3 + $0x1e8] sm:$0xff] %vm1014, %v3669
        %3745 = vst.msk [vmem:[#allocation3 + $0x200] sm:$0xff] %vm1014, %v3671
        %3746 = vst.msk [vmem:[#allocation3 + $0x218] sm:$0xff] %vm1014, %v3673
        %3747 = vst.msk [vmem:[#allocation3 + $0x230] sm:$0xff] %vm1014, %v3675
        %3748 = vst.msk [vmem:[#allocation3 + $0x248] sm:$0xff] %vm1014, %v3677
        %3749 = vst.msk [vmem:[#allocation3 + $0x260] sm:$0xff] %vm1014, %v3679
        %3750 = vst.msk [vmem:[#allocation3 + $0x278] sm:$0xff] %vm1014, %v3681
        %3751 = vst.msk [vmem:[#allocation3 + $0x290] sm:$0xff] %vm1014, %v3683
        %3752 = vst.msk [vmem:[#allocation3 + $0x2a8] sm:$0xff] %vm1014, %v3685
        %3753 = vst.msk [vmem:[#allocation3 + $0x2c0] sm:$0xff] %vm1014, %v3687
        %3754 = vst.msk [vmem:[#allocation3 + $0x2d8] sm:$0xff] %vm1014, %v3689
        %3755 = vst.msk [vmem:[#allocation3 + $0x2f0] sm:$0xff] %vm1014, %v3691
        %v3756 = vrot.slane %v2624, 2
        %v3757 = vrot.slane %v2625, 2
        %v3758 = vsel %vm706, %v3756, %v3757
        %v3759 = vrot.slane %v2626, 2
        %v3760 = vsel %vm706, %v3757, %v3759
        %3793 = vst.msk [vmem:[#allocation3 + $0x10] sm:$0xff] %vm415, %v2963
        %3794 = vst.msk [vmem:[#allocation3 + $0x28] sm:$0xff] %vm415, %v2965
        %3795 = vst.msk [vmem:[#allocation3 + $0x40] sm:$0xff] %vm415, %v2968
        %3796 = vst.msk [vmem:[#allocation3 + $0x58] sm:$0xff] %vm415, %v2970
        %3797 = vst.msk [vmem:[#allocation3 + $0x70] sm:$0xff] %vm415, %v2973
        %3798 = vst.msk [vmem:[#allocation3 + $0x88] sm:$0xff] %vm415, %v2975
        %3799 = vst.msk [vmem:[#allocation3 + $0xa0] sm:$0xff] %vm415, %v2978
        %3800 = vst.msk [vmem:[#allocation3 + $0xb8] sm:$0xff] %vm415, %v2980
        %3801 = vst.msk [vmem:[#allocation3 + $0xd0] sm:$0xff] %vm415, %v2983
        %3802 = vst.msk [vmem:[#allocation3 + $0xe8] sm:$0xff] %vm415, %v2985
        %3803 = vst.msk [vmem:[#allocation3 + $0x100] sm:$0xff] %vm415, %v2988
        %3804 = vst.msk [vmem:[#allocation3 + $0x118] sm:$0xff] %vm415, %v2990
        %3805 = vst.msk [vmem:[#allocation3 + $0x130] sm:$0xff] %vm415, %v2993
        %3806 = vst.msk [vmem:[#allocation3 + $0x148] sm:$0xff] %vm415, %v2995
        %3807 = vst.msk [vmem:[#allocation3 + $0x160] sm:$0xff] %vm415, %v2998
        %3808 = vst.msk [vmem:[#allocation3 + $0x178] sm:$0xff] %vm415, %v3000
        %3809 = vst.msk [vmem:[#allocation3 + $0x190] sm:$0xff] %vm415, %v3003
        %3810 = vst.msk [vmem:[#allocation3 + $0x1a8] sm:$0xff] %vm415, %v3005
        %3811 = vst.msk [vmem:[#allocation3 + $0x1c0] sm:$0xff] %vm415, %v3008
        %3812 = vst.msk [vmem:[#allocation3 + $0x1d8] sm:$0xff] %vm415, %v3010
        %3813 = vst.msk [vmem:[#allocation3 + $0x1f0] sm:$0xff] %vm415, %v3013
        %3814 = vst.msk [vmem:[#allocation3 + $0x208] sm:$0xff] %vm415, %v3015
        %3815 = vst.msk [vmem:[#allocation3 + $0x220] sm:$0xff] %vm415, %v3018
        %3816 = vst.msk [vmem:[#allocation3 + $0x238] sm:$0xff] %vm415, %v3020
        %3817 = vst.msk [vmem:[#allocation3 + $0x250] sm:$0xff] %vm415, %v3023
        %3818 = vst.msk [vmem:[#allocation3 + $0x268] sm:$0xff] %vm415, %v3025
        %3819 = vst.msk [vmem:[#allocation3 + $0x280] sm:$0xff] %vm415, %v3028
        %3820 = vst.msk [vmem:[#allocation3 + $0x298] sm:$0xff] %vm415, %v3030
        %3821 = vst.msk [vmem:[#allocation3 + $0x2b0] sm:$0xff] %vm415, %v3361
        %3822 = vst.msk [vmem:[#allocation3 + $0x2c8] sm:$0xff] %vm415, %v3363
        %3823 = vst.msk [vmem:[#allocation3 + $0x2e0] sm:$0xff] %vm415, %v3758
        %3824 = vst.msk [vmem:[#allocation3 + $0x2f8] sm:$0xff] %vm415, %v3760
        %v3825 = vld [vmem:[#allocation3] sm:$0xff]
        %v3826 = vld [vmem:[#allocation3 + $0x8] sm:$0xff]
        %v3827 = vld [vmem:[#allocation3 + $0x10] sm:$0xff]
        %v3828 = vld [vmem:[#allocation3 + $0x18] sm:$0xff]
        %v3829 = vld [vmem:[#allocation3 + $0x20] sm:$0xff]
        %v3830 = vld [vmem:[#allocation3 + $0x28] sm:$0xff]
        %v3831 = vld [vmem:[#allocation3 + $0x30] sm:$0xff]
        %v3832 = vld [vmem:[#allocation3 + $0x38] sm:$0xff]
        %v3833 = vld [vmem:[#allocation3 + $0x40] sm:$0xff]
        %v3834 = vld [vmem:[#allocation3 + $0x48] sm:$0xff]
        %v3835 = vld [vmem:[#allocation3 + $0x50] sm:$0xff]
        %v3836 = vld [vmem:[#allocation3 + $0x58] sm:$0xff]
        %v3837 = vld [vmem:[#allocation3 + $0x60] sm:$0xff]
        %v3838 = vld [vmem:[#allocation3 + $0x68] sm:$0xff]
        %v3839 = vld [vmem:[#allocation3 + $0x70] sm:$0xff]
        %v3840 = vld [vmem:[#allocation3 + $0x78] sm:$0xff]
        %v3841 = vld [vmem:[#allocation3 + $0x80] sm:$0xff]
        %v3842 = vld [vmem:[#allocation3 + $0x88] sm:$0xff]
        %v3843 = vld [vmem:[#allocation3 + $0x90] sm:$0xff]
        %v3844 = vld [vmem:[#allocation3 + $0x98] sm:$0xff]
        %v3845 = vld [vmem:[#allocation3 + $0xa0] sm:$0xff]
        %v3846 = vld [vmem:[#allocation3 + $0xa8] sm:$0xff]
        %v3847 = vld [vmem:[#allocation3 + $0xb0] sm:$0xff]
        %v3848 = vld [vmem:[#allocation3 + $0xb8] sm:$0xff]
        %v3849 = vld [vmem:[#allocation3 + $0xc0] sm:$0xff]
        %v3850 = vld [vmem:[#allocation3 + $0xc8] sm:$0xff]
        %v3851 = vld [vmem:[#allocation3 + $0xd0] sm:$0xff]
        %v3852 = vld [vmem:[#allocation3 + $0xd8] sm:$0xff]
        %v3853 = vld [vmem:[#allocation3 + $0xe0] sm:$0xff]
        %v3854 = vld [vmem:[#allocation3 + $0xe8] sm:$0xff]
        %v3855 = vld [vmem:[#allocation3 + $0xf0] sm:$0xff]
        %v3856 = vld [vmem:[#allocation3 + $0xf8] sm:$0xff]
        %v3857 = vld [vmem:[#allocation3 + $0x100] sm:$0xff]
        %v3858 = vld [vmem:[#allocation3 + $0x108] sm:$0xff]
        %v3859 = vld [vmem:[#allocation3 + $0x110] sm:$0xff]
        %v3860 = vld [vmem:[#allocation3 + $0x118] sm:$0xff]
        %v3861 = vld [vmem:[#allocation3 + $0x120] sm:$0xff]
        %v3862 = vld [vmem:[#allocation3 + $0x128] sm:$0xff]
        %v3863 = vld [vmem:[#allocation3 + $0x130] sm:$0xff]
        %v3864 = vld [vmem:[#allocation3 + $0x138] sm:$0xff]
        %v3865 = vld [vmem:[#allocation3 + $0x140] sm:$0xff]
        %v3866 = vld [vmem:[#allocation3 + $0x148] sm:$0xff]
        %v3867 = vld [vmem:[#allocation3 + $0x150] sm:$0xff]
        %v3868 = vld [vmem:[#allocation3 + $0x158] sm:$0xff]
        %v3869 = vld [vmem:[#allocation3 + $0x160] sm:$0xff]
        %v3870 = vld [vmem:[#allocation3 + $0x168] sm:$0xff]
        %v3871 = vld [vmem:[#allocation3 + $0x170] sm:$0xff]
        %v3872 = vld [vmem:[#allocation3 + $0x178] sm:$0xff]
        %v3873 = vld [vmem:[#allocation3 + $0x180] sm:$0xff]
        %v3874 = vld [vmem:[#allocation3 + $0x188] sm:$0xff]
        %v3875 = vld [vmem:[#allocation3 + $0x190] sm:$0xff]
        %v3876 = vld [vmem:[#allocation3 + $0x198] sm:$0xff]
        %v3877 = vld [vmem:[#allocation3 + $0x1a0] sm:$0xff]
        %v3878 = vld [vmem:[#allocation3 + $0x1a8] sm:$0xff]
        %v3879 = vld [vmem:[#allocation3 + $0x1b0] sm:$0xff]
        %v3880 = vld [vmem:[#allocation3 + $0x1b8] sm:$0xff]
        %v3881 = vld [vmem:[#allocation3 + $0x1c0] sm:$0xff]
        %v3882 = vld [vmem:[#allocation3 + $0x1c8] sm:$0xff]
        %v3883 = vld [vmem:[#allocation3 + $0x1d0] sm:$0xff]
        %v3884 = vld [vmem:[#allocation3 + $0x1d8] sm:$0xff]
        %v3885 = vld [vmem:[#allocation3 + $0x1e0] sm:$0xff]
        %v3886 = vld [vmem:[#allocation3 + $0x1e8] sm:$0xff]
        %v3887 = vld [vmem:[#allocation3 + $0x1f0] sm:$0xff]
        %v3888 = vld [vmem:[#allocation3 + $0x1f8] sm:$0xff]
        %v3889 = vld [vmem:[#allocation3 + $0x200] sm:$0xff]
        %v3890 = vld [vmem:[#allocation3 + $0x208] sm:$0xff]
        %v3891 = vld [vmem:[#allocation3 + $0x210] sm:$0xff]
        %v3892 = vld [vmem:[#allocation3 + $0x218] sm:$0xff]
        %v3893 = vld [vmem:[#allocation3 + $0x220] sm:$0xff]
        %v3894 = vld [vmem:[#allocation3 + $0x228] sm:$0xff]
        %v3895 = vld [vmem:[#allocation3 + $0x230] sm:$0xff]
        %v3896 = vld [vmem:[#allocation3 + $0x238] sm:$0xff]
        %v3897 = vld [vmem:[#allocation3 + $0x240] sm:$0xff]
        %v3898 = vld [vmem:[#allocation3 + $0x248] sm:$0xff]
        %v3899 = vld [vmem:[#allocation3 + $0x250] sm:$0xff]
        %v3900 = vld [vmem:[#allocation3 + $0x258] sm:$0xff]
        %v3901 = vld [vmem:[#allocation3 + $0x260] sm:$0xff]
        %v3902 = vld [vmem:[#allocation3 + $0x268] sm:$0xff]
        %v3903 = vld [vmem:[#allocation3 + $0x270] sm:$0xff]
        %v3904 = vld [vmem:[#allocation3 + $0x278] sm:$0xff]
        %v3905 = vld [vmem:[#allocation3 + $0x280] sm:$0xff]
        %v3906 = vld [vmem:[#allocation3 + $0x288] sm:$0xff]
        %v3907 = vld [vmem:[#allocation3 + $0x290] sm:$0xff]
        %v3908 = vld [vmem:[#allocation3 + $0x298] sm:$0xff]
        %v3909 = vld [vmem:[#allocation3 + $0x2a0] sm:$0xff]
        %v3910 = vld [vmem:[#allocation3 + $0x2a8] sm:$0xff]
        %v3911 = vld [vmem:[#allocation3 + $0x2b0] sm:$0xff]
        %v3912 = vld [vmem:[#allocation3 + $0x2b8] sm:$0xff]
        %v3913 = vld [vmem:[#allocation3 + $0x2c0] sm:$0xff]
        %v3914 = vld [vmem:[#allocation3 + $0x2c8] sm:$0xff]
        %v3915 = vld [vmem:[#allocation3 + $0x2d0] sm:$0xff]
        %v3916 = vld [vmem:[#allocation3 + $0x2d8] sm:$0xff]
        %v3917 = vld [vmem:[#allocation3 + $0x2e0] sm:$0xff]
        %v3918 = vld [vmem:[#allocation3 + $0x2e8] sm:$0xff]
        %v3919 = vld [vmem:[#allocation3 + $0x2f0] sm:$0xff]
        %v3920 = vld [vmem:[#allocation3 + $0x2f8] sm:$0xff]
        %v3921 = vpack.c.bf16 %v3828, %v3825
        %v3922 = vpack.c.bf16 %v3829, %v3826
        %v3923 = vpack.c.bf16 %v3830, %v3827
        %v3924 = vpack.c.bf16 %v3834, %v3831
        %v3925 = vpack.c.bf16 %v3835, %v3832
        %v3926 = vpack.c.bf16 %v3836, %v3833
        %v3927 = vpack.c.bf16 %v3840, %v3837
        %v3928 = vpack.c.bf16 %v3841, %v3838
        %v3929 = vpack.c.bf16 %v3842, %v3839
        %v3930 = vpack.c.bf16 %v3846, %v3843
        %v3931 = vpack.c.bf16 %v3847, %v3844
        %v3932 = vpack.c.bf16 %v3848, %v3845
        %v3933 = vpack.c.bf16 %v3852, %v3849
        %v3934 = vpack.c.bf16 %v3853, %v3850
        %v3935 = vpack.c.bf16 %v3854, %v3851
        %v3936 = vpack.c.bf16 %v3858, %v3855
        %v3937 = vpack.c.bf16 %v3859, %v3856
        %v3938 = vpack.c.bf16 %v3860, %v3857
        %v3939 = vpack.c.bf16 %v3864, %v3861
        %v3940 = vpack.c.bf16 %v3865, %v3862
        %v3941 = vpack.c.bf16 %v3866, %v3863
        %v3942 = vpack.c.bf16 %v3870, %v3867
        %v3943 = vpack.c.bf16 %v3871, %v3868
        %v3944 = vpack.c.bf16 %v3872, %v3869
        %v3945 = vpack.c.bf16 %v3876, %v3873
        %v3946 = vpack.c.bf16 %v3877, %v3874
        %v3947 = vpack.c.bf16 %v3878, %v3875
        %v3948 = vpack.c.bf16 %v3882, %v3879
        %v3949 = vpack.c.bf16 %v3883, %v3880
        %v3950 = vpack.c.bf16 %v3884, %v3881
        %v3951 = vpack.c.bf16 %v3888, %v3885
        %v3952 = vpack.c.bf16 %v3889, %v3886
        %v3953 = vpack.c.bf16 %v3890, %v3887
        %v3954 = vpack.c.bf16 %v3894, %v3891
        %v3955 = vpack.c.bf16 %v3895, %v3892
        %v3956 = vpack.c.bf16 %v3896, %v3893
        %v3957 = vpack.c.bf16 %v3900, %v3897
        %v3958 = vpack.c.bf16 %v3901, %v3898
        %v3959 = vpack.c.bf16 %v3902, %v3899
        %v3960 = vpack.c.bf16 %v3906, %v3903
        %v3961 = vpack.c.bf16 %v3907, %v3904
        %v3962 = vpack.c.bf16 %v3908, %v3905
        %v3963 = vpack.c.bf16 %v3912, %v3909
        %v3964 = vpack.c.bf16 %v3913, %v3910
        %v3965 = vpack.c.bf16 %v3914, %v3911
        %v3966 = vpack.c.bf16 %v3918, %v3915
        %v3967 = vpack.c.bf16 %v3919, %v3916
        %v3968 = vpack.c.bf16 %v3920, %v3917
        %v4005 = vunpack.c.l.b16 %v2627
        %v4006 = vunpack.c.l.b16 %v2628
        %v4007 = vunpack.c.l.b16 %v2629
        %v4008 = vunpack.c.l.b16 %v2630
        %v4009 = vunpack.c.l.b16 %v2631
        %v4010 = vunpack.c.l.b16 %v2632
        %v4011 = vunpack.c.l.b16 %v2633
        %v4012 = vunpack.c.l.b16 %v2634
        %v4013 = vunpack.c.l.b16 %v2635
        %v4014 = vunpack.c.l.b16 %v2636
        %v4015 = vunpack.c.l.b16 %v2637
        %v4016 = vunpack.c.l.b16 %v2638
        %v4017 = vunpack.c.l.b16 %v2639
        %v4018 = vunpack.c.l.b16 %v2640
        %v4019 = vunpack.c.l.b16 %v2641
        %v4020 = vunpack.c.l.b16 %v2642
        %v4021 = vunpack.c.l.b16 %v2643
        %v4022 = vunpack.c.l.b16 %v2644
        %v4023 = vunpack.c.l.b16 %v2645
        %v4024 = vunpack.c.l.b16 %v2646
        %v4025 = vunpack.c.l.b16 %v2647
        %v4026 = vunpack.c.l.b16 %v2648
        %v4027 = vunpack.c.l.b16 %v2649
        %v4028 = vunpack.c.l.b16 %v2650
        %v4029 = vunpack.c.l.b16 %v2651
        %v4030 = vunpack.c.l.b16 %v2652
        %v4031 = vunpack.c.l.b16 %v2653
        %v4032 = vunpack.c.l.b16 %v2654
        %v4033 = vunpack.c.l.b16 %v2655
        %v4034 = vunpack.c.l.b16 %v2656
        %v4035 = vunpack.c.l.b16 %v2657
        %v4036 = vunpack.c.l.b16 %v2658
        %v4037 = vunpack.c.l.b16 %v2659
        %v4038 = vunpack.c.l.b16 %v2660
        %v4039 = vunpack.c.l.b16 %v2661
        %v4040 = vunpack.c.l.b16 %v2662
        %v4041 = vpack.c.b16 %v4006, %v4005
        %v4042 = vpack.c.b16 %v4008, %v4007
        %v4043 = vpack.c.b16 %v4010, %v4009
        %v4044 = vpack.c.b16 %v4012, %v4011
        %v4045 = vpack.c.b16 %v4014, %v4013
        %v4046 = vpack.c.b16 %v4016, %v4015
        %v4047 = vpack.c.b16 %v4018, %v4017
        %v4048 = vpack.c.b16 %v4020, %v4019
        %v4049 = vpack.c.b16 %v4022, %v4021
        %v4050 = vpack.c.b16 %v4024, %v4023
        %v4051 = vpack.c.b16 %v4026, %v4025
        %v4052 = vpack.c.b16 %v4028, %v4027
        %v4053 = vpack.c.b16 %v4030, %v4029
        %v4054 = vpack.c.b16 %v4032, %v4031
        %v4055 = vpack.c.b16 %v4034, %v4033
        %v4056 = vpack.c.b16 %v4036, %v4035
        %v4057 = vpack.c.b16 %v4038, %v4037
        %v4058 = vpack.c.b16 %v4040, %v4039
        %v4078 = vsel %vm415, %v3923, 0
        %v4081 = vsel %vm415, %v3926, 0
        %v4084 = vsel %vm415, %v3929, 0
        %v4087 = vsel %vm415, %v3932, 0
        %v4090 = vsel %vm415, %v3935, 0
        %v4093 = vsel %vm415, %v3938, 0
        %v4096 = vsel %vm415, %v3941, 0
        %v4099 = vsel %vm415, %v3944, 0
        %v4102 = vsel %vm415, %v3947, 0
        %v4105 = vsel %vm415, %v3950, 0
        %v4108 = vsel %vm415, %v3953, 0
        %v4111 = vsel %vm415, %v3956, 0
        %v4114 = vsel %vm415, %v3959, 0
        %v4117 = vsel %vm415, %v3962, 0
        %v4120 = vsel %vm415, %v3965, 0
        %v4123 = vsel %vm415, %v3968, 0
        %4125 = vmatprep.subr.bf16.mxu0 0
        %4126 = vmatpush1.bf16.msra.mxu0 %v4041
        %4127 = vmatprep.subr.bf16.mxu0 0
        %4128 = vmatpush1.bf16.msra.mxu0 %v4042
        %4129 = vmatprep.subr.bf16.mxu0 0
        %4130 = vmatpush1.bf16.msra.mxu0 %v4043
        %4131 = vmatprep.subr.bf16.mxu0 0
        %4132 = vmatpush1.bf16.msra.mxu0 %v4044
        %4133 = vmatprep.subr.bf16.mxu0 0
        %4134 = vmatpush1.bf16.msra.mxu0 %v4045
        %4135 = vmatprep.subr.bf16.mxu0 0
        %4136 = vmatpush1.bf16.msra.mxu0 %v4046
        %4137 = vmatprep.subr.bf16.mxu0 0
        %4138 = vmatpush1.bf16.msra.mxu0 %v4047
        %4139 = vmatprep.subr.bf16.mxu0 0
        %4140 = vmatpush1.bf16.msra.mxu0 %v4048
        %4141 = vmatprep.subr.bf16.mxu0 0
        %4142 = vmatpush1.bf16.msra.mxu0 %v4049
        %4143 = vmatprep.subr.bf16.mxu0 0
        %4144 = vmatpush1.bf16.msra.mxu0 %v4050
        %4145 = vmatprep.subr.bf16.mxu0 0
        %4146 = vmatpush1.bf16.msra.mxu0 %v4051
        %4147 = vmatprep.subr.bf16.mxu0 0
        %4148 = vmatpush1.bf16.msra.mxu0 %v4052
        %4149 = vmatprep.subr.bf16.mxu0 0
        %4150 = vmatpush1.bf16.msra.mxu0 %v4053
        %4151 = vmatprep.subr.bf16.mxu0 0
        %4152 = vmatpush1.bf16.msra.mxu0 %v4054
        %4153 = vmatprep.subr.bf16.mxu0 0
        %4154 = vmatpush1.bf16.msra.mxu0 %v4055
        %4155 = vmatprep.subr.bf16.mxu0 0
        %4156 = vmatpush1.bf16.msra.mxu0 %v4056
        %4157 = vmatprep.mubr.bf16.mxu0 %v3922
        %4158 = vmatmul.mubr.bf16.gmra.mrb[0].mxu0 %v3921
        %v4159 = vpop.f32.mrb[0].mxu0
        %v4160 = vadd.f32 0.0, %v4159
        %v4161 = vpop.f32.mrb[0].mxu0
        %v4162 = vpop.f32.mrb[0].mxu0
        %v4163 = vadd.f32 0.0, %v4162
        %v4164 = vpop.f32.mrb[0].mxu0
        %4165 = vmatprep.mubr.bf16.mxu0 %v3925
        %4166 = vmatmul.mubr.bf16.gmra.mrb[0].mxu0 %v3924
        %v4167 = vpop.f32.mrb[0].mxu0
        %v4168 = vadd.f32 0.0, %v4167
        %v4169 = vpop.f32.mrb[0].mxu0
        %v4170 = vpop.f32.mrb[0].mxu0
        %v4171 = vadd.f32 0.0, %v4170
        %v4172 = vpop.f32.mrb[0].mxu0
        %4173 = vmatprep.mubr.bf16.mxu0 %v3928
        %4174 = vmatmul.mubr.bf16.gmra.mrb[0].mxu0 %v3927
        %v4175 = vpop.f32.mrb[0].mxu0
        %v4176 = vadd.f32 0.0, %v4175
        %v4177 = vpop.f32.mrb[0].mxu0
        %v4178 = vpop.f32.mrb[0].mxu0
        %v4179 = vadd.f32 0.0, %v4178
        %v4180 = vpop.f32.mrb[0].mxu0
        %4181 = vmatprep.mubr.bf16.mxu0 %v3931
        %4182 = vmatmul.mubr.bf16.gmra.mrb[0].mxu0 %v3930
        %v4183 = vpop.f32.mrb[0].mxu0
        %v4184 = vadd.f32 0.0, %v4183
        %v4185 = vpop.f32.mrb[0].mxu0
        %v4186 = vpop.f32.mrb[0].mxu0
        %v4187 = vadd.f32 0.0, %v4186
        %v4188 = vpop.f32.mrb[0].mxu0
        %4189 = vmatprep.mubr.bf16.mxu0 %v3934
        %4190 = vmatmul.mubr.bf16.gmra.mrb[0].mxu0 %v3933
        %v4191 = vpop.f32.mrb[0].mxu0
        %v4192 = vadd.f32 0.0, %v4191
        %v4193 = vpop.f32.mrb[0].mxu0
        %v4194 = vpop.f32.mrb[0].mxu0
        %v4195 = vadd.f32 0.0, %v4194
        %v4196 = vpop.f32.mrb[0].mxu0
        %4197 = vmatprep.mubr.bf16.mxu0 %v3937
        %4198 = vmatmul.mubr.bf16.gmra.mrb[0].mxu0 %v3936
        %v4199 = vpop.f32.mrb[0].mxu0
        %v4200 = vadd.f32 0.0, %v4199
        %v4201 = vpop.f32.mrb[0].mxu0
        %v4202 = vpop.f32.mrb[0].mxu0
        %v4203 = vadd.f32 0.0, %v4202
        %v4204 = vpop.f32.mrb[0].mxu0
        %4205 = vmatprep.mubr.bf16.mxu0 %v3940
        %4206 = vmatmul.mubr.bf16.gmra.mrb[0].mxu0 %v3939
        %v4207 = vpop.f32.mrb[0].mxu0
        %v4208 = vadd.f32 0.0, %v4207
        %v4209 = vpop.f32.mrb[0].mxu0
        %v4210 = vpop.f32.mrb[0].mxu0
        %v4211 = vadd.f32 0.0, %v4210
        %v4212 = vpop.f32.mrb[0].mxu0
        %4213 = vmatprep.mubr.bf16.mxu0 %v3943
        %4214 = vmatmul.mubr.bf16.gmra.mrb[0].mxu0 %v3942
        %v4215 = vpop.f32.mrb[0].mxu0
        %v4216 = vadd.f32 0.0, %v4215
        %v4217 = vpop.f32.mrb[0].mxu0
        %v4218 = vpop.f32.mrb[0].mxu0
        %v4219 = vadd.f32 0.0, %v4218
        %v4220 = vpop.f32.mrb[0].mxu0
        %4221 = vmatprep.mubr.bf16.mxu0 %v3946
        %4222 = vmatmul.mubr.bf16.gmra.mrb[0].mxu0 %v3945
        %v4223 = vpop.f32.mrb[0].mxu0
        %v4224 = vadd.f32 0.0, %v4223
        %v4225 = vpop.f32.mrb[0].mxu0
        %v4226 = vpop.f32.mrb[0].mxu0
        %v4227 = vadd.f32 0.0, %v4226
        %v4228 = vpop.f32.mrb[0].mxu0
        %4229 = vmatprep.mubr.bf16.mxu0 %v3949
        %4230 = vmatmul.mubr.bf16.gmra.mrb[0].mxu0 %v3948
        %v4231 = vpop.f32.mrb[0].mxu0
        %v4232 = vadd.f32 0.0, %v4231
        %v4233 = vpop.f32.mrb[0].mxu0
        %v4234 = vpop.f32.mrb[0].mxu0
        %v4235 = vadd.f32 0.0, %v4234
        %v4236 = vpop.f32.mrb[0].mxu0
        %4237 = vmatprep.mubr.bf16.mxu0 %v3952
        %4238 = vmatmul.mubr.bf16.gmra.mrb[0].mxu0 %v3951
        %v4239 = vpop.f32.mrb[0].mxu0
        %v4240 = vadd.f32 0.0, %v4239
        %v4241 = vpop.f32.mrb[0].mxu0
        %v4242 = vpop.f32.mrb[0].mxu0
        %v4243 = vadd.f32 0.0, %v4242
        %v4244 = vpop.f32.mrb[0].mxu0
        %4245 = vmatprep.mubr.bf16.mxu0 %v3955
        %4246 = vmatmul.mubr.bf16.gmra.mrb[0].mxu0 %v3954
        %v4247 = vpop.f32.mrb[0].mxu0
        %v4248 = vadd.f32 0.0, %v4247
        %v4249 = vpop.f32.mrb[0].mxu0
        %v4250 = vpop.f32.mrb[0].mxu0
        %v4251 = vadd.f32 0.0, %v4250
        %v4252 = vpop.f32.mrb[0].mxu0
        %4253 = vmatprep.mubr.bf16.mxu0 %v3958
        %4254 = vmatmul.mubr.bf16.gmra.mrb[0].mxu0 %v3957
        %v4255 = vpop.f32.mrb[0].mxu0
        %v4256 = vadd.f32 0.0, %v4255
        %v4257 = vpop.f32.mrb[0].mxu0
        %v4258 = vpop.f32.mrb[0].mxu0
        %v4259 = vadd.f32 0.0, %v4258
        %v4260 = vpop.f32.mrb[0].mxu0
        %4261 = vmatprep.mubr.bf16.mxu0 %v3961
        %4262 = vmatmul.mubr.bf16.gmra.mrb[0].mxu0 %v3960
        %v4263 = vpop.f32.mrb[0].mxu0
        %v4264 = vadd.f32 0.0, %v4263
        %v4265 = vpop.f32.mrb[0].mxu0
        %v4266 = vpop.f32.mrb[0].mxu0
        %v4267 = vadd.f32 0.0, %v4266
        %v4268 = vpop.f32.mrb[0].mxu0
        %4269 = vmatprep.mubr.bf16.mxu0 %v3964
        %4270 = vmatmul.mubr.bf16.gmra.mrb[0].mxu0 %v3963
        %v4271 = vpop.f32.mrb[0].mxu0
        %v4272 = vadd.f32 0.0, %v4271
        %v4273 = vpop.f32.mrb[0].mxu0
        %v4274 = vpop.f32.mrb[0].mxu0
        %v4275 = vadd.f32 0.0, %v4274
        %v4276 = vpop.f32.mrb[0].mxu0
        %4277 = vmatprep.mubr.bf16.mxu0 %v3967
        %4278 = vmatmul.mubr.bf16.gmra.mrb[0].mxu0 %v3966
        %v4279 = vpop.f32.mrb[0].mxu0
        %v4280 = vadd.f32 0.0, %v4279
        %v4281 = vpop.f32.mrb[0].mxu0
        %v4282 = vpop.f32.mrb[0].mxu0
        %v4283 = vadd.f32 0.0, %v4282
        %v4284 = vpop.f32.mrb[0].mxu0
        %4285 = vdwg.mxu0
        %4286 = vmatprep.subr.bf16.mxu0 0
        %4287 = vmatpush1.bf16.msra.mxu0 %v4057
        %4288 = vmatprep.subr.bf16.mxu0 0
        %4289 = vmatpush1.bf16.msra.mxu0 %v4058
        %4290 = vmatprep.subr.bf16.mxu0 0
        %4291 = vmatpush1.bf16.msra.mxu0 0
        %4292 = vmatprep.subr.bf16.mxu0 0
        %4293 = vmatpush1.bf16.msra.mxu0 0
        %4294 = vmatprep.subr.bf16.mxu0 0
        %4295 = vmatpush1.bf16.msra.mxu0 0
        %4296 = vmatprep.subr.bf16.mxu0 0
        %4297 = vmatpush1.bf16.msra.mxu0 0
        %4298 = vmatprep.subr.bf16.mxu0 0
        %4299 = vmatpush1.bf16.msra.mxu0 0
        %4300 = vmatprep.subr.bf16.mxu0 0
        %4301 = vmatpush1.bf16.msra.mxu0 0
        %4302 = vmatprep.subr.bf16.mxu0 0
        %4303 = vmatpush1.bf16.msra.mxu0 0
        %4304 = vmatprep.subr.bf16.mxu0 0
        %4305 = vmatpush1.bf16.msra.mxu0 0
        %4306 = vmatprep.subr.bf16.mxu0 0
        %4307 = vmatpush1.bf16.msra.mxu0 0
        %4308 = vmatprep.subr.bf16.mxu0 0
        %4309 = vmatpush1.bf16.msra.mxu0 0
        %4310 = vmatprep.subr.bf16.mxu0 0
        %4311 = vmatpush1.bf16.msra.mxu0 0
        %4312 = vmatprep.subr.bf16.mxu0 0
        %4313 = vmatpush1.bf16.msra.mxu0 0
        %4314 = vmatprep.subr.bf16.mxu0 0
        %4315 = vmatpush1.bf16.msra.mxu0 0
        %4316 = vmatprep.subr.bf16.mxu0 0
        %4317 = vmatpush1.bf16.msra.mxu0 0
        %4318 = vmatprep.mubr.bf16.mxu0 0
        %4319 = vmatmul.mubr.bf16.gmra.mrb[0].mxu0 %v4078
        %v4320 = vpop.f32.mrb[0].mxu0
        %v4321 = vadd.f32 %v4160, %v4320
        %v4322 = vpop.f32.mrb[0].mxu0
        %v4323 = vpop.f32.mrb[0].mxu0
        %v4324 = vadd.f32 %v4163, %v4323
        %v4325 = vpop.f32.mrb[0].mxu0
        %4326 = vmatprep.mubr.bf16.mxu0 0
        %4327 = vmatmul.mubr.bf16.gmra.mrb[0].mxu0 %v4081
        %v4328 = vpop.f32.mrb[0].mxu0
        %v4329 = vadd.f32 %v4168, %v4328
        %v4330 = vpop.f32.mrb[0].mxu0
        %v4331 = vpop.f32.mrb[0].mxu0
        %v4332 = vadd.f32 %v4171, %v4331
        %v4333 = vpop.f32.mrb[0].mxu0
        %4334 = vmatprep.mubr.bf16.mxu0 0
        %4335 = vmatmul.mubr.bf16.gmra.mrb[0].mxu0 %v4084
        %v4336 = vpop.f32.mrb[0].mxu0
        %v4337 = vadd.f32 %v4176, %v4336
        %v4338 = vpop.f32.mrb[0].mxu0
        %v4339 = vpop.f32.mrb[0].mxu0
        %v4340 = vadd.f32 %v4179, %v4339
        %v4341 = vpop.f32.mrb[0].mxu0
        %4342 = vmatprep.mubr.bf16.mxu0 0
        %4343 = vmatmul.mubr.bf16.gmra.mrb[0].mxu0 %v4087
        %v4344 = vpop.f32.mrb[0].mxu0
        %v4345 = vadd.f32 %v4184, %v4344
        %v4346 = vpop.f32.mrb[0].mxu0
        %v4347 = vpop.f32.mrb[0].mxu0
        %v4348 = vadd.f32 %v4187, %v4347
        %v4349 = vpop.f32.mrb[0].mxu0
        %4350 = vmatprep.mubr.bf16.mxu0 0
        %4351 = vmatmul.mubr.bf16.gmra.mrb[0].mxu0 %v4090
        %v4352 = vpop.f32.mrb[0].mxu0
        %v4353 = vadd.f32 %v4192, %v4352
        %v4354 = vpop.f32.mrb[0].mxu0
        %v4355 = vpop.f32.mrb[0].mxu0
        %v4356 = vadd.f32 %v4195, %v4355
        %v4357 = vpop.f32.mrb[0].mxu0
        %4358 = vmatprep.mubr.bf16.mxu0 0
        %4359 = vmatmul.mubr.bf16.gmra.mrb[0].mxu0 %v4093
        %v4360 = vpop.f32.mrb[0].mxu0
        %v4361 = vadd.f32 %v4200, %v4360
        %v4362 = vpop.f32.mrb[0].mxu0
        %v4363 = vpop.f32.mrb[0].mxu0
        %v4364 = vadd.f32 %v4203, %v4363
        %v4365 = vpop.f32.mrb[0].mxu0
        %4366 = vmatprep.mubr.bf16.mxu0 0
        %4367 = vmatmul.mubr.bf16.gmra.mrb[0].mxu0 %v4096
        %v4368 = vpop.f32.mrb[0].mxu0
        %v4369 = vadd.f32 %v4208, %v4368
        %v4370 = vpop.f32.mrb[0].mxu0
        %v4371 = vpop.f32.mrb[0].mxu0
        %v4372 = vadd.f32 %v4211, %v4371
        %v4373 = vpop.f32.mrb[0].mxu0
        %4374 = vmatprep.mubr.bf16.mxu0 0
        %4375 = vmatmul.mubr.bf16.gmra.mrb[0].mxu0 %v4099
        %v4376 = vpop.f32.mrb[0].mxu0
        %v4377 = vadd.f32 %v4216, %v4376
        %v4378 = vpop.f32.mrb[0].mxu0
        %v4379 = vpop.f32.mrb[0].mxu0
        %v4380 = vadd.f32 %v4219, %v4379
        %v4381 = vpop.f32.mrb[0].mxu0
        %4382 = vmatprep.mubr.bf16.mxu0 0
        %4383 = vmatmul.mubr.bf16.gmra.mrb[0].mxu0 %v4102
        %v4384 = vpop.f32.mrb[0].mxu0
        %v4385 = vadd.f32 %v4224, %v4384
        %v4386 = vpop.f32.mrb[0].mxu0
        %v4387 = vpop.f32.mrb[0].mxu0
        %v4388 = vadd.f32 %v4227, %v4387
        %v4389 = vpop.f32.mrb[0].mxu0
        %4390 = vmatprep.mubr.bf16.mxu0 0
        %4391 = vmatmul.mubr.bf16.gmra.mrb[0].mxu0 %v4105
        %v4392 = vpop.f32.mrb[0].mxu0
        %v4393 = vadd.f32 %v4232, %v4392
        %v4394 = vpop.f32.mrb[0].mxu0
        %v4395 = vpop.f32.mrb[0].mxu0
        %v4396 = vadd.f32 %v4235, %v4395
        %v4397 = vpop.f32.mrb[0].mxu0
        %4398 = vmatprep.mubr.bf16.mxu0 0
        %4399 = vmatmul.mubr.bf16.gmra.mrb[0].mxu0 %v4108
        %v4400 = vpop.f32.mrb[0].mxu0
        %v4401 = vadd.f32 %v4240, %v4400
        %v4402 = vpop.f32.mrb[0].mxu0
        %v4403 = vpop.f32.mrb[0].mxu0
        %v4404 = vadd.f32 %v4243, %v4403
        %v4405 = vpop.f32.mrb[0].mxu0
        %4406 = vmatprep.mubr.bf16.mxu0 0
        %4407 = vmatmul.mubr.bf16.gmra.mrb[0].mxu0 %v4111
        %v4408 = vpop.f32.mrb[0].mxu0
        %v4409 = vadd.f32 %v4248, %v4408
        %v4410 = vpop.f32.mrb[0].mxu0
        %v4411 = vpop.f32.mrb[0].mxu0
        %v4412 = vadd.f32 %v4251, %v4411
        %v4413 = vpop.f32.mrb[0].mxu0
        %4414 = vmatprep.mubr.bf16.mxu0 0
        %4415 = vmatmul.mubr.bf16.gmra.mrb[0].mxu0 %v4114
        %v4416 = vpop.f32.mrb[0].mxu0
        %v4417 = vadd.f32 %v4256, %v4416
        %v4418 = vpop.f32.mrb[0].mxu0
        %v4419 = vpop.f32.mrb[0].mxu0
        %v4420 = vadd.f32 %v4259, %v4419
        %v4421 = vpop.f32.mrb[0].mxu0
        %4422 = vmatprep.mubr.bf16.mxu0 0
        %4423 = vmatmul.mubr.bf16.gmra.mrb[0].mxu0 %v4117
        %v4424 = vpop.f32.mrb[0].mxu0
        %v4425 = vadd.f32 %v4264, %v4424
        %v4426 = vpop.f32.mrb[0].mxu0
        %v4427 = vpop.f32.mrb[0].mxu0
        %v4428 = vadd.f32 %v4267, %v4427
        %v4429 = vpop.f32.mrb[0].mxu0
        %4430 = vmatprep.mubr.bf16.mxu0 0
        %4431 = vmatmul.mubr.bf16.gmra.mrb[0].mxu0 %v4120
        %v4432 = vpop.f32.mrb[0].mxu0
        %v4433 = vadd.f32 %v4272, %v4432
        %v4434 = vpop.f32.mrb[0].mxu0
        %v4435 = vpop.f32.mrb[0].mxu0
        %v4436 = vadd.f32 %v4275, %v4435
        %v4437 = vpop.f32.mrb[0].mxu0
        %4438 = vmatprep.mubr.bf16.mxu0 0
        %4439 = vmatmul.mubr.bf16.gmra.mrb[0].mxu0 %v4123
        %v4440 = vpop.f32.mrb[0].mxu0
        %v4441 = vadd.f32 %v4280, %v4440
        %v4442 = vpop.f32.mrb[0].mxu0
        %v4443 = vpop.f32.mrb[0].mxu0
        %v4444 = vadd.f32 %v4283, %v4443
        %v4445 = vpop.f32.mrb[0].mxu0
        %4446 = vdwg.mxu0
        %v4447 = vld [vmem:[%s6] sm:$0x1]
        %v4448 = vld [vmem:[%s7] sm:$0x1]
        %v4449 = vsel %vm415, %v4321, 0.0
        %v4450 = vsel %vm415, %v4324, 0.0
        %v4451 = vadd.f32 %v4449, %v4450
        %v4452 = vsel %vm415, %v4329, 0.0
        %v4453 = vadd.f32 %v4451, %v4452
        %v4454 = vsel %vm415, %v4332, 0.0
        %v4455 = vadd.f32 %v4453, %v4454
        %v4456 = vsel %vm415, %v4337, 0.0
        %v4457 = vadd.f32 %v4455, %v4456
        %v4458 = vsel %vm415, %v4340, 0.0
        %v4459 = vadd.f32 %v4457, %v4458
        %v4460 = vsel %vm415, %v4345, 0.0
        %v4461 = vadd.f32 %v4459, %v4460
        %v4462 = vsel %vm415, %v4348, 0.0
        %v4463 = vadd.f32 %v4461, %v4462
        %v4464 = vsel %vm415, %v4353, 0.0
        %v4465 = vadd.f32 %v4463, %v4464
        %v4466 = vsel %vm415, %v4356, 0.0
        %v4467 = vadd.f32 %v4465, %v4466
        %v4468 = vsel %vm415, %v4361, 0.0
        %v4469 = vadd.f32 %v4467, %v4468
        %v4470 = vsel %vm415, %v4364, 0.0
        %v4471 = vadd.f32 %v4469, %v4470
        %v4472 = vsel %vm415, %v4369, 0.0
        %v4473 = vadd.f32 %v4471, %v4472
        %v4474 = vsel %vm415, %v4372, 0.0
        %v4475 = vadd.f32 %v4473, %v4474
        %v4476 = vsel %vm415, %v4377, 0.0
        %v4477 = vadd.f32 %v4475, %v4476
        %v4478 = vsel %vm415, %v4380, 0.0
        %v4479 = vadd.f32 %v4477, %v4478
        %v4480 = vsel %vm415, %v4385, 0.0
        %v4481 = vadd.f32 %v4479, %v4480
        %v4482 = vsel %vm415, %v4388, 0.0
        %v4483 = vadd.f32 %v4481, %v4482
        %v4484 = vsel %vm415, %v4393, 0.0
        %v4485 = vadd.f32 %v4483, %v4484
        %v4486 = vsel %vm415, %v4396, 0.0
        %v4487 = vadd.f32 %v4485, %v4486
        %v4488 = vsel %vm415, %v4401, 0.0
        %v4489 = vadd.f32 %v4487, %v4488
        %v4490 = vsel %vm415, %v4404, 0.0
        %v4491 = vadd.f32 %v4489, %v4490
        %v4492 = vsel %vm415, %v4409, 0.0
        %v4493 = vadd.f32 %v4491, %v4492
        %v4494 = vsel %vm415, %v4412, 0.0
        %v4495 = vadd.f32 %v4493, %v4494
        %v4496 = vsel %vm415, %v4417, 0.0
        %v4497 = vadd.f32 %v4495, %v4496
        %v4498 = vsel %vm415, %v4420, 0.0
        %v4499 = vadd.f32 %v4497, %v4498
        %v4500 = vsel %vm415, %v4425, 0.0
        %v4501 = vadd.f32 %v4499, %v4500
        %v4502 = vsel %vm415, %v4428, 0.0
        %v4503 = vadd.f32 %v4501, %v4502
        %v4504 = vsel %vm415, %v4433, 0.0
        %v4505 = vadd.f32 %v4503, %v4504
        %v4506 = vsel %vm415, %v4436, 0.0
        %v4507 = vadd.f32 %v4505, %v4506
        %v4508 = vsel %vm415, %v4441, 0.0
        %v4509 = vadd.f32 %v4507, %v4508
        %v4510 = vsel %vm415, %v4444, 0.0
        %v4511 = vadd.f32 %v4509, %v4510
        %v4512 = vrot.slane %v4511, 4
        %v4513 = vadd.f32 %v4511, %v4512
        %v4514 = vrot.slane %v4513, 2
        %v4515 = vadd.f32 %v4513, %v4514
        %v4516 = vrot.slane %v4515, 1
        %v4517 = vadd.f32 %v4515, %v4516
        %v4518 = vmul.f32 %v4321, %v4321
        %v4519 = vmul.f32 %v4324, %v4324
        %v4520 = vmul.f32 %v4329, %v4329
        %v4521 = vmul.f32 %v4332, %v4332
        %v4522 = vmul.f32 %v4337, %v4337
        %v4523 = vmul.f32 %v4340, %v4340
        %v4524 = vmul.f32 %v4345, %v4345
        %v4525 = vmul.f32 %v4348, %v4348
        %v4526 = vmul.f32 %v4353, %v4353
        %v4527 = vmul.f32 %v4356, %v4356
        %v4528 = vmul.f32 %v4361, %v4361
        %v4529 = vmul.f32 %v4364, %v4364
        %v4530 = vmul.f32 %v4369, %v4369
        %v4531 = vmul.f32 %v4372, %v4372
        %v4532 = vmul.f32 %v4377, %v4377
        %v4533 = vmul.f32 %v4380, %v4380
        %v4534 = vmul.f32 %v4385, %v4385
        %v4535 = vmul.f32 %v4388, %v4388
        %v4536 = vmul.f32 %v4393, %v4393
        %v4537 = vmul.f32 %v4396, %v4396
        %v4538 = vmul.f32 %v4401, %v4401
        %v4539 = vmul.f32 %v4404, %v4404
        %v4540 = vmul.f32 %v4409, %v4409
        %v4541 = vmul.f32 %v4412, %v4412
        %v4542 = vmul.f32 %v4417, %v4417
        %v4543 = vmul.f32 %v4420, %v4420
        %v4544 = vmul.f32 %v4425, %v4425
        %v4545 = vmul.f32 %v4428, %v4428
        %v4546 = vmul.f32 %v4433, %v4433
        %v4547 = vmul.f32 %v4436, %v4436
        %v4548 = vmul.f32 %v4441, %v4441
        %v4549 = vmul.f32 %v4444, %v4444
        %v4550 = vsel %vm415, %v4518, 0.0
        %v4551 = vsel %vm415, %v4519, 0.0
        %v4552 = vadd.f32 %v4550, %v4551
        %v4553 = vsel %vm415, %v4520, 0.0
        %v4554 = vadd.f32 %v4552, %v4553
        %v4555 = vsel %vm415, %v4521, 0.0
        %v4556 = vadd.f32 %v4554, %v4555
        %v4557 = vsel %vm415, %v4522, 0.0
        %v4558 = vadd.f32 %v4556, %v4557
        %v4559 = vsel %vm415, %v4523, 0.0
        %v4560 = vadd.f32 %v4558, %v4559
        %v4561 = vsel %vm415, %v4524, 0.0
        %v4562 = vadd.f32 %v4560, %v4561
        %v4563 = vsel %vm415, %v4525, 0.0
        %v4564 = vadd.f32 %v4562, %v4563
        %v4565 = vsel %vm415, %v4526, 0.0
        %v4566 = vadd.f32 %v4564, %v4565
        %v4567 = vsel %vm415, %v4527, 0.0
        %v4568 = vadd.f32 %v4566, %v4567
        %v4569 = vsel %vm415, %v4528, 0.0
        %v4570 = vadd.f32 %v4568, %v4569
        %v4571 = vsel %vm415, %v4529, 0.0
        %v4572 = vadd.f32 %v4570, %v4571
        %v4573 = vsel %vm415, %v4530, 0.0
        %v4574 = vadd.f32 %v4572, %v4573
        %v4575 = vsel %vm415, %v4531, 0.0
        %v4576 = vadd.f32 %v4574, %v4575
        %v4577 = vsel %vm415, %v4532, 0.0
        %v4578 = vadd.f32 %v4576, %v4577
        %v4579 = vsel %vm415, %v4533, 0.0
        %v4580 = vadd.f32 %v4578, %v4579
        %v4581 = vsel %vm415, %v4534, 0.0
        %v4582 = vadd.f32 %v4580, %v4581
        %v4583 = vsel %vm415, %v4535, 0.0
        %v4584 = vadd.f32 %v4582, %v4583
        %v4585 = vsel %vm415, %v4536, 0.0
        %v4586 = vadd.f32 %v4584, %v4585
        %v4587 = vsel %vm415, %v4537, 0.0
        %v4588 = vadd.f32 %v4586, %v4587
        %v4589 = vsel %vm415, %v4538, 0.0
        %v4590 = vadd.f32 %v4588, %v4589
        %v4591 = vsel %vm415, %v4539, 0.0
        %v4592 = vadd.f32 %v4590, %v4591
        %v4593 = vsel %vm415, %v4540, 0.0
        %v4594 = vadd.f32 %v4592, %v4593
        %v4595 = vsel %vm415, %v4541, 0.0
        %v4596 = vadd.f32 %v4594, %v4595
        %v4597 = vsel %vm415, %v4542, 0.0
        %v4598 = vadd.f32 %v4596, %v4597
        %v4599 = vsel %vm415, %v4543, 0.0
        %v4600 = vadd.f32 %v4598, %v4599
        %v4601 = vsel %vm415, %v4544, 0.0
        %v4602 = vadd.f32 %v4600, %v4601
        %v4603 = vsel %vm415, %v4545, 0.0
        %v4604 = vadd.f32 %v4602, %v4603
        %v4605 = vsel %vm415, %v4546, 0.0
        %v4606 = vadd.f32 %v4604, %v4605
        %v4607 = vsel %vm415, %v4547, 0.0
        %v4608 = vadd.f32 %v4606, %v4607
        %v4609 = vsel %vm415, %v4548, 0.0
        %v4610 = vadd.f32 %v4608, %v4609
        %v4611 = vsel %vm415, %v4549, 0.0
        %v4612 = vadd.f32 %v4610, %v4611
        %v4613 = vrot.slane %v4612, 4
        %v4614 = vadd.f32 %v4612, %v4613
        %v4615 = vrot.slane %v4614, 2
        %v4616 = vadd.f32 %v4614, %v4615
        %v4617 = vrot.slane %v4616, 1
        %v4618 = vadd.f32 %v4616, %v4617
        %v4619 = vmul.f32 %v4517, 0.00390625
        %v4620 = vmul.f32 %v4618, 0.00390625
        %v4621 = vmul.f32 %v4619, %v4619
        %v4622 = vsub.f32 %v4620, %v4621
        %v4623 = vmax.f32 %v4622, 0.0
        %v4624 = vadd.f32 %v4623, 1e-05
        %v4625 = vrsqrt.pop %v4624
        %v4626 = vmul.f32 %v4447, %v4625
        %v4627 = vmul.f32 %v4619, %v4626
        %v4628 = vsub.f32 %v4448, %v4627
        %v4630 = vlaneseq
        %v4631 = vshrl.u32 %v4630, 7
        %v4632 = vsub.s32 0, %v4631
        %v4633 = vrot.slane %v4626, %v4632
        %v4635 = vmul.f32 %v4321, %v4633
        %v4636 = vmul.f32 %v4324, %v4633
        %v4637 = vmul.f32 %v4329, %v4633
        %v4638 = vmul.f32 %v4332, %v4633
        %v4639 = vmul.f32 %v4337, %v4633
        %v4640 = vmul.f32 %v4340, %v4633
        %v4641 = vmul.f32 %v4345, %v4633
        %v4642 = vmul.f32 %v4348, %v4633
        %v4643 = vmul.f32 %v4353, %v4633
        %v4644 = vmul.f32 %v4356, %v4633
        %v4645 = vmul.f32 %v4361, %v4633
        %v4646 = vmul.f32 %v4364, %v4633
        %v4647 = vmul.f32 %v4369, %v4633
        %v4648 = vmul.f32 %v4372, %v4633
        %v4649 = vmul.f32 %v4377, %v4633
        %v4650 = vmul.f32 %v4380, %v4633
        %v4651 = vmul.f32 %v4385, %v4633
        %v4652 = vmul.f32 %v4388, %v4633
        %v4653 = vmul.f32 %v4393, %v4633
        %v4654 = vmul.f32 %v4396, %v4633
        %v4655 = vmul.f32 %v4401, %v4633
        %v4656 = vmul.f32 %v4404, %v4633
        %v4657 = vmul.f32 %v4409, %v4633
        %v4658 = vmul.f32 %v4412, %v4633
        %v4659 = vmul.f32 %v4417, %v4633
        %v4660 = vmul.f32 %v4420, %v4633
        %v4661 = vmul.f32 %v4425, %v4633
        %v4662 = vmul.f32 %v4428, %v4633
        %v4663 = vmul.f32 %v4433, %v4633
        %v4664 = vmul.f32 %v4436, %v4633
        %v4665 = vmul.f32 %v4441, %v4633
        %v4666 = vmul.f32 %v4444, %v4633
        %v4668 = vlaneseq
        %v4669 = vshrl.u32 %v4668, 7
        %v4670 = vsub.s32 0, %v4669
        %v4671 = vrot.slane %v4628, %v4670
        %v4673 = vadd.f32 %v4635, %v4671
        %v4674 = vadd.f32 %v4636, %v4671
        %v4675 = vadd.f32 %v4637, %v4671
        %v4676 = vadd.f32 %v4638, %v4671
        %v4677 = vadd.f32 %v4639, %v4671
        %v4678 = vadd.f32 %v4640, %v4671
        %v4679 = vadd.f32 %v4641, %v4671
        %v4680 = vadd.f32 %v4642, %v4671
        %v4681 = vadd.f32 %v4643, %v4671
        %v4682 = vadd.f32 %v4644, %v4671
        %v4683 = vadd.f32 %v4645, %v4671
        %v4684 = vadd.f32 %v4646, %v4671
        %v4685 = vadd.f32 %v4647, %v4671
        %v4686 = vadd.f32 %v4648, %v4671
        %v4687 = vadd.f32 %v4649, %v4671
        %v4688 = vadd.f32 %v4650, %v4671
        %v4689 = vadd.f32 %v4651, %v4671
        %v4690 = vadd.f32 %v4652, %v4671
        %v4691 = vadd.f32 %v4653, %v4671
        %v4692 = vadd.f32 %v4654, %v4671
        %v4693 = vadd.f32 %v4655, %v4671
        %v4694 = vadd.f32 %v4656, %v4671
        %v4695 = vadd.f32 %v4657, %v4671
        %v4696 = vadd.f32 %v4658, %v4671
        %v4697 = vadd.f32 %v4659, %v4671
        %v4698 = vadd.f32 %v4660, %v4671
        %v4699 = vadd.f32 %v4661, %v4671
        %v4700 = vadd.f32 %v4662, %v4671
        %v4701 = vadd.f32 %v4663, %v4671
        %v4702 = vadd.f32 %v4664, %v4671
        %v4703 = vadd.f32 %v4665, %v4671
        %v4704 = vadd.f32 %v4666, %v4671
        %4705 = vxpose.xlu0.b32.start [1/16] %v4673, 128
        %4706 = vxpose.xlu0.b32.cont [2/16] %v4674, 128
        %4707 = vxpose.xlu0.b32.cont [3/16] %v4675, 128
        %4708 = vxpose.xlu0.b32.cont [4/16] %v4676, 128
        %4709 = vxpose.xlu0.b32.cont [5/16] %v4677, 128
        %4710 = vxpose.xlu0.b32.cont [6/16] %v4678, 128
        %4711 = vxpose.xlu0.b32.cont [7/16] %v4679, 128
        %4712 = vxpose.xlu0.b32.cont [8/16] %v4680, 128
        %4713 = vxpose.xlu0.b32.cont [9/16] %v4681, 128
        %4714 = vxpose.xlu0.b32.cont [10/16] %v4682, 128
        %4715 = vxpose.xlu0.b32.cont [11/16] %v4683, 128
        %4716 = vxpose.xlu0.b32.cont [12/16] %v4684, 128
        %4717 = vxpose.xlu0.b32.cont [13/16] %v4685, 128
        %4718 = vxpose.xlu0.b32.cont [14/16] %v4686, 128
        %4719 = vxpose.xlu0.b32.cont [15/16] %v4687, 128
        %4720 = vxpose.xlu0.b32.end [16/16] %v4688, 128
        %v4721 = vpop.trf.xlu0
        %v4722 = vpop.trf.xlu0
        %v4723 = vpop.trf.xlu0
        %v4724 = vpop.trf.xlu0
        %v4725 = vpop.trf.xlu0
        %v4726 = vpop.trf.xlu0
        %v4727 = vpop.trf.xlu0
        %v4728 = vpop.trf.xlu0
        %v4729 = vpop.trf.xlu0
        %v4730 = vpop.trf.xlu0
        %v4731 = vpop.trf.xlu0
        %v4732 = vpop.trf.xlu0
        %v4733 = vpop.trf.xlu0
        %v4734 = vpop.trf.xlu0
        %v4735 = vpop.trf.xlu0
        %v4736 = vpop.trf.xlu0
        %4737 = vxpose.xlu0.b32.start [1/16] %v4689, 128
        %4738 = vxpose.xlu0.b32.cont [2/16] %v4690, 128
        %4739 = vxpose.xlu0.b32.cont [3/16] %v4691, 128
        %4740 = vxpose.xlu0.b32.cont [4/16] %v4692, 128
        %4741 = vxpose.xlu0.b32.cont [5/16] %v4693, 128
        %4742 = vxpose.xlu0.b32.cont [6/16] %v4694, 128
        %4743 = vxpose.xlu0.b32.cont [7/16] %v4695, 128
        %4744 = vxpose.xlu0.b32.cont [8/16] %v4696, 128
        %4745 = vxpose.xlu0.b32.cont [9/16] %v4697, 128
        %4746 = vxpose.xlu0.b32.cont [10/16] %v4698, 128
        %4747 = vxpose.xlu0.b32.cont [11/16] %v4699, 128
        %4748 = vxpose.xlu0.b32.cont [12/16] %v4700, 128
        %4749 = vxpose.xlu0.b32.cont [13/16] %v4701, 128
        %4750 = vxpose.xlu0.b32.cont [14/16] %v4702, 128
        %4751 = vxpose.xlu0.b32.cont [15/16] %v4703, 128
        %4752 = vxpose.xlu0.b32.end [16/16] %v4704, 128
        %v4753 = vpop.trf.xlu0
        %v4754 = vpop.trf.xlu0
        %v4755 = vpop.trf.xlu0
        %v4756 = vpop.trf.xlu0
        %v4757 = vpop.trf.xlu0
        %v4758 = vpop.trf.xlu0
        %v4759 = vpop.trf.xlu0
        %v4760 = vpop.trf.xlu0
        %v4761 = vpop.trf.xlu0
        %v4762 = vpop.trf.xlu0
        %v4763 = vpop.trf.xlu0
        %v4764 = vpop.trf.xlu0
        %v4765 = vpop.trf.xlu0
        %v4766 = vpop.trf.xlu0
        %v4767 = vpop.trf.xlu0
        %v4768 = vpop.trf.xlu0
        %v4769 = vld [vmem:[%s323] sm:$0xff]
        %v4770 = vld [vmem:[%s323 + $0x8] sm:$0xff]
        %v4771 = vld [vmem:[%s323 + $0x10] sm:$0xff]
        %v4772 = vld [vmem:[%s323 + $0x18] sm:$0xff]
        %v4773 = vld [vmem:[%s323 + $0x20] sm:$0xff]
        %v4774 = vld [vmem:[%s323 + $0x28] sm:$0xff]
        %v4775 = vld [vmem:[%s323 + $0x30] sm:$0xff]
        %v4776 = vld [vmem:[%s323 + $0x38] sm:$0xff]
        %v4777 = vadd.f32 %v4721, %v4769
        %v4778 = vadd.f32 %v4753, %v4770
        %v4779 = vadd.f32 %v4722, %v4771
        %v4780 = vadd.f32 %v4754, %v4772
        %v4781 = vadd.f32 %v4723, %v4773
        %v4782 = vadd.f32 %v4755, %v4774
        %v4783 = vadd.f32 %v4724, %v4775
        %v4784 = vadd.f32 %v4756, %v4776
        %v4785 = vmax.f32 %v4777, 0.0
        %v4786 = vmax.f32 %v4778, 0.0
        %v4787 = vmax.f32 %v4779, 0.0
        %v4788 = vmax.f32 %v4780, 0.0
        %v4789 = vmax.f32 %v4781, 0.0
        %v4790 = vmax.f32 %v4782, 0.0
        %v4791 = vmax.f32 %v4783, 0.0
        %v4792 = vmax.f32 %v4784, 0.0
        %4793 = vst [vmem:[%s313] sm:$0xff] %v4785
        %4794 = vst [vmem:[%s313 + $0x8] sm:$0xff] %v4786
        %4795 = vst [vmem:[%s313 + $0x10] sm:$0xff] %v4787
        %4796 = vst [vmem:[%s313 + $0x18] sm:$0xff] %v4788
        %4797 = vst [vmem:[%s313 + $0x20] sm:$0xff] %v4789
        %4798 = vst [vmem:[%s313 + $0x28] sm:$0xff] %v4790
        %4799 = vst [vmem:[%s313 + $0x30] sm:$0xff] %v4791
        %4800 = vst [vmem:[%s313 + $0x38] sm:$0xff] %v4792
        %s4801 = sand.u32 %s208, 1
        %s4802 = scalar_lea.sflag [#allocation5], %s4801
        %s4803 = sand.u32 %s208, 1
        %s4804 = smul.addr %s4803, 64
        %s4805 = scalar_lea.vmem [#allocation4], %s4804
        // Predicated region
        $region53: #{tpu_custom_call.1} parent=51 // pred_check
          %p4806 = pneg %p218
        $region54: #{tpu_custom_call.1} parent=51 // pred_check_branch
          %4808 = sbr.rel (%p4806) target = $region56
        $region55: #{tpu_custom_call.1} parent=51 // pred_region
          %s4810 = ssub.s32 1024, 1024
          %4811 = vsyncadd %s4802, %s4810
          %s4812 = smul.addr %s22, 8
          %s4813 = smul.addr %s4812, 128
          %s4814 = scalar_lea.hbm %s8, %s4813
          %s4815 = sshll.u32 %s4805, 4
          %s4816 = int_to_ptr.vmem [resolvable:$true] %s4815
          %4821 = dma.vmem_to_hbm [thread:$0]  %s4816, 1024, %s4814, %s4802, 256, 256, 16
        $region56: #{tpu_custom_call.1} parent=51 // pred_fallthru
          _
      $region52: #{tpu_custom_call.1} parent=5 // pred_fallthru
        _
      %p4822 = scmp.le.s32.totalorder 2, %s17
      // Predicated region
      $region57: #{tpu_custom_call.1} parent=5 // pred_check
        %p4823 = pneg %p4822
      $region58: #{tpu_custom_call.1} parent=5 // pred_check_branch
        %4825 = sbr.rel (%p4823) target = $region60
      $region59: #{tpu_custom_call.1} parent=5 // pred_region
        %s4826 = ssub.s32 %s17, 2
        // Predicated region
        $region61: #{tpu_custom_call.1} parent=59 // pred_check
          %p4827 = pneg %p224
        $region62: #{tpu_custom_call.1} parent=59 // pred_check_branch
          %4829 = sbr.rel (%p4827) target = $region64
        $region63: #{tpu_custom_call.1} parent=59 // pred_region
          %s4830 = sand.u32 %s209, 1
          %s4831 = scalar_lea.sflag [#allocation5], %s4830
          %s4832 = sand.u32 %s209, 1
          %s4833 = smul.addr %s4832, 64
          %s4834 = scalar_lea.vmem [#allocation4], %s4833
          %4835 = dma.done %s4831, 1024
        $region64: #{tpu_custom_call.1} parent=59 // pred_fallthru
          _
      $region60: #{tpu_custom_call.1} parent=5 // pred_fallthru
        _
    $region6: #{tpu_custom_call.1} parent=1 // loop_footer
      %s21 = sadd.s32 1, %s17
    $region7: #{tpu_custom_call.1} parent=1 // loop_footer_branch
      %16 = sbr.rel target = $region3
    $region8: #{tpu_custom_call.1} parent=1 // loop_exit
      _
    %4836 = vsyncpa [#allocation5], 1
    %s4837 = scalar_lea.sflag [#allocation5], 1
    %4838 = vsyncpa %s4837, 1

</llo_original>
